<compile_context>
chip_gen: v7x
topology: tpu7x:2x2x1
jax: 0.10.0
libtpu: 0.0.40
codegen_flags: <defaults>
</compile_context>

<pallas_src>
import jax
import jax.numpy as jnp
from jax.experimental import pallas as pl
from jax.experimental.pallas import tpu as pltpu

IN_FEATURES = 28 * 28        # 784
HIDDEN = 784
NUM_CLASSES = 10
PADDED_CLASSES = 128         # lane-dense output slab
NEG_BIG = -1e30              # bias for padded logit columns -> exp() == 0
LATENCY_BATCH_MAX = 128      # <= this: single-step kernel with manual DMA overlap
MAX_TM = 512                 # cap keeps VMEM under v5e's 16 MiB scoped default


def _log_softmax_lanes(logits):
    """log_softmax over the 128-lane class dim (padded cols carry -1e30)."""
    m = jnp.max(logits, axis=-1, keepdims=True)
    shifted = logits - m
    lse = jnp.log(jnp.sum(jnp.exp(shifted), axis=-1, keepdims=True))
    return shifted - lse


def mlp_kernel_tiled(x_ref, w1_ref, b1_ref, w2_ref, b2_ref, w3_ref, b3_ref, o_ref):
    """Throughput path: all operands auto-pipelined; weights VMEM-resident."""
    x = x_ref[...].astype(jnp.bfloat16)
    h1 = jnp.dot(x, w1_ref[...], preferred_element_type=jnp.float32) + b1_ref[...]
    h1 = jnp.maximum(h1, 0.0).astype(jnp.bfloat16)
    h2 = jnp.dot(h1, w2_ref[...], preferred_element_type=jnp.float32) + b2_ref[...]
    h2 = jnp.maximum(h2, 0.0).astype(jnp.bfloat16)
    logits = jnp.dot(h2, w3_ref[...], preferred_element_type=jnp.float32) + b3_ref[...]
    o_ref[...] = _log_softmax_lanes(logits).astype(o_ref.dtype)


def mlp_kernel_latency(x_ref, w1_ref, b1_ref, w2_hbm, b2_ref, w3_hbm, b3_ref,
                       o_ref, w2_buf, w3_buf, dma_sem):
    """Latency path (grid == 1): overlap w2/w3 HBM->VMEM DMA with fc1 compute."""
    w2_cp = pltpu.make_async_copy(w2_hbm, w2_buf, dma_sem.at[0])
    w3_cp = pltpu.make_async_copy(w3_hbm, w3_buf, dma_sem.at[1])
    w2_cp.start()
    w3_cp.start()

    # fc1 + relu runs while the w2/w3 transfers are in flight.
    x = x_ref[...].astype(jnp.bfloat16)
    h1 = jnp.dot(x, w1_ref[...], preferred_element_type=jnp.float32) + b1_ref[...]
    h1 = jnp.maximum(h1, 0.0).astype(jnp.bfloat16)

    w2_cp.wait()
    h2 = jnp.dot(h1, w2_buf[...], preferred_element_type=jnp.float32) + b2_ref[...]
    h2 = jnp.maximum(h2, 0.0).astype(jnp.bfloat16)

    w3_cp.wait()
    logits = jnp.dot(h2, w3_buf[...], preferred_element_type=jnp.float32) + b3_ref[...]
    o_ref[...] = _log_softmax_lanes(logits).astype(o_ref.dtype)


def prepare_params(params):
    """One-time parameter prep: transpose to (in, out), cast weights to bf16,
    pad fc3 to 128 output classes (zero weights, -1e30 bias)."""
    w1, b1, w2, b2, w3, b3 = params
    w1t = jnp.asarray(w1.T, jnp.bfloat16)                         # (784, 784)
    w2t = jnp.asarray(w2.T, jnp.bfloat16)                         # (784, 784)
    w3t = jnp.zeros((HIDDEN, PADDED_CLASSES), jnp.bfloat16)
    w3t = w3t.at[:, :NUM_CLASSES].set(w3.T.astype(jnp.bfloat16))  # (784, 128)
    b1r = b1.reshape(1, -1).astype(jnp.float32)                   # (1, 784)
    b2r = b2.reshape(1, -1).astype(jnp.float32)                   # (1, 784)
    b3r = jnp.full((1, PADDED_CLASSES), NEG_BIG, jnp.float32)
    b3r = b3r.at[0, :NUM_CLASSES].set(b3.astype(jnp.float32))     # (1, 128)
    return (w1t, b1r, w2t, b2r, w3t, b3r)


def _round_up(n, m):
    return ((n + m - 1) // m) * m


def _choose_tm(batch):
    # >= 2 grid steps so v7x's second TensorCore gets work; cap at MAX_TM so the
    # double-buffered footprint stays under v5e's 16 MiB scoped-VMEM default.
    return min(MAX_TM, _round_up(pl.cdiv(batch, 2), 8))


def net_forward(x_nchw, prepared):
    """x_nchw: (B, 1, 28, 28). Returns (B, 10) log-probabilities."""
    B = x_nchw.shape[0]
    x = x_nchw.reshape(B, -1)  # (B, 784), same as torch .view(B, -1)
    w1t, b1r, w2t, b2r, w3t, b3r = prepared
    D, H, C = IN_FEATURES, HIDDEN, PADDED_CLASSES

    cost = pl.CostEstimate(
        flops=2 * B * D * (H + H + C),
        transcendentals=B * (C + 1),
        bytes_accessed=((w1t.size + w2t.size + w3t.size) * 2
                        + (b1r.size + b2r.size + b3r.size) * 4
                        + x.size * x.dtype.itemsize + B * C * 4),
    )

    if B <= LATENCY_BATCH_MAX:
        # ----- Latency path: grid == 1, manual w2/w3 DMA overlapped with fc1 -----
        out_padded = pl.pallas_call(
            mlp_kernel_latency,
            out_shape=jax.ShapeDtypeStruct((B, C), jnp.float32),
            grid=(1,),
            in_specs=[
                pl.BlockSpec((B, D), lambda i: (0, 0)),   # x (whole batch)
                pl.BlockSpec((D, H), lambda i: (0, 0)),   # w1^T -> VMEM up front
                pl.BlockSpec((1, H), lambda i: (0, 0)),   # b1
                pl.BlockSpec(memory_space=pl.ANY),        # w2^T stays in HBM
                pl.BlockSpec((1, H), lambda i: (0, 0)),   # b2
                pl.BlockSpec(memory_space=pl.ANY),        # w3^T stays in HBM
                pl.BlockSpec((1, C), lambda i: (0, 0)),   # b3 (padded)
            ],
            out_specs=pl.BlockSpec((B, C), lambda i: (0, 0)),  # lane-dense (B,128)
            scratch_shapes=[
                pltpu.VMEM((H, H), jnp.bfloat16),          # w2 landing buffer
                pltpu.VMEM((H, C), jnp.bfloat16),          # w3 landing buffer
                pltpu.SemaphoreType.DMA((2,)),
            ],
            compiler_params=pltpu.CompilerParams(
                dimension_semantics=("arbitrary",),
            ),
            cost_estimate=cost,
        )(x, w1t, b1r, w2t, b2r, w3t, b3r)
    else:
        # ----- Throughput path: batch-tiled, weights VMEM-resident -----
        tm = _choose_tm(B)
        grid = (pl.cdiv(B, tm),)
        out_padded = pl.pallas_call(
            mlp_kernel_tiled,
            out_shape=jax.ShapeDtypeStruct((B, C), jnp.float32),
            grid=grid,
            in_specs=[
                pl.BlockSpec((tm, D), lambda i: (i, 0)),  # x tile
                pl.BlockSpec((D, H), lambda i: (0, 0)),   # w1^T (VMEM-resident)
                pl.BlockSpec((1, H), lambda i: (0, 0)),   # b1
                pl.BlockSpec((H, H), lambda i: (0, 0)),   # w2^T (VMEM-resident)
                pl.BlockSpec((1, H), lambda i: (0, 0)),   # b2
                pl.BlockSpec((H, C), lambda i: (0, 0)),   # w3^T padded (resident)
                pl.BlockSpec((1, C), lambda i: (0, 0)),   # b3 padded
            ],
            out_specs=pl.BlockSpec((tm, C), lambda i: (i, 0)),  # lane-dense
            compiler_params=pltpu.CompilerParams(
                dimension_semantics=("parallel",),        # megacore-shardable
            ),
            cost_estimate=cost,
        )(x, w1t, b1r, w2t, b2r, w3t, b3r)

    # TODO(synk): if the consumer can fuse the class mask/slice (e.g. into the
    # loss), return out_padded (B, 128) directly and skip this extra XLA op.
    return out_padded[:, :NUM_CLASSES]


def init_params(key):
    """Deterministic init mirroring PyTorch Linear shapes (out, in) / (out,)."""
    def linear(key, in_f, out_f):
        kw, kb = jax.random.split(key)
        bound = 1.0 / jnp.sqrt(jnp.float32(in_f))
        w = jax.random.uniform(kw, (out_f, in_f), jnp.float32, -bound, bound)
        b = jax.random.uniform(kb, (out_f,), jnp.float32, -bound, bound)
        return w, b

    k1, k2, k3 = jax.random.split(key, 3)
    w1, b1 = linear(k1, IN_FEATURES, HIDDEN)
    w2, b2 = linear(k2, HIDDEN, HIDDEN)
    w3, b3 = linear(k3, HIDDEN, NUM_CLASSES)
    return (w1, b1, w2, b2, w3, b3)


def reference_forward(x_nchw, params):
    """Plain-JAX f32 reference matching the PyTorch forward exactly."""
    B = x_nchw.shape[0]
    x = x_nchw.reshape(B, -1)
    w1, b1, w2, b2, w3, b3 = params
    h1 = jnp.maximum(x @ w1.T + b1, 0.0)
    h2 = jnp.maximum(h1 @ w2.T + b2, 0.0)
    logits = h2 @ w3.T + b3
    return jax.nn.log_softmax(logits, axis=1)


if __name__ == "__main__":
    key = jax.random.PRNGKey(0)
    kp, kx = jax.random.split(key)

    params = init_params(kp)
    prepared = jax.block_until_ready(prepare_params(params))  # one-time prep

    fwd = jax.jit(net_forward)

    # bf16 weights/activations with f32 accumulation: relaxed tolerance vs f32 ref.
    TOL = 3e-2

    # 1) Small-batch / latency path (grid == 1, manual w2/w3 DMA overlap).
    x_small = jax.random.normal(kx, (8, 1, 28, 28), dtype=jnp.float32)
    out_small = jax.block_until_ready(fwd(x_small, prepared))
    ref_small = reference_forward(x_small, params)
    assert out_small.shape == (8, NUM_CLASSES)
    assert jnp.allclose(out_small, ref_small, atol=TOL, rtol=TOL), (
        float(jnp.max(jnp.abs(out_small - ref_small))))

    # 2) Throughput path (B=160 -> TM=80, grid=2, weights stay VMEM-resident).
    x_big = jax.random.normal(jax.random.fold_in(kx, 1), (160, 1, 28, 28),
                              dtype=jnp.float32)
    out_big = jax.block_until_ready(fwd(x_big, prepared))
    ref_big = reference_forward(x_big, params)
    assert out_big.shape == (160, NUM_CLASSES)
    assert jnp.allclose(out_big, ref_big, atol=TOL, rtol=TOL), (
        float(jnp.max(jnp.abs(out_big - ref_big))))

    print("KERNEL_OK")
</pallas_src>

<mosaic_0001>
module attributes {stable_mosaic.version = 11 : i64} {
  func.func @mlp_kernel_latency(%arg0: i32, %arg1: memref<8x784xf32, #tpu.memory_space<vmem>>, %arg2: memref<784x784xbf16, #tpu.memory_space<vmem>>, %arg3: memref<1x784xf32, #tpu.memory_space<vmem>>, %arg4: memref<784x784xbf16, #tpu.memory_space<any>>, %arg5: memref<1x784xf32, #tpu.memory_space<vmem>>, %arg6: memref<784x128xbf16, #tpu.memory_space<any>>, %arg7: memref<1x128xf32, #tpu.memory_space<vmem>>, %arg8: memref<8x128xf32, #tpu.memory_space<vmem>>, %arg9: memref<784x784xbf16, #tpu.memory_space<vmem>>, %arg10: memref<784x128xbf16, #tpu.memory_space<vmem>>, %arg11: memref<2x!tpu.dma_semaphore, #tpu.memory_space<semaphore_mem>>) attributes {dimension_semantics = [#tpu.dimension_semantics<arbitrary>], iteration_bounds = array<i64: 1>, scalar_prefetch = 0 : i64, scratch_operands = 3 : i64, tpu.core_type = #tpu.core_type<tc>, window_params = [{pipeline_mode = #tpu.pipeline_mode<synchronous>, transform_indices = @transform_0, window_bounds = array<i64: 8, 784>}, {pipeline_mode = #tpu.pipeline_mode<synchronous>, transform_indices = @transform_1, window_bounds = array<i64: 784, 784>}, {pipeline_mode = #tpu.pipeline_mode<synchronous>, transform_indices = @transform_2, window_bounds = array<i64: 1, 784>}, {}, {pipeline_mode = #tpu.pipeline_mode<synchronous>, transform_indices = @transform_4, window_bounds = array<i64: 1, 784>}, {}, {pipeline_mode = #tpu.pipeline_mode<synchronous>, transform_indices = @transform_6, window_bounds = array<i64: 1, 128>}, {pipeline_mode = #tpu.pipeline_mode<synchronous>, transform_indices = @transform_7, window_bounds = array<i64: 8, 128>}]} {
    %c0_i32 = arith.constant 0 : i32
    %0 = tpu.memref_slice %arg11[%c0_i32] : memref<2x!tpu.dma_semaphore, #tpu.memory_space<semaphore_mem>> -> memref<1x!tpu.dma_semaphore, #tpu.memory_space<semaphore_mem>>
    %1 = tpu.memref_squeeze %0 : memref<1x!tpu.dma_semaphore, #tpu.memory_space<semaphore_mem>> -> memref<!tpu.dma_semaphore, #tpu.memory_space<semaphore_mem>>
    tpu.enqueue_dma source(%arg4 : memref<784x784xbf16, #tpu.memory_space<any>>) target(%arg9 : memref<784x784xbf16, #tpu.memory_space<vmem>>) target_semaphore(%1 : memref<!tpu.dma_semaphore, #tpu.memory_space<semaphore_mem>>)
    %c1_i32 = arith.constant 1 : i32
    %2 = tpu.memref_slice %arg11[%c1_i32] : memref<2x!tpu.dma_semaphore, #tpu.memory_space<semaphore_mem>> -> memref<1x!tpu.dma_semaphore, #tpu.memory_space<semaphore_mem>>
    %3 = tpu.memref_squeeze %2 : memref<1x!tpu.dma_semaphore, #tpu.memory_space<semaphore_mem>> -> memref<!tpu.dma_semaphore, #tpu.memory_space<semaphore_mem>>
    tpu.enqueue_dma source(%arg6 : memref<784x128xbf16, #tpu.memory_space<any>>) target(%arg10 : memref<784x128xbf16, #tpu.memory_space<vmem>>) target_semaphore(%3 : memref<!tpu.dma_semaphore, #tpu.memory_space<semaphore_mem>>)
    %c0 = arith.constant 0 : index
    %c0_0 = arith.constant 0 : index
    %4 = vector.load %arg1[%c0, %c0_0] : memref<8x784xf32, #tpu.memory_space<vmem>>, vector<8x784xf32>
    %5 = arith.truncf %4 : vector<8x784xf32> to vector<8x784xbf16>
    %c0_1 = arith.constant 0 : index
    %c0_2 = arith.constant 0 : index
    %6 = vector.load %arg2[%c0_1, %c0_2] : memref<784x784xbf16, #tpu.memory_space<vmem>>, vector<784x784xbf16>
    %cst = arith.constant dense<0.000000e+00> : vector<8x784xf32>
    %7 = tpu.matmul %5, %6, %cst {dimension_numbers = #tpu.dot_dimension_numbers<[1], [0], [0], [1], [0, 0, 1, 1], [], []>} : vector<8x784xbf16>, vector<784x784xbf16>, vector<8x784xf32> -> vector<8x784xf32>
    %c0_3 = arith.constant 0 : index
    %c0_4 = arith.constant 0 : index
    %8 = vector.load %arg3[%c0_3, %c0_4] : memref<1x784xf32, #tpu.memory_space<vmem>>, vector<1x784xf32>
    %9 = vector.broadcast %8 : vector<1x784xf32> to vector<8x784xf32>
    %10 = arith.addf %7, %9 : vector<8x784xf32>
    %cst_5 = arith.constant 0.000000e+00 : f32
    %11 = vector.broadcast %cst_5 : f32 to vector<8x784xf32>
    %12 = arith.maximumf %10, %11 : vector<8x784xf32>
    %13 = arith.truncf %12 : vector<8x784xf32> to vector<8x784xbf16>
    %c0_i32_6 = arith.constant 0 : i32
    %14 = tpu.memref_slice %arg11[%c0_i32_6] : memref<2x!tpu.dma_semaphore, #tpu.memory_space<semaphore_mem>> -> memref<1x!tpu.dma_semaphore, #tpu.memory_space<semaphore_mem>>
    %15 = tpu.memref_squeeze %14 : memref<1x!tpu.dma_semaphore, #tpu.memory_space<semaphore_mem>> -> memref<!tpu.dma_semaphore, #tpu.memory_space<semaphore_mem>>
    tpu.wait_dma2 semaphore(%15 : memref<!tpu.dma_semaphore, #tpu.memory_space<semaphore_mem>>) src(%arg4 : memref<784x784xbf16, #tpu.memory_space<any>>) dst(%arg9 : memref<784x784xbf16, #tpu.memory_space<vmem>>)
    %c0_7 = arith.constant 0 : index
    %c0_8 = arith.constant 0 : index
    %16 = vector.load %arg9[%c0_7, %c0_8] : memref<784x784xbf16, #tpu.memory_space<vmem>>, vector<784x784xbf16>
    %cst_9 = arith.constant dense<0.000000e+00> : vector<8x784xf32>
    %17 = tpu.matmul %13, %16, %cst_9 {dimension_numbers = #tpu.dot_dimension_numbers<[1], [0], [0], [1], [0, 0, 1, 1], [], []>} : vector<8x784xbf16>, vector<784x784xbf16>, vector<8x784xf32> -> vector<8x784xf32>
    %c0_10 = arith.constant 0 : index
    %c0_11 = arith.constant 0 : index
    %18 = vector.load %arg5[%c0_10, %c0_11] : memref<1x784xf32, #tpu.memory_space<vmem>>, vector<1x784xf32>
    %19 = vector.broadcast %18 : vector<1x784xf32> to vector<8x784xf32>
    %20 = arith.addf %17, %19 : vector<8x784xf32>
    %cst_12 = arith.constant 0.000000e+00 : f32
    %21 = vector.broadcast %cst_12 : f32 to vector<8x784xf32>
    %22 = arith.maximumf %20, %21 : vector<8x784xf32>
    %23 = arith.truncf %22 : vector<8x784xf32> to vector<8x784xbf16>
    %c1_i32_13 = arith.constant 1 : i32
    %24 = tpu.memref_slice %arg11[%c1_i32_13] : memref<2x!tpu.dma_semaphore, #tpu.memory_space<semaphore_mem>> -> memref<1x!tpu.dma_semaphore, #tpu.memory_space<semaphore_mem>>
    %25 = tpu.memref_squeeze %24 : memref<1x!tpu.dma_semaphore, #tpu.memory_space<semaphore_mem>> -> memref<!tpu.dma_semaphore, #tpu.memory_space<semaphore_mem>>
    tpu.wait_dma2 semaphore(%25 : memref<!tpu.dma_semaphore, #tpu.memory_space<semaphore_mem>>) src(%arg6 : memref<784x128xbf16, #tpu.memory_space<any>>) dst(%arg10 : memref<784x128xbf16, #tpu.memory_space<vmem>>)
    %c0_14 = arith.constant 0 : index
    %c0_15 = arith.constant 0 : index
    %26 = vector.load %arg10[%c0_14, %c0_15] : memref<784x128xbf16, #tpu.memory_space<vmem>>, vector<784x128xbf16>
    %cst_16 = arith.constant dense<0.000000e+00> : vector<8x128xf32>
    %27 = tpu.matmul %23, %26, %cst_16 {dimension_numbers = #tpu.dot_dimension_numbers<[1], [0], [0], [1], [0, 0, 1, 1], [], []>} : vector<8x784xbf16>, vector<784x128xbf16>, vector<8x128xf32> -> vector<8x128xf32>
    %c0_17 = arith.constant 0 : index
    %c0_18 = arith.constant 0 : index
    %28 = vector.load %arg7[%c0_17, %c0_18] : memref<1x128xf32, #tpu.memory_space<vmem>>, vector<1x128xf32>
    %29 = vector.broadcast %28 : vector<1x128xf32> to vector<8x128xf32>
    %30 = arith.addf %27, %29 : vector<8x128xf32>
    %cst_19 = arith.constant dense<0xFF800000> : vector<8xf32>
    %31 = vector.multi_reduction <maximumf>, %30, %cst_19 [1] : vector<8x128xf32> to vector<8xf32>
    %32 = vector.shape_cast %31 : vector<8xf32> to vector<8x1xf32>
    %33 = vector.broadcast %32 : vector<8x1xf32> to vector<8x128xf32>
    %34 = arith.subf %30, %33 : vector<8x128xf32>
    %35 = math.exp %34 : vector<8x128xf32>
    %cst_20 = arith.constant dense<0.000000e+00> : vector<8xf32>
    %36 = vector.multi_reduction <add>, %35, %cst_20 [1] : vector<8x128xf32> to vector<8xf32>
    %37 = vector.shape_cast %36 : vector<8xf32> to vector<8x1xf32>
    %38 = math.log %37 : vector<8x1xf32>
    %39 = vector.broadcast %38 : vector<8x1xf32> to vector<8x128xf32>
    %40 = arith.subf %34, %39 : vector<8x128xf32>
    %c0_21 = arith.constant 0 : index
    %c0_22 = arith.constant 0 : index
    %41 = vector.load %arg8[%c0_21, %c0_22] : memref<8x128xf32, #tpu.memory_space<vmem>>, vector<8x128xf32>
    tpu.vector_store %arg8[%c0_21, %c0_22], %40 {strides = array<i32>} : memref<8x128xf32, #tpu.memory_space<vmem>>, vector<8x128xf32>,
    return
  }
  func.func @transform_0(%arg0: i32) -> (i32, i32) {
    %c0_i32 = arith.constant 0 : i32
    %c0_i32_0 = arith.constant 0 : i32
    %c0_i32_1 = arith.constant 0 : i32
    return %c0_i32, %c0_i32_0 : i32, i32
  }
  func.func @transform_1(%arg0: i32) -> (i32, i32) {
    %c0_i32 = arith.constant 0 : i32
    %c0_i32_0 = arith.constant 0 : i32
    %c0_i32_1 = arith.constant 0 : i32
    return %c0_i32, %c0_i32_0 : i32, i32
  }
  func.func @transform_2(%arg0: i32) -> (i32, i32) {
    %c0_i32 = arith.constant 0 : i32
    %c0_i32_0 = arith.constant 0 : i32
    %c0_i32_1 = arith.constant 0 : i32
    return %c0_i32, %c0_i32_0 : i32, i32
  }
  func.func @transform_4(%arg0: i32) -> (i32, i32) {
    %c0_i32 = arith.constant 0 : i32
    %c0_i32_0 = arith.constant 0 : i32
    %c0_i32_1 = arith.constant 0 : i32
    return %c0_i32, %c0_i32_0 : i32, i32
  }
  func.func @transform_6(%arg0: i32) -> (i32, i32) {
    %c0_i32 = arith.constant 0 : i32
    %c0_i32_0 = arith.constant 0 : i32
    %c0_i32_1 = arith.constant 0 : i32
    return %c0_i32, %c0_i32_0 : i32, i32
  }
  func.func @transform_7(%arg0: i32) -> (i32, i32) {
    %c0_i32 = arith.constant 0 : i32
    %c0_i32_0 = arith.constant 0 : i32
    %c0_i32_1 = arith.constant 0 : i32
    return %c0_i32, %c0_i32_0 : i32, i32
  }
}

</mosaic_0001>

<llo_original>
// kernel: net_forward.1
$region0: #{net_forward.1}
  #allocation0 [shape = 'u32[]', space=smem, size = 0x4, offset = 0x4, fixed_abs, tag = 'smem constant byte address 0x4 - core index']
  #allocation1 [shape = 'u32[144,128]{1,0:T(1,128)}', space=vmem, size = 0x12000, scoped, tag = 'internal scratch']
  #allocation2 [shape = 'bf16[784,784]{1,0:T(16,128)(2,1)}', space=vmem, size = 0x157000, scoped, tag = 'scratch operand']
  #allocation3 [shape = 'bf16[784,128]{1,0:T(16,128)(2,1)}', space=vmem, size = 0x31000, scoped, tag = 'scratch operand']
  #allocation4 [shape = 's32[2]{0}', space=sflag, size = 0x8, scoped, tag = 'scratch operand']
  #allocation14 [shape = 's32[]', space=sflag, size = 0x4, offset = 0, fixed_abs, tag = 'sflag constant byte address 0x0 - dummy sync flag']
  #allocation16 [shape = 's32[]', space=sflag, size = 0x4, offset = 0, fixed_abs, tag = 'sflag constant byte address 0x0 - dummy sync flag']
  #allocation17 [shape = 's32[]', space=sflag, size = 0x4, offset = 0, fixed_abs, tag = 'sflag constant byte address 0x0 - dummy sync flag']
  #allocation18 [shape = 'u32[]', space=smem, size = 0x4, offset = 0x44, fixed_abs, tag = 'smem constant byte address 0x44 - assertion arg 0']
  #allocation19 [shape = 'u32[]', space=smem, size = 0x4, offset = 0x48, fixed_abs, tag = 'smem constant byte address 0x48 - assertion arg 1']
  %s0 = inlined_call_operand.vmem [shape: f32[8,784], index: 0, kind: input, shape index: {}]
  %s1 = inlined_call_operand.hbm [shape: bf16[784,784], index: 1, kind: input, shape index: {}]
  %s2 = inlined_call_operand.hbm [shape: f32[1,784], index: 2, kind: input, shape index: {}]
  %s3 = inlined_call_operand.hbm [shape: bf16[784,784], index: 3, kind: input, shape index: {}]
  %s4 = inlined_call_operand.hbm [shape: f32[1,784], index: 4, kind: input, shape index: {}]
  %s5 = inlined_call_operand.hbm [shape: bf16[784,128], index: 5, kind: input, shape index: {}]
  %s6 = inlined_call_operand.hbm [shape: f32[1,128], index: 6, kind: input, shape index: {}]
  %s7 = inlined_call_operand.hbm [shape: f32[8,128], index: 7, kind: output, shape index: {}]
  %s8 = sld [smem:[#allocation0]]
  $region50: #{net_forward.1} parent=0
    _
  %s10 = ssub.s32 1, %s8
  %s11 = scalar_select 0, %s10, %s8
  $region1: #{net_forward.1} parent=0
    #allocation5 [shape = 'u8[1404928]{0}', space=vmem, size = 0x157000, scoped, tag = 'input window, operand 1, single buffered']
    #allocation6 [shape = 's32[1]{0}', space=sflag, size = 0x4, scoped, tag = 'scoped memory for net_forward.1']
    #allocation7 [shape = 's32[1]{0}', space=sflag, size = 0x4, scoped, tag = 'scoped memory for net_forward.1']
    #allocation8 [shape = 'u8[3584]{0}', space=vmem, size = 0x1000, scoped, tag = 'input window, operand 2, single buffered']
    #allocation9 [shape = 's32[1]{0}', space=sflag, size = 0x4, scoped, tag = 'scoped memory for net_forward.1']
    #allocation10 [shape = 'u8[3584]{0}', space=vmem, size = 0x1000, scoped, tag = 'input window, operand 4, single buffered']
    #allocation11 [shape = 'u8[512]{0}', space=vmem, size = 0x400, scoped, tag = 'input window, operand 6, single buffered']
    #allocation12 [shape = 's32[1]{0}', space=sflag, size = 0x4, scoped, tag = 'scoped memory for net_forward.1']
    #allocation13 [shape = 'u8[4096]{0}', space=vmem, size = 0x1000, scoped, tag = 'output window, operand 0, single buffered']
    #allocation15 [shape = 'u32[9]{0}', space=smem, size = 0x24, scoped, tag = 'DMA stride descriptor']
    %12 = vsyncpa [#allocation6], 0
    %13 = vsyncpa [#allocation9], 0
    %14 = vsyncpa [#allocation12], 0
    %15 = vsyncpa [#allocation7], 0
    // Predicated region
    $region2: #{net_forward.1} parent=1 // pred_check
      _
    $region3: #{net_forward.1} parent=1 // pred_check_branch
      %17 = sbr.rel (0) target = $region5
    $region4: #{net_forward.1} parent=1 // pred_region
      _
    $region5: #{net_forward.1} parent=1 // pred_fallthru
      _
    // Predicated region
    $region6: #{net_forward.1} parent=1 // pred_check
      _
    $region7: #{net_forward.1} parent=1 // pred_check_branch
      %19 = sbr.rel (0) target = $region9
    $region8: #{net_forward.1} parent=1 // pred_region
      %s21 = ssub.s32 43904, 43904
      %22 = vsyncadd [#allocation6], %s21
      %s23 = sshll.u32 [#allocation5], 4
      %s24 = int_to_ptr.vmem [resolvable:$true] %s23
      %29 = dma.hbm_to_vmem [thread:$0]  %s1, 43904, %s24, [#allocation6], 448, 448, 28
    $region9: #{net_forward.1} parent=1 // pred_fallthru
      _
    // Predicated region
    $region10: #{net_forward.1} parent=1 // pred_check
      _
    $region11: #{net_forward.1} parent=1 // pred_check_branch
      %31 = sbr.rel (0) target = $region13
    $region12: #{net_forward.1} parent=1 // pred_region
      %s33 = ssub.s32 112, 112
      %34 = vsyncadd [#allocation9], %s33
      %s36 = sshll.u32 [#allocation8], 4
      %s37 = int_to_ptr.vmem [resolvable:$true] %s36
      %39 = dma.hbm_to_vmem [thread:$0]  %s2, 112, %s37, [#allocation9]
    $region13: #{net_forward.1} parent=1 // pred_fallthru
      _
    // Predicated region
    $region14: #{net_forward.1} parent=1 // pred_check
      _
    $region15: #{net_forward.1} parent=1 // pred_check_branch
      %41 = sbr.rel (0) target = $region17
    $region16: #{net_forward.1} parent=1 // pred_region
      %s43 = ssub.s32 112, 112
      %44 = vsyncadd [#allocation9], %s43
      %s46 = sshll.u32 [#allocation10], 4
      %s47 = int_to_ptr.vmem [resolvable:$true] %s46
      %49 = dma.hbm_to_vmem [thread:$0]  %s4, 112, %s47, [#allocation9]
    $region17: #{net_forward.1} parent=1 // pred_fallthru
      _
    // Predicated region
    $region18: #{net_forward.1} parent=1 // pred_check
      _
    $region19: #{net_forward.1} parent=1 // pred_check_branch
      %51 = sbr.rel (0) target = $region21
    $region20: #{net_forward.1} parent=1 // pred_region
      %s53 = ssub.s32 16, 16
      %54 = vsyncadd [#allocation12], %s53
      %s56 = sshll.u32 [#allocation11], 4
      %s57 = int_to_ptr.vmem [resolvable:$true] %s56
      %59 = dma.hbm_to_vmem [thread:$0]  %s6, 16, %s57, [#allocation12]
    $region21: #{net_forward.1} parent=1 // pred_fallthru
      _
    // Predicated region
    $region22: #{net_forward.1} parent=1 // pred_check
      _
    $region23: #{net_forward.1} parent=1 // pred_check_branch
      %61 = sbr.rel (0) target = $region25
    $region24: #{net_forward.1} parent=1 // pred_region
      %62 = dma.done [#allocation6], 43904
    $region25: #{net_forward.1} parent=1 // pred_fallthru
      _
    // Predicated region
    $region26: #{net_forward.1} parent=1 // pred_check
      _
    $region27: #{net_forward.1} parent=1 // pred_check_branch
      %64 = sbr.rel (0) target = $region29
    $region28: #{net_forward.1} parent=1 // pred_region
      %65 = dma.done [#allocation9], 112
    $region29: #{net_forward.1} parent=1 // pred_fallthru
      _
    // Predicated region
    $region30: #{net_forward.1} parent=1 // pred_check
      _
    $region31: #{net_forward.1} parent=1 // pred_check_branch
      %67 = sbr.rel (0) target = $region33
    $region32: #{net_forward.1} parent=1 // pred_region
      %68 = dma.done [#allocation9], 112
    $region33: #{net_forward.1} parent=1 // pred_fallthru
      _
    // Predicated region
    $region34: #{net_forward.1} parent=1 // pred_check
      _
    $region35: #{net_forward.1} parent=1 // pred_check_branch
      %70 = sbr.rel (0) target = $region37
    $region36: #{net_forward.1} parent=1 // pred_region
      %71 = dma.done [#allocation12], 16
    $region37: #{net_forward.1} parent=1 // pred_fallthru
      _
    %s74 = sshll.u32 1, 14
    %s75 = sxor.u32 4294967295, %s74
    %s77 = sld [smem:[#allocation0]]
    %s78 = sadd.s32 2, %s77
    %s80 = sshll.u32 7, 26
    %s81 = sxor.u32 4294967295, %s80
    %s82 = sand.u32 0, %s81
    %s83 = sshll.u32 %s78, 26
    %s84 = sor.u32 %s82, %s83
    %s85 = sshll.u32 [#allocation2], 4
    %s86 = int_to_ptr.vmem [resolvable:$true] %s85
    %89 = sst [smem:[#allocation15]] 896
    %s90 = scalar_lea.smem [#allocation15], 1
    %91 = sst [smem:[%s90]] 896
    %s92 = scalar_lea.smem [#allocation15], 2
    %93 = sst [smem:[%s92]] 7
    %s94 = scalar_lea.smem [#allocation15], 3
    %95 = sst [smem:[%s94]] 64
    %s96 = scalar_lea.smem [#allocation15], 4
    %97 = sst [smem:[%s96]] 128
    %s98 = scalar_lea.smem [#allocation15], 5
    %99 = sst [smem:[%s98]] 2
    %s100 = scalar_lea.smem [#allocation15], 6
    %101 = sst [smem:[%s100]] 448
    %s102 = scalar_lea.smem [#allocation15], 7
    %103 = sst [smem:[%s102]] 64
    %s104 = scalar_lea.smem [#allocation15], 8
    %105 = sst [smem:[%s104]] 4
    %107 = dma.general %s3, 43904, %s86, [#allocation4], [#allocation14], [#allocation15], %s84, 0
    %s108 = scalar_lea.sflag [#allocation4], 1
    // Predicated region
    $region38: #{net_forward.1} parent=1 // pred_check
      _
    $region39: #{net_forward.1} parent=1 // pred_check_branch
      %110 = sbr.rel target = $region41
    $region40: #{net_forward.1} parent=1 // pred_region
      %111 = sst [smem:[#allocation18]] [#allocation17]
      %112 = sst [smem:[#allocation19]] [#allocation16]
    $region41: #{net_forward.1} parent=1 // pred_fallthru
      _
    %114 = shalt.err (0)
    %s116 = sshll.u32 [#allocation3], 4
    %s117 = int_to_ptr.vmem [resolvable:$true] %s116
    %119 = dma.hbm_to_vmem [thread:$0]  %s5, 6272, %s117, %s108
    %v120 = vld [vmem:[%s0] sm:$0xff]
    %v121 = vld [vmem:[%s0 + $0x8] sm:$0xff]
    %v122 = vld [vmem:[%s0 + $0x10] sm:$0xff]
    %v123 = vld [vmem:[%s0 + $0x18] sm:$0xff]
    %v124 = vld [vmem:[%s0 + $0x20] sm:$0xff]
    %v125 = vld [vmem:[%s0 + $0x28] sm:$0xff]
    %v126 = vld [vmem:[%s0 + $0x30] sm:$0xff]
    %v127 = vpack.c.bf16 %v120, %v120
    %v128 = vpack.c.bf16 %v121, %v121
    %v129 = vpack.c.bf16 %v122, %v122
    %v130 = vpack.c.bf16 %v123, %v123
    %v131 = vpack.c.bf16 %v124, %v124
    %v132 = vpack.c.bf16 %v125, %v125
    %v133 = vpack.c.bf16 %v126, %v126
    %v134 = vld [vmem:[#allocation5] sm:$0xff]
    %v135 = vld [vmem:[#allocation5 + $0x8] sm:$0xff]
    %v136 = vld [vmem:[#allocation5 + $0x10] sm:$0xff]
    %v137 = vld [vmem:[#allocation5 + $0x18] sm:$0xf]
    %v138 = vld [vmem:[#allocation5 + $0x1c] sm:$0xff]
    %v139 = vld [vmem:[#allocation5 + $0x24] sm:$0xff]
    %v140 = vld [vmem:[#allocation5 + $0x2c] sm:$0xff]
    %v141 = vld [vmem:[#allocation5 + $0x34] sm:$0xf]
    %v142 = vld [vmem:[#allocation5 + $0x38] sm:$0xff]
    %v143 = vld [vmem:[#allocation5 + $0x40] sm:$0xff]
    %v144 = vld [vmem:[#allocation5 + $0x48] sm:$0xff]
    %v145 = vld [vmem:[#allocation5 + $0x50] sm:$0xf]
    %v146 = vld [vmem:[#allocation5 + $0x54] sm:$0xff]
    %v147 = vld [vmem:[#allocation5 + $0x5c] sm:$0xff]
    %v148 = vld [vmem:[#allocation5 + $0x64] sm:$0xff]
    %v149 = vld [vmem:[#allocation5 + $0x6c] sm:$0xf]
    %v150 = vld [vmem:[#allocation5 + $0x70] sm:$0xff]
    %v151 = vld [vmem:[#allocation5 + $0x78] sm:$0xff]
    %v152 = vld [vmem:[#allocation5 + $0x80] sm:$0xff]
    %v153 = vld [vmem:[#allocation5 + $0x88] sm:$0xf]
    %v154 = vld [vmem:[#allocation5 + $0x8c] sm:$0xff]
    %v155 = vld [vmem:[#allocation5 + $0x94] sm:$0xff]
    %v156 = vld [vmem:[#allocation5 + $0x9c] sm:$0xff]
    %v157 = vld [vmem:[#allocation5 + $0xa4] sm:$0xf]
    %v158 = vld [vmem:[#allocation5 + $0xa8] sm:$0xff]
    %v159 = vld [vmem:[#allocation5 + $0xb0] sm:$0xff]
    %v160 = vld [vmem:[#allocation5 + $0xb8] sm:$0xff]
    %v161 = vld [vmem:[#allocation5 + $0xc0] sm:$0xf]
    %v162 = vld [vmem:[#allocation5 + $0xc4] sm:$0xff]
    %v163 = vld [vmem:[#allocation5 + $0xcc] sm:$0xff]
    %v164 = vld [vmem:[#allocation5 + $0xd4] sm:$0xff]
    %v165 = vld [vmem:[#allocation5 + $0xdc] sm:$0xf]
    %v166 = vld [vmem:[#allocation5 + $0xe0] sm:$0xff]
    %v167 = vld [vmem:[#allocation5 + $0xe8] sm:$0xff]
    %v168 = vld [vmem:[#allocation5 + $0xf0] sm:$0xff]
    %v169 = vld [vmem:[#allocation5 + $0xf8] sm:$0xf]
    %v170 = vld [vmem:[#allocation5 + $0xfc] sm:$0xff]
    %v171 = vld [vmem:[#allocation5 + $0x104] sm:$0xff]
    %v172 = vld [vmem:[#allocation5 + $0x10c] sm:$0xff]
    %v173 = vld [vmem:[#allocation5 + $0x114] sm:$0xf]
    %v174 = vld [vmem:[#allocation5 + $0x118] sm:$0xff]
    %v175 = vld [vmem:[#allocation5 + $0x120] sm:$0xff]
    %v176 = vld [vmem:[#allocation5 + $0x128] sm:$0xff]
    %v177 = vld [vmem:[#allocation5 + $0x130] sm:$0xf]
    %v178 = vld [vmem:[#allocation5 + $0x134] sm:$0xff]
    %v179 = vld [vmem:[#allocation5 + $0x13c] sm:$0xff]
    %v180 = vld [vmem:[#allocation5 + $0x144] sm:$0xff]
    %v181 = vld [vmem:[#allocation5 + $0x14c] sm:$0xf]
    %v182 = vld [vmem:[#allocation5 + $0x150] sm:$0xff]
    %v183 = vld [vmem:[#allocation5 + $0x158] sm:$0xff]
    %v184 = vld [vmem:[#allocation5 + $0x160] sm:$0xff]
    %v185 = vld [vmem:[#allocation5 + $0x168] sm:$0xf]
    %v186 = vld [vmem:[#allocation5 + $0x16c] sm:$0xff]
    %v187 = vld [vmem:[#allocation5 + $0x174] sm:$0xff]
    %v188 = vld [vmem:[#allocation5 + $0x17c] sm:$0xff]
    %v189 = vld [vmem:[#allocation5 + $0x184] sm:$0xf]
    %v190 = vld [vmem:[#allocation5 + $0x188] sm:$0xff]
    %v191 = vld [vmem:[#allocation5 + $0x190] sm:$0xff]
    %v192 = vld [vmem:[#allocation5 + $0x198] sm:$0xff]
    %v193 = vld [vmem:[#allocation5 + $0x1a0] sm:$0xf]
    %v194 = vld [vmem:[#allocation5 + $0x1a4] sm:$0xff]
    %v195 = vld [vmem:[#allocation5 + $0x1ac] sm:$0xff]
    %v196 = vld [vmem:[#allocation5 + $0x1b4] sm:$0xff]
    %v197 = vld [vmem:[#allocation5 + $0x1bc] sm:$0xf]
    %v198 = vld [vmem:[#allocation5 + $0x1c0] sm:$0xff]
    %v199 = vld [vmem:[#allocation5 + $0x1c8] sm:$0xff]
    %v200 = vld [vmem:[#allocation5 + $0x1d0] sm:$0xff]
    %v201 = vld [vmem:[#allocation5 + $0x1d8] sm:$0xf]
    %v202 = vld [vmem:[#allocation5 + $0x1dc] sm:$0xff]
    %v203 = vld [vmem:[#allocation5 + $0x1e4] sm:$0xff]
    %v204 = vld [vmem:[#allocation5 + $0x1ec] sm:$0xff]
    %v205 = vld [vmem:[#allocation5 + $0x1f4] sm:$0xf]
    %v206 = vld [vmem:[#allocation5 + $0x1f8] sm:$0xff]
    %v207 = vld [vmem:[#allocation5 + $0x200] sm:$0xff]
    %v208 = vld [vmem:[#allocation5 + $0x208] sm:$0xff]
    %v209 = vld [vmem:[#allocation5 + $0x210] sm:$0xf]
    %v210 = vld [vmem:[#allocation5 + $0x214] sm:$0xff]
    %v211 = vld [vmem:[#allocation5 + $0x21c] sm:$0xff]
    %v212 = vld [vmem:[#allocation5 + $0x224] sm:$0xff]
    %v213 = vld [vmem:[#allocation5 + $0x22c] sm:$0xf]
    %v214 = vld [vmem:[#allocation5 + $0x230] sm:$0xff]
    %v215 = vld [vmem:[#allocation5 + $0x238] sm:$0xff]
    %v216 = vld [vmem:[#allocation5 + $0x240] sm:$0xff]
    %v217 = vld [vmem:[#allocation5 + $0x248] sm:$0xf]
    %v218 = vld [vmem:[#allocation5 + $0x24c] sm:$0xff]
    %v219 = vld [vmem:[#allocation5 + $0x254] sm:$0xff]
    %v220 = vld [vmem:[#allocation5 + $0x25c] sm:$0xff]
    %v221 = vld [vmem:[#allocation5 + $0x264] sm:$0xf]
    %v222 = vld [vmem:[#allocation5 + $0x268] sm:$0xff]
    %v223 = vld [vmem:[#allocation5 + $0x270] sm:$0xff]
    %v224 = vld [vmem:[#allocation5 + $0x278] sm:$0xff]
    %v225 = vld [vmem:[#allocation5 + $0x280] sm:$0xf]
    %v226 = vld [vmem:[#allocation5 + $0x284] sm:$0xff]
    %v227 = vld [vmem:[#allocation5 + $0x28c] sm:$0xff]
    %v228 = vld [vmem:[#allocation5 + $0x294] sm:$0xff]
    %v229 = vld [vmem:[#allocation5 + $0x29c] sm:$0xf]
    %v230 = vld [vmem:[#allocation5 + $0x2a0] sm:$0xff]
    %v231 = vld [vmem:[#allocation5 + $0x2a8] sm:$0xff]
    %v232 = vld [vmem:[#allocation5 + $0x2b0] sm:$0xff]
    %v233 = vld [vmem:[#allocation5 + $0x2b8] sm:$0xf]
    %v234 = vld [vmem:[#allocation5 + $0x2bc] sm:$0xff]
    %v235 = vld [vmem:[#allocation5 + $0x2c4] sm:$0xff]
    %v236 = vld [vmem:[#allocation5 + $0x2cc] sm:$0xff]
    %v237 = vld [vmem:[#allocation5 + $0x2d4] sm:$0xf]
    %v238 = vld [vmem:[#allocation5 + $0x2d8] sm:$0xff]
    %v239 = vld [vmem:[#allocation5 + $0x2e0] sm:$0xff]
    %v240 = vld [vmem:[#allocation5 + $0x2e8] sm:$0xff]
    %v241 = vld [vmem:[#allocation5 + $0x2f0] sm:$0xf]
    %v242 = vld [vmem:[#allocation5 + $0x2f4] sm:$0xff]
    %v243 = vld [vmem:[#allocation5 + $0x2fc] sm:$0xff]
    %v244 = vld [vmem:[#allocation5 + $0x304] sm:$0xff]
    %v245 = vld [vmem:[#allocation5 + $0x30c] sm:$0xf]
    %v246 = vld [vmem:[#allocation5 + $0x310] sm:$0xff]
    %v247 = vld [vmem:[#allocation5 + $0x318] sm:$0xff]
    %v248 = vld [vmem:[#allocation5 + $0x320] sm:$0xff]
    %v249 = vld [vmem:[#allocation5 + $0x328] sm:$0xf]
    %v250 = vld [vmem:[#allocation5 + $0x32c] sm:$0xff]
    %v251 = vld [vmem:[#allocation5 + $0x334] sm:$0xff]
    %v252 = vld [vmem:[#allocation5 + $0x33c] sm:$0xff]
    %v253 = vld [vmem:[#allocation5 + $0x344] sm:$0xf]
    %v254 = vld [vmem:[#allocation5 + $0x348] sm:$0xff]
    %v255 = vld [vmem:[#allocation5 + $0x350] sm:$0xff]
    %v256 = vld [vmem:[#allocation5 + $0x358] sm:$0xff]
    %v257 = vld [vmem:[#allocation5 + $0x360] sm:$0xf]
    %v258 = vld [vmem:[#allocation5 + $0x364] sm:$0xff]
    %v259 = vld [vmem:[#allocation5 + $0x36c] sm:$0xff]
    %v260 = vld [vmem:[#allocation5 + $0x374] sm:$0xff]
    %v261 = vld [vmem:[#allocation5 + $0x37c] sm:$0xf]
    %v262 = vld [vmem:[#allocation5 + $0x380] sm:$0xff]
    %v263 = vld [vmem:[#allocation5 + $0x388] sm:$0xff]
    %v264 = vld [vmem:[#allocation5 + $0x390] sm:$0xff]
    %v265 = vld [vmem:[#allocation5 + $0x398] sm:$0xf]
    %v266 = vld [vmem:[#allocation5 + $0x39c] sm:$0xff]
    %v267 = vld [vmem:[#allocation5 + $0x3a4] sm:$0xff]
    %v268 = vld [vmem:[#allocation5 + $0x3ac] sm:$0xff]
    %v269 = vld [vmem:[#allocation5 + $0x3b4] sm:$0xf]
    %v270 = vld [vmem:[#allocation5 + $0x3b8] sm:$0xff]
    %v271 = vld [vmem:[#allocation5 + $0x3c0] sm:$0xff]
    %v272 = vld [vmem:[#allocation5 + $0x3c8] sm:$0xff]
    %v273 = vld [vmem:[#allocation5 + $0x3d0] sm:$0xf]
    %v274 = vld [vmem:[#allocation5 + $0x3d4] sm:$0xff]
    %v275 = vld [vmem:[#allocation5 + $0x3dc] sm:$0xff]
    %v276 = vld [vmem:[#allocation5 + $0x3e4] sm:$0xff]
    %v277 = vld [vmem:[#allocation5 + $0x3ec] sm:$0xf]
    %v278 = vld [vmem:[#allocation5 + $0x3f0] sm:$0xff]
    %v279 = vld [vmem:[#allocation5 + $0x3f8] sm:$0xff]
    %v280 = vld [vmem:[#allocation5 + $0x400] sm:$0xff]
    %v281 = vld [vmem:[#allocation5 + $0x408] sm:$0xf]
    %v282 = vld [vmem:[#allocation5 + $0x40c] sm:$0xff]
    %v283 = vld [vmem:[#allocation5 + $0x414] sm:$0xff]
    %v284 = vld [vmem:[#allocation5 + $0x41c] sm:$0xff]
    %v285 = vld [vmem:[#allocation5 + $0x424] sm:$0xf]
    %v286 = vld [vmem:[#allocation5 + $0x428] sm:$0xff]
    %v287 = vld [vmem:[#allocation5 + $0x430] sm:$0xff]
    %v288 = vld [vmem:[#allocation5 + $0x438] sm:$0xff]
    %v289 = vld [vmem:[#allocation5 + $0x440] sm:$0xf]
    %v290 = vld [vmem:[#allocation5 + $0x444] sm:$0xff]
    %v291 = vld [vmem:[#allocation5 + $0x44c] sm:$0xff]
    %v292 = vld [vmem:[#allocation5 + $0x454] sm:$0xff]
    %v293 = vld [vmem:[#allocation5 + $0x45c] sm:$0xf]
    %v294 = vld [vmem:[#allocation5 + $0x460] sm:$0xff]
    %v295 = vld [vmem:[#allocation5 + $0x468] sm:$0xff]
    %v296 = vld [vmem:[#allocation5 + $0x470] sm:$0xff]
    %v297 = vld [vmem:[#allocation5 + $0x478] sm:$0xf]
    %v298 = vld [vmem:[#allocation5 + $0x47c] sm:$0xff]
    %v299 = vld [vmem:[#allocation5 + $0x484] sm:$0xff]
    %v300 = vld [vmem:[#allocation5 + $0x48c] sm:$0xff]
    %v301 = vld [vmem:[#allocation5 + $0x494] sm:$0xf]
    %v302 = vld [vmem:[#allocation5 + $0x498] sm:$0xff]
    %v303 = vld [vmem:[#allocation5 + $0x4a0] sm:$0xff]
    %v304 = vld [vmem:[#allocation5 + $0x4a8] sm:$0xff]
    %v305 = vld [vmem:[#allocation5 + $0x4b0] sm:$0xf]
    %v306 = vld [vmem:[#allocation5 + $0x4b4] sm:$0xff]
    %v307 = vld [vmem:[#allocation5 + $0x4bc] sm:$0xff]
    %v308 = vld [vmem:[#allocation5 + $0x4c4] sm:$0xff]
    %v309 = vld [vmem:[#allocation5 + $0x4cc] sm:$0xf]
    %v310 = vld [vmem:[#allocation5 + $0x4d0] sm:$0xff]
    %v311 = vld [vmem:[#allocation5 + $0x4d8] sm:$0xff]
    %v312 = vld [vmem:[#allocation5 + $0x4e0] sm:$0xff]
    %v313 = vld [vmem:[#allocation5 + $0x4e8] sm:$0xf]
    %v314 = vld [vmem:[#allocation5 + $0x4ec] sm:$0xff]
    %v315 = vld [vmem:[#allocation5 + $0x4f4] sm:$0xff]
    %v316 = vld [vmem:[#allocation5 + $0x4fc] sm:$0xff]
    %v317 = vld [vmem:[#allocation5 + $0x504] sm:$0xf]
    %v318 = vld [vmem:[#allocation5 + $0x508] sm:$0xff]
    %v319 = vld [vmem:[#allocation5 + $0x510] sm:$0xff]
    %v320 = vld [vmem:[#allocation5 + $0x518] sm:$0xff]
    %v321 = vld [vmem:[#allocation5 + $0x520] sm:$0xf]
    %v322 = vld [vmem:[#allocation5 + $0x524] sm:$0xff]
    %v323 = vld [vmem:[#allocation5 + $0x52c] sm:$0xff]
    %v324 = vld [vmem:[#allocation5 + $0x534] sm:$0xff]
    %v325 = vld [vmem:[#allocation5 + $0x53c] sm:$0xf]
    %v326 = vld [vmem:[#allocation5 + $0x540] sm:$0xff]
    %v327 = vld [vmem:[#allocation5 + $0x548] sm:$0xff]
    %v328 = vld [vmem:[#allocation5 + $0x550] sm:$0xff]
    %v329 = vld [vmem:[#allocation5 + $0x558] sm:$0xf]
    %v330 = vld [vmem:[#allocation5 + $0x55c] sm:$0xff]
    %v331 = vld [vmem:[#allocation5 + $0x564] sm:$0xff]
    %v332 = vld [vmem:[#allocation5 + $0x56c] sm:$0xff]
    %v333 = vld [vmem:[#allocation5 + $0x574] sm:$0xf]
    %v334 = vld [vmem:[#allocation5 + $0x578] sm:$0xff]
    %v335 = vld [vmem:[#allocation5 + $0x580] sm:$0xff]
    %v336 = vld [vmem:[#allocation5 + $0x588] sm:$0xff]
    %v337 = vld [vmem:[#allocation5 + $0x590] sm:$0xf]
    %v338 = vld [vmem:[#allocation5 + $0x594] sm:$0xff]
    %v339 = vld [vmem:[#allocation5 + $0x59c] sm:$0xff]
    %v340 = vld [vmem:[#allocation5 + $0x5a4] sm:$0xff]
    %v341 = vld [vmem:[#allocation5 + $0x5ac] sm:$0xf]
    %v342 = vld [vmem:[#allocation5 + $0x5b0] sm:$0xff]
    %v343 = vld [vmem:[#allocation5 + $0x5b8] sm:$0xff]
    %v344 = vld [vmem:[#allocation5 + $0x5c0] sm:$0xff]
    %v345 = vld [vmem:[#allocation5 + $0x5c8] sm:$0xf]
    %v346 = vld [vmem:[#allocation5 + $0x5cc] sm:$0xff]
    %v347 = vld [vmem:[#allocation5 + $0x5d4] sm:$0xff]
    %v348 = vld [vmem:[#allocation5 + $0x5dc] sm:$0xff]
    %v349 = vld [vmem:[#allocation5 + $0x5e4] sm:$0xf]
    %v350 = vld [vmem:[#allocation5 + $0x5e8] sm:$0xff]
    %v351 = vld [vmem:[#allocation5 + $0x5f0] sm:$0xff]
    %v352 = vld [vmem:[#allocation5 + $0x5f8] sm:$0xff]
    %v353 = vld [vmem:[#allocation5 + $0x600] sm:$0xf]
    %v354 = vld [vmem:[#allocation5 + $0x604] sm:$0xff]
    %v355 = vld [vmem:[#allocation5 + $0x60c] sm:$0xff]
    %v356 = vld [vmem:[#allocation5 + $0x614] sm:$0xff]
    %v357 = vld [vmem:[#allocation5 + $0x61c] sm:$0xf]
    %v358 = vld [vmem:[#allocation5 + $0x620] sm:$0xff]
    %v359 = vld [vmem:[#allocation5 + $0x628] sm:$0xff]
    %v360 = vld [vmem:[#allocation5 + $0x630] sm:$0xff]
    %v361 = vld [vmem:[#allocation5 + $0x638] sm:$0xf]
    %v362 = vld [vmem:[#allocation5 + $0x63c] sm:$0xff]
    %v363 = vld [vmem:[#allocation5 + $0x644] sm:$0xff]
    %v364 = vld [vmem:[#allocation5 + $0x64c] sm:$0xff]
    %v365 = vld [vmem:[#allocation5 + $0x654] sm:$0xf]
    %v366 = vld [vmem:[#allocation5 + $0x658] sm:$0xff]
    %v367 = vld [vmem:[#allocation5 + $0x660] sm:$0xff]
    %v368 = vld [vmem:[#allocation5 + $0x668] sm:$0xff]
    %v369 = vld [vmem:[#allocation5 + $0x670] sm:$0xf]
    %v370 = vld [vmem:[#allocation5 + $0x674] sm:$0xff]
    %v371 = vld [vmem:[#allocation5 + $0x67c] sm:$0xff]
    %v372 = vld [vmem:[#allocation5 + $0x684] sm:$0xff]
    %v373 = vld [vmem:[#allocation5 + $0x68c] sm:$0xf]
    %v374 = vld [vmem:[#allocation5 + $0x690] sm:$0xff]
    %v375 = vld [vmem:[#allocation5 + $0x698] sm:$0xff]
    %v376 = vld [vmem:[#allocation5 + $0x6a0] sm:$0xff]
    %v377 = vld [vmem:[#allocation5 + $0x6a8] sm:$0xf]
    %v378 = vld [vmem:[#allocation5 + $0x6ac] sm:$0xff]
    %v379 = vld [vmem:[#allocation5 + $0x6b4] sm:$0xff]
    %v380 = vld [vmem:[#allocation5 + $0x6bc] sm:$0xff]
    %v381 = vld [vmem:[#allocation5 + $0x6c4] sm:$0xf]
    %v382 = vld [vmem:[#allocation5 + $0x6c8] sm:$0xff]
    %v383 = vld [vmem:[#allocation5 + $0x6d0] sm:$0xff]
    %v384 = vld [vmem:[#allocation5 + $0x6d8] sm:$0xff]
    %v385 = vld [vmem:[#allocation5 + $0x6e0] sm:$0xf]
    %v386 = vld [vmem:[#allocation5 + $0x6e4] sm:$0xff]
    %v387 = vld [vmem:[#allocation5 + $0x6ec] sm:$0xff]
    %v388 = vld [vmem:[#allocation5 + $0x6f4] sm:$0xff]
    %v389 = vld [vmem:[#allocation5 + $0x6fc] sm:$0xf]
    %v390 = vld [vmem:[#allocation5 + $0x700] sm:$0xff]
    %v391 = vld [vmem:[#allocation5 + $0x708] sm:$0xff]
    %v392 = vld [vmem:[#allocation5 + $0x710] sm:$0xff]
    %v393 = vld [vmem:[#allocation5 + $0x718] sm:$0xf]
    %v394 = vld [vmem:[#allocation5 + $0x71c] sm:$0xff]
    %v395 = vld [vmem:[#allocation5 + $0x724] sm:$0xff]
    %v396 = vld [vmem:[#allocation5 + $0x72c] sm:$0xff]
    %v397 = vld [vmem:[#allocation5 + $0x734] sm:$0xf]
    %v398 = vld [vmem:[#allocation5 + $0x738] sm:$0xff]
    %v399 = vld [vmem:[#allocation5 + $0x740] sm:$0xff]
    %v400 = vld [vmem:[#allocation5 + $0x748] sm:$0xff]
    %v401 = vld [vmem:[#allocation5 + $0x750] sm:$0xf]
    %v402 = vld [vmem:[#allocation5 + $0x754] sm:$0xff]
    %v403 = vld [vmem:[#allocation5 + $0x75c] sm:$0xff]
    %v404 = vld [vmem:[#allocation5 + $0x764] sm:$0xff]
    %v405 = vld [vmem:[#allocation5 + $0x76c] sm:$0xf]
    %v406 = vld [vmem:[#allocation5 + $0x770] sm:$0xff]
    %v407 = vld [vmem:[#allocation5 + $0x778] sm:$0xff]
    %v408 = vld [vmem:[#allocation5 + $0x780] sm:$0xff]
    %v409 = vld [vmem:[#allocation5 + $0x788] sm:$0xf]
    %v410 = vld [vmem:[#allocation5 + $0x78c] sm:$0xff]
    %v411 = vld [vmem:[#allocation5 + $0x794] sm:$0xff]
    %v412 = vld [vmem:[#allocation5 + $0x79c] sm:$0xff]
    %v413 = vld [vmem:[#allocation5 + $0x7a4] sm:$0xf]
    %v414 = vld [vmem:[#allocation5 + $0x7a8] sm:$0xff]
    %v415 = vld [vmem:[#allocation5 + $0x7b0] sm:$0xff]
    %v416 = vld [vmem:[#allocation5 + $0x7b8] sm:$0xff]
    %v417 = vld [vmem:[#allocation5 + $0x7c0] sm:$0xf]
    %v418 = vld [vmem:[#allocation5 + $0x7c4] sm:$0xff]
    %v419 = vld [vmem:[#allocation5 + $0x7cc] sm:$0xff]
    %v420 = vld [vmem:[#allocation5 + $0x7d4] sm:$0xff]
    %v421 = vld [vmem:[#allocation5 + $0x7dc] sm:$0xf]
    %v422 = vld [vmem:[#allocation5 + $0x7e0] sm:$0xff]
    %v423 = vld [vmem:[#allocation5 + $0x7e8] sm:$0xff]
    %v424 = vld [vmem:[#allocation5 + $0x7f0] sm:$0xff]
    %v425 = vld [vmem:[#allocation5 + $0x7f8] sm:$0xf]
    %v426 = vld [vmem:[#allocation5 + $0x7fc] sm:$0xff]
    %v427 = vld [vmem:[#allocation5 + $0x804] sm:$0xff]
    %v428 = vld [vmem:[#allocation5 + $0x80c] sm:$0xff]
    %v429 = vld [vmem:[#allocation5 + $0x814] sm:$0xf]
    %v430 = vld [vmem:[#allocation5 + $0x818] sm:$0xff]
    %v431 = vld [vmem:[#allocation5 + $0x820] sm:$0xff]
    %v432 = vld [vmem:[#allocation5 + $0x828] sm:$0xff]
    %v433 = vld [vmem:[#allocation5 + $0x830] sm:$0xf]
    %v434 = vld [vmem:[#allocation5 + $0x834] sm:$0xff]
    %v435 = vld [vmem:[#allocation5 + $0x83c] sm:$0xff]
    %v436 = vld [vmem:[#allocation5 + $0x844] sm:$0xff]
    %v437 = vld [vmem:[#allocation5 + $0x84c] sm:$0xf]
    %v438 = vld [vmem:[#allocation5 + $0x850] sm:$0xff]
    %v439 = vld [vmem:[#allocation5 + $0x858] sm:$0xff]
    %v440 = vld [vmem:[#allocation5 + $0x860] sm:$0xff]
    %v441 = vld [vmem:[#allocation5 + $0x868] sm:$0xf]
    %v442 = vld [vmem:[#allocation5 + $0x86c] sm:$0xff]
    %v443 = vld [vmem:[#allocation5 + $0x874] sm:$0xff]
    %v444 = vld [vmem:[#allocation5 + $0x87c] sm:$0xff]
    %v445 = vld [vmem:[#allocation5 + $0x884] sm:$0xf]
    %v446 = vld [vmem:[#allocation5 + $0x888] sm:$0xff]
    %v447 = vld [vmem:[#allocation5 + $0x890] sm:$0xff]
    %v448 = vld [vmem:[#allocation5 + $0x898] sm:$0xff]
    %v449 = vld [vmem:[#allocation5 + $0x8a0] sm:$0xf]
    %v450 = vld [vmem:[#allocation5 + $0x8a4] sm:$0xff]
    %v451 = vld [vmem:[#allocation5 + $0x8ac] sm:$0xff]
    %v452 = vld [vmem:[#allocation5 + $0x8b4] sm:$0xff]
    %v453 = vld [vmem:[#allocation5 + $0x8bc] sm:$0xf]
    %v454 = vld [vmem:[#allocation5 + $0x8c0] sm:$0xff]
    %v455 = vld [vmem:[#allocation5 + $0x8c8] sm:$0xff]
    %v456 = vld [vmem:[#allocation5 + $0x8d0] sm:$0xff]
    %v457 = vld [vmem:[#allocation5 + $0x8d8] sm:$0xf]
    %v458 = vld [vmem:[#allocation5 + $0x8dc] sm:$0xff]
    %v459 = vld [vmem:[#allocation5 + $0x8e4] sm:$0xff]
    %v460 = vld [vmem:[#allocation5 + $0x8ec] sm:$0xff]
    %v461 = vld [vmem:[#allocation5 + $0x8f4] sm:$0xf]
    %v462 = vld [vmem:[#allocation5 + $0x8f8] sm:$0xff]
    %v463 = vld [vmem:[#allocation5 + $0x900] sm:$0xff]
    %v464 = vld [vmem:[#allocation5 + $0x908] sm:$0xff]
    %v465 = vld [vmem:[#allocation5 + $0x910] sm:$0xf]
    %v466 = vld [vmem:[#allocation5 + $0x914] sm:$0xff]
    %v467 = vld [vmem:[#allocation5 + $0x91c] sm:$0xff]
    %v468 = vld [vmem:[#allocation5 + $0x924] sm:$0xff]
    %v469 = vld [vmem:[#allocation5 + $0x92c] sm:$0xf]
    %v470 = vld [vmem:[#allocation5 + $0x930] sm:$0xff]
    %v471 = vld [vmem:[#allocation5 + $0x938] sm:$0xff]
    %v472 = vld [vmem:[#allocation5 + $0x940] sm:$0xff]
    %v473 = vld [vmem:[#allocation5 + $0x948] sm:$0xf]
    %v474 = vld [vmem:[#allocation5 + $0x94c] sm:$0xff]
    %v475 = vld [vmem:[#allocation5 + $0x954] sm:$0xff]
    %v476 = vld [vmem:[#allocation5 + $0x95c] sm:$0xff]
    %v477 = vld [vmem:[#allocation5 + $0x964] sm:$0xf]
    %v478 = vld [vmem:[#allocation5 + $0x968] sm:$0xff]
    %v479 = vld [vmem:[#allocation5 + $0x970] sm:$0xff]
    %v480 = vld [vmem:[#allocation5 + $0x978] sm:$0xff]
    %v481 = vld [vmem:[#allocation5 + $0x980] sm:$0xf]
    %v482 = vld [vmem:[#allocation5 + $0x984] sm:$0xff]
    %v483 = vld [vmem:[#allocation5 + $0x98c] sm:$0xff]
    %v484 = vld [vmem:[#allocation5 + $0x994] sm:$0xff]
    %v485 = vld [vmem:[#allocation5 + $0x99c] sm:$0xf]
    %v486 = vld [vmem:[#allocation5 + $0x9a0] sm:$0xff]
    %v487 = vld [vmem:[#allocation5 + $0x9a8] sm:$0xff]
    %v488 = vld [vmem:[#allocation5 + $0x9b0] sm:$0xff]
    %v489 = vld [vmem:[#allocation5 + $0x9b8] sm:$0xf]
    %v490 = vld [vmem:[#allocation5 + $0x9bc] sm:$0xff]
    %v491 = vld [vmem:[#allocation5 + $0x9c4] sm:$0xff]
    %v492 = vld [vmem:[#allocation5 + $0x9cc] sm:$0xff]
    %v493 = vld [vmem:[#allocation5 + $0x9d4] sm:$0xf]
    %v494 = vld [vmem:[#allocation5 + $0x9d8] sm:$0xff]
    %v495 = vld [vmem:[#allocation5 + $0x9e0] sm:$0xff]
    %v496 = vld [vmem:[#allocation5 + $0x9e8] sm:$0xff]
    %v497 = vld [vmem:[#allocation5 + $0x9f0] sm:$0xf]
    %v498 = vld [vmem:[#allocation5 + $0x9f4] sm:$0xff]
    %v499 = vld [vmem:[#allocation5 + $0x9fc] sm:$0xff]
    %v500 = vld [vmem:[#allocation5 + $0xa04] sm:$0xff]
    %v501 = vld [vmem:[#allocation5 + $0xa0c] sm:$0xf]
    %v502 = vld [vmem:[#allocation5 + $0xa10] sm:$0xff]
    %v503 = vld [vmem:[#allocation5 + $0xa18] sm:$0xff]
    %v504 = vld [vmem:[#allocation5 + $0xa20] sm:$0xff]
    %v505 = vld [vmem:[#allocation5 + $0xa28] sm:$0xf]
    %v506 = vld [vmem:[#allocation5 + $0xa2c] sm:$0xff]
    %v507 = vld [vmem:[#allocation5 + $0xa34] sm:$0xff]
    %v508 = vld [vmem:[#allocation5 + $0xa3c] sm:$0xff]
    %v509 = vld [vmem:[#allocation5 + $0xa44] sm:$0xf]
    %v510 = vld [vmem:[#allocation5 + $0xa48] sm:$0xff]
    %v511 = vld [vmem:[#allocation5 + $0xa50] sm:$0xff]
    %v512 = vld [vmem:[#allocation5 + $0xa58] sm:$0xff]
    %v513 = vld [vmem:[#allocation5 + $0xa60] sm:$0xf]
    %v514 = vld [vmem:[#allocation5 + $0xa64] sm:$0xff]
    %v515 = vld [vmem:[#allocation5 + $0xa6c] sm:$0xff]
    %v516 = vld [vmem:[#allocation5 + $0xa74] sm:$0xff]
    %v517 = vld [vmem:[#allocation5 + $0xa7c] sm:$0xf]
    %v518 = vld [vmem:[#allocation5 + $0xa80] sm:$0xff]
    %v519 = vld [vmem:[#allocation5 + $0xa88] sm:$0xff]
    %v520 = vld [vmem:[#allocation5 + $0xa90] sm:$0xff]
    %v521 = vld [vmem:[#allocation5 + $0xa98] sm:$0xf]
    %v522 = vld [vmem:[#allocation5 + $0xa9c] sm:$0xff]
    %v523 = vld [vmem:[#allocation5 + $0xaa4] sm:$0xff]
    %v524 = vld [vmem:[#allocation5 + $0xaac] sm:$0xff]
    %v525 = vld [vmem:[#allocation5 + $0xab4] sm:$0xf]
    %v526 = vld [vmem:[#allocation8] sm:$0x7f]
    %v528 = vlaneseq
    %v529 = vshrl.u32 %v528, 7
    %v530 = vsub.s32 0, %v529
    %v531 = vrot.slane %v526, %v530
    %v532 = vlaneseq
    %v533 = vshrl.u32 %v532, 7
    %v534 = vsub.s32 1, %v533
    %v535 = vrot.slane %v526, %v534
    %v536 = vlaneseq
    %v537 = vshrl.u32 %v536, 7
    %v538 = vsub.s32 2, %v537
    %v539 = vrot.slane %v526, %v538
    %v540 = vlaneseq
    %v541 = vshrl.u32 %v540, 7
    %v542 = vsub.s32 3, %v541
    %v543 = vrot.slane %v526, %v542
    %v544 = vlaneseq
    %v545 = vshrl.u32 %v544, 7
    %v546 = vsub.s32 4, %v545
    %v547 = vrot.slane %v526, %v546
    %v548 = vlaneseq
    %v549 = vshrl.u32 %v548, 7
    %v550 = vsub.s32 5, %v549
    %v551 = vrot.slane %v526, %v550
    %v552 = vlaneseq
    %v553 = vshrl.u32 %v552, 7
    %v554 = vsub.s32 6, %v553
    %v555 = vrot.slane %v526, %v554
    %v955 = vunpack.c.l.b16 %v134
    %v956 = vunpack.c.h.b16 %v134
    %v957 = vunpack.c.l.b16 %v135
    %v958 = vunpack.c.h.b16 %v135
    %v959 = vunpack.c.l.b16 %v136
    %v960 = vunpack.c.h.b16 %v136
    %v961 = vunpack.c.l.b16 %v137
    %v962 = vunpack.c.l.b16 %v138
    %v963 = vunpack.c.h.b16 %v138
    %v964 = vunpack.c.l.b16 %v139
    %v965 = vunpack.c.h.b16 %v139
    %v966 = vunpack.c.l.b16 %v140
    %v967 = vunpack.c.h.b16 %v140
    %v968 = vunpack.c.l.b16 %v141
    %v969 = vunpack.c.l.b16 %v142
    %v970 = vunpack.c.h.b16 %v142
    %v971 = vunpack.c.l.b16 %v143
    %v972 = vunpack.c.h.b16 %v143
    %v973 = vunpack.c.l.b16 %v144
    %v974 = vunpack.c.h.b16 %v144
    %v975 = vunpack.c.l.b16 %v145
    %v976 = vunpack.c.l.b16 %v146
    %v977 = vunpack.c.h.b16 %v146
    %v978 = vunpack.c.l.b16 %v147
    %v979 = vunpack.c.h.b16 %v147
    %v980 = vunpack.c.l.b16 %v148
    %v981 = vunpack.c.h.b16 %v148
    %v982 = vunpack.c.l.b16 %v149
    %v983 = vunpack.c.l.b16 %v150
    %v984 = vunpack.c.h.b16 %v150
    %v985 = vunpack.c.l.b16 %v151
    %v986 = vunpack.c.h.b16 %v151
    %v987 = vunpack.c.l.b16 %v152
    %v988 = vunpack.c.h.b16 %v152
    %v989 = vunpack.c.l.b16 %v153
    %v990 = vunpack.c.l.b16 %v154
    %v991 = vunpack.c.h.b16 %v154
    %v992 = vunpack.c.l.b16 %v155
    %v993 = vunpack.c.h.b16 %v155
    %v994 = vunpack.c.l.b16 %v156
    %v995 = vunpack.c.h.b16 %v156
    %v996 = vunpack.c.l.b16 %v157
    %v997 = vunpack.c.l.b16 %v158
    %v998 = vunpack.c.h.b16 %v158
    %v999 = vunpack.c.l.b16 %v159
    %v1000 = vunpack.c.h.b16 %v159
    %v1001 = vunpack.c.l.b16 %v160
    %v1002 = vunpack.c.h.b16 %v160
    %v1003 = vunpack.c.l.b16 %v161
    %v1004 = vunpack.c.l.b16 %v162
    %v1005 = vunpack.c.h.b16 %v162
    %v1006 = vunpack.c.l.b16 %v163
    %v1007 = vunpack.c.h.b16 %v163
    %v1008 = vunpack.c.l.b16 %v164
    %v1009 = vunpack.c.h.b16 %v164
    %v1010 = vunpack.c.l.b16 %v165
    %v1011 = vunpack.c.l.b16 %v166
    %v1012 = vunpack.c.h.b16 %v166
    %v1013 = vunpack.c.l.b16 %v167
    %v1014 = vunpack.c.h.b16 %v167
    %v1015 = vunpack.c.l.b16 %v168
    %v1016 = vunpack.c.h.b16 %v168
    %v1017 = vunpack.c.l.b16 %v169
    %v1018 = vunpack.c.l.b16 %v170
    %v1019 = vunpack.c.h.b16 %v170
    %v1020 = vunpack.c.l.b16 %v171
    %v1021 = vunpack.c.h.b16 %v171
    %v1022 = vunpack.c.l.b16 %v172
    %v1023 = vunpack.c.h.b16 %v172
    %v1024 = vunpack.c.l.b16 %v173
    %v1025 = vunpack.c.l.b16 %v174
    %v1026 = vunpack.c.h.b16 %v174
    %v1027 = vunpack.c.l.b16 %v175
    %v1028 = vunpack.c.h.b16 %v175
    %v1029 = vunpack.c.l.b16 %v176
    %v1030 = vunpack.c.h.b16 %v176
    %v1031 = vunpack.c.l.b16 %v177
    %v1032 = vunpack.c.l.b16 %v178
    %v1033 = vunpack.c.h.b16 %v178
    %v1034 = vunpack.c.l.b16 %v179
    %v1035 = vunpack.c.h.b16 %v179
    %v1036 = vunpack.c.l.b16 %v180
    %v1037 = vunpack.c.h.b16 %v180
    %v1038 = vunpack.c.l.b16 %v181
    %v1039 = vunpack.c.l.b16 %v182
    %v1040 = vunpack.c.h.b16 %v182
    %v1041 = vunpack.c.l.b16 %v183
    %v1042 = vunpack.c.h.b16 %v183
    %v1043 = vunpack.c.l.b16 %v184
    %v1044 = vunpack.c.h.b16 %v184
    %v1045 = vunpack.c.l.b16 %v185
    %v1046 = vunpack.c.l.b16 %v186
    %v1047 = vunpack.c.h.b16 %v186
    %v1048 = vunpack.c.l.b16 %v187
    %v1049 = vunpack.c.h.b16 %v187
    %v1050 = vunpack.c.l.b16 %v188
    %v1051 = vunpack.c.h.b16 %v188
    %v1052 = vunpack.c.l.b16 %v189
    %v1053 = vunpack.c.l.b16 %v190
    %v1054 = vunpack.c.h.b16 %v190
    %v1055 = vunpack.c.l.b16 %v191
    %v1056 = vunpack.c.h.b16 %v191
    %v1057 = vunpack.c.l.b16 %v192
    %v1058 = vunpack.c.h.b16 %v192
    %v1059 = vunpack.c.l.b16 %v193
    %v1060 = vunpack.c.l.b16 %v194
    %v1061 = vunpack.c.h.b16 %v194
    %v1062 = vunpack.c.l.b16 %v195
    %v1063 = vunpack.c.h.b16 %v195
    %v1064 = vunpack.c.l.b16 %v196
    %v1065 = vunpack.c.h.b16 %v196
    %v1066 = vunpack.c.l.b16 %v197
    %v1067 = vunpack.c.l.b16 %v198
    %v1068 = vunpack.c.h.b16 %v198
    %v1069 = vunpack.c.l.b16 %v199
    %v1070 = vunpack.c.h.b16 %v199
    %v1071 = vunpack.c.l.b16 %v200
    %v1072 = vunpack.c.h.b16 %v200
    %v1073 = vunpack.c.l.b16 %v201
    %v1074 = vunpack.c.l.b16 %v202
    %v1075 = vunpack.c.h.b16 %v202
    %v1076 = vunpack.c.l.b16 %v203
    %v1077 = vunpack.c.h.b16 %v203
    %v1078 = vunpack.c.l.b16 %v204
    %v1079 = vunpack.c.h.b16 %v204
    %v1080 = vunpack.c.l.b16 %v205
    %v1081 = vunpack.c.l.b16 %v206
    %v1082 = vunpack.c.h.b16 %v206
    %v1083 = vunpack.c.l.b16 %v207
    %v1084 = vunpack.c.h.b16 %v207
    %v1085 = vunpack.c.l.b16 %v208
    %v1086 = vunpack.c.h.b16 %v208
    %v1087 = vunpack.c.l.b16 %v209
    %v1088 = vunpack.c.l.b16 %v210
    %v1089 = vunpack.c.h.b16 %v210
    %v1090 = vunpack.c.l.b16 %v211
    %v1091 = vunpack.c.h.b16 %v211
    %v1092 = vunpack.c.l.b16 %v212
    %v1093 = vunpack.c.h.b16 %v212
    %v1094 = vunpack.c.l.b16 %v213
    %v1095 = vunpack.c.l.b16 %v214
    %v1096 = vunpack.c.h.b16 %v214
    %v1097 = vunpack.c.l.b16 %v215
    %v1098 = vunpack.c.h.b16 %v215
    %v1099 = vunpack.c.l.b16 %v216
    %v1100 = vunpack.c.h.b16 %v216
    %v1101 = vunpack.c.l.b16 %v217
    %v1102 = vunpack.c.l.b16 %v218
    %v1103 = vunpack.c.h.b16 %v218
    %v1104 = vunpack.c.l.b16 %v219
    %v1105 = vunpack.c.h.b16 %v219
    %v1106 = vunpack.c.l.b16 %v220
    %v1107 = vunpack.c.h.b16 %v220
    %v1108 = vunpack.c.l.b16 %v221
    %v1109 = vunpack.c.l.b16 %v222
    %v1110 = vunpack.c.h.b16 %v222
    %v1111 = vunpack.c.l.b16 %v223
    %v1112 = vunpack.c.h.b16 %v223
    %v1113 = vunpack.c.l.b16 %v224
    %v1114 = vunpack.c.h.b16 %v224
    %v1115 = vunpack.c.l.b16 %v225
    %v1116 = vunpack.c.l.b16 %v226
    %v1117 = vunpack.c.h.b16 %v226
    %v1118 = vunpack.c.l.b16 %v227
    %v1119 = vunpack.c.h.b16 %v227
    %v1120 = vunpack.c.l.b16 %v228
    %v1121 = vunpack.c.h.b16 %v228
    %v1122 = vunpack.c.l.b16 %v229
    %v1123 = vunpack.c.l.b16 %v230
    %v1124 = vunpack.c.h.b16 %v230
    %v1125 = vunpack.c.l.b16 %v231
    %v1126 = vunpack.c.h.b16 %v231
    %v1127 = vunpack.c.l.b16 %v232
    %v1128 = vunpack.c.h.b16 %v232
    %v1129 = vunpack.c.l.b16 %v233
    %v1130 = vunpack.c.l.b16 %v234
    %v1131 = vunpack.c.h.b16 %v234
    %v1132 = vunpack.c.l.b16 %v235
    %v1133 = vunpack.c.h.b16 %v235
    %v1134 = vunpack.c.l.b16 %v236
    %v1135 = vunpack.c.h.b16 %v236
    %v1136 = vunpack.c.l.b16 %v237
    %v1137 = vunpack.c.l.b16 %v238
    %v1138 = vunpack.c.h.b16 %v238
    %v1139 = vunpack.c.l.b16 %v239
    %v1140 = vunpack.c.h.b16 %v239
    %v1141 = vunpack.c.l.b16 %v240
    %v1142 = vunpack.c.h.b16 %v240
    %v1143 = vunpack.c.l.b16 %v241
    %v1144 = vunpack.c.l.b16 %v242
    %v1145 = vunpack.c.h.b16 %v242
    %v1146 = vunpack.c.l.b16 %v243
    %v1147 = vunpack.c.h.b16 %v243
    %v1148 = vunpack.c.l.b16 %v244
    %v1149 = vunpack.c.h.b16 %v244
    %v1150 = vunpack.c.l.b16 %v245
    %v1151 = vunpack.c.l.b16 %v246
    %v1152 = vunpack.c.h.b16 %v246
    %v1153 = vunpack.c.l.b16 %v247
    %v1154 = vunpack.c.h.b16 %v247
    %v1155 = vunpack.c.l.b16 %v248
    %v1156 = vunpack.c.h.b16 %v248
    %v1157 = vunpack.c.l.b16 %v249
    %v1158 = vunpack.c.l.b16 %v250
    %v1159 = vunpack.c.h.b16 %v250
    %v1160 = vunpack.c.l.b16 %v251
    %v1161 = vunpack.c.h.b16 %v251
    %v1162 = vunpack.c.l.b16 %v252
    %v1163 = vunpack.c.h.b16 %v252
    %v1164 = vunpack.c.l.b16 %v253
    %v1165 = vunpack.c.l.b16 %v254
    %v1166 = vunpack.c.h.b16 %v254
    %v1167 = vunpack.c.l.b16 %v255
    %v1168 = vunpack.c.h.b16 %v255
    %v1169 = vunpack.c.l.b16 %v256
    %v1170 = vunpack.c.h.b16 %v256
    %v1171 = vunpack.c.l.b16 %v257
    %v1172 = vunpack.c.l.b16 %v258
    %v1173 = vunpack.c.h.b16 %v258
    %v1174 = vunpack.c.l.b16 %v259
    %v1175 = vunpack.c.h.b16 %v259
    %v1176 = vunpack.c.l.b16 %v260
    %v1177 = vunpack.c.h.b16 %v260
    %v1178 = vunpack.c.l.b16 %v261
    %v1179 = vunpack.c.l.b16 %v262
    %v1180 = vunpack.c.h.b16 %v262
    %v1181 = vunpack.c.l.b16 %v263
    %v1182 = vunpack.c.h.b16 %v263
    %v1183 = vunpack.c.l.b16 %v264
    %v1184 = vunpack.c.h.b16 %v264
    %v1185 = vunpack.c.l.b16 %v265
    %v1186 = vunpack.c.l.b16 %v266
    %v1187 = vunpack.c.h.b16 %v266
    %v1188 = vunpack.c.l.b16 %v267
    %v1189 = vunpack.c.h.b16 %v267
    %v1190 = vunpack.c.l.b16 %v268
    %v1191 = vunpack.c.h.b16 %v268
    %v1192 = vunpack.c.l.b16 %v269
    %v1193 = vunpack.c.l.b16 %v270
    %v1194 = vunpack.c.h.b16 %v270
    %v1195 = vunpack.c.l.b16 %v271
    %v1196 = vunpack.c.h.b16 %v271
    %v1197 = vunpack.c.l.b16 %v272
    %v1198 = vunpack.c.h.b16 %v272
    %v1199 = vunpack.c.l.b16 %v273
    %v1200 = vunpack.c.l.b16 %v274
    %v1201 = vunpack.c.h.b16 %v274
    %v1202 = vunpack.c.l.b16 %v275
    %v1203 = vunpack.c.h.b16 %v275
    %v1204 = vunpack.c.l.b16 %v276
    %v1205 = vunpack.c.h.b16 %v276
    %v1206 = vunpack.c.l.b16 %v277
    %v1207 = vunpack.c.l.b16 %v278
    %v1208 = vunpack.c.h.b16 %v278
    %v1209 = vunpack.c.l.b16 %v279
    %v1210 = vunpack.c.h.b16 %v279
    %v1211 = vunpack.c.l.b16 %v280
    %v1212 = vunpack.c.h.b16 %v280
    %v1213 = vunpack.c.l.b16 %v281
    %v1214 = vunpack.c.l.b16 %v282
    %v1215 = vunpack.c.h.b16 %v282
    %v1216 = vunpack.c.l.b16 %v283
    %v1217 = vunpack.c.h.b16 %v283
    %v1218 = vunpack.c.l.b16 %v284
    %v1219 = vunpack.c.h.b16 %v284
    %v1220 = vunpack.c.l.b16 %v285
    %v1221 = vunpack.c.l.b16 %v286
    %v1222 = vunpack.c.h.b16 %v286
    %v1223 = vunpack.c.l.b16 %v287
    %v1224 = vunpack.c.h.b16 %v287
    %v1225 = vunpack.c.l.b16 %v288
    %v1226 = vunpack.c.h.b16 %v288
    %v1227 = vunpack.c.l.b16 %v289
    %v1228 = vunpack.c.l.b16 %v290
    %v1229 = vunpack.c.h.b16 %v290
    %v1230 = vunpack.c.l.b16 %v291
    %v1231 = vunpack.c.h.b16 %v291
    %v1232 = vunpack.c.l.b16 %v292
    %v1233 = vunpack.c.h.b16 %v292
    %v1234 = vunpack.c.l.b16 %v293
    %v1235 = vunpack.c.l.b16 %v294
    %v1236 = vunpack.c.h.b16 %v294
    %v1237 = vunpack.c.l.b16 %v295
    %v1238 = vunpack.c.h.b16 %v295
    %v1239 = vunpack.c.l.b16 %v296
    %v1240 = vunpack.c.h.b16 %v296
    %v1241 = vunpack.c.l.b16 %v297
    %v1242 = vunpack.c.l.b16 %v298
    %v1243 = vunpack.c.h.b16 %v298
    %v1244 = vunpack.c.l.b16 %v299
    %v1245 = vunpack.c.h.b16 %v299
    %v1246 = vunpack.c.l.b16 %v300
    %v1247 = vunpack.c.h.b16 %v300
    %v1248 = vunpack.c.l.b16 %v301
    %v1249 = vunpack.c.l.b16 %v302
    %v1250 = vunpack.c.h.b16 %v302
    %v1251 = vunpack.c.l.b16 %v303
    %v1252 = vunpack.c.h.b16 %v303
    %v1253 = vunpack.c.l.b16 %v304
    %v1254 = vunpack.c.h.b16 %v304
    %v1255 = vunpack.c.l.b16 %v305
    %v1256 = vunpack.c.l.b16 %v306
    %v1257 = vunpack.c.h.b16 %v306
    %v1258 = vunpack.c.l.b16 %v307
    %v1259 = vunpack.c.h.b16 %v307
    %v1260 = vunpack.c.l.b16 %v308
    %v1261 = vunpack.c.h.b16 %v308
    %v1262 = vunpack.c.l.b16 %v309
    %v1263 = vunpack.c.l.b16 %v310
    %v1264 = vunpack.c.h.b16 %v310
    %v1265 = vunpack.c.l.b16 %v311
    %v1266 = vunpack.c.h.b16 %v311
    %v1267 = vunpack.c.l.b16 %v312
    %v1268 = vunpack.c.h.b16 %v312
    %v1269 = vunpack.c.l.b16 %v313
    %v1270 = vunpack.c.l.b16 %v314
    %v1271 = vunpack.c.h.b16 %v314
    %v1272 = vunpack.c.l.b16 %v315
    %v1273 = vunpack.c.h.b16 %v315
    %v1274 = vunpack.c.l.b16 %v316
    %v1275 = vunpack.c.h.b16 %v316
    %v1276 = vunpack.c.l.b16 %v317
    %v1277 = vunpack.c.l.b16 %v318
    %v1278 = vunpack.c.h.b16 %v318
    %v1279 = vunpack.c.l.b16 %v319
    %v1280 = vunpack.c.h.b16 %v319
    %v1281 = vunpack.c.l.b16 %v320
    %v1282 = vunpack.c.h.b16 %v320
    %v1283 = vunpack.c.l.b16 %v321
    %v1284 = vunpack.c.l.b16 %v322
    %v1285 = vunpack.c.h.b16 %v322
    %v1286 = vunpack.c.l.b16 %v323
    %v1287 = vunpack.c.h.b16 %v323
    %v1288 = vunpack.c.l.b16 %v324
    %v1289 = vunpack.c.h.b16 %v324
    %v1290 = vunpack.c.l.b16 %v325
    %v1291 = vunpack.c.l.b16 %v326
    %v1292 = vunpack.c.h.b16 %v326
    %v1293 = vunpack.c.l.b16 %v327
    %v1294 = vunpack.c.h.b16 %v327
    %v1295 = vunpack.c.l.b16 %v328
    %v1296 = vunpack.c.h.b16 %v328
    %v1297 = vunpack.c.l.b16 %v329
    %v1298 = vunpack.c.l.b16 %v330
    %v1299 = vunpack.c.h.b16 %v330
    %v1300 = vunpack.c.l.b16 %v331
    %v1301 = vunpack.c.h.b16 %v331
    %v1302 = vunpack.c.l.b16 %v332
    %v1303 = vunpack.c.h.b16 %v332
    %v1304 = vunpack.c.l.b16 %v333
    %v1305 = vunpack.c.l.b16 %v334
    %v1306 = vunpack.c.h.b16 %v334
    %v1307 = vunpack.c.l.b16 %v335
    %v1308 = vunpack.c.h.b16 %v335
    %v1309 = vunpack.c.l.b16 %v336
    %v1310 = vunpack.c.h.b16 %v336
    %v1311 = vunpack.c.l.b16 %v337
    %v1312 = vunpack.c.l.b16 %v338
    %v1313 = vunpack.c.h.b16 %v338
    %v1314 = vunpack.c.l.b16 %v339
    %v1315 = vunpack.c.h.b16 %v339
    %v1316 = vunpack.c.l.b16 %v340
    %v1317 = vunpack.c.h.b16 %v340
    %v1318 = vunpack.c.l.b16 %v341
    %v1319 = vunpack.c.l.b16 %v342
    %v1320 = vunpack.c.h.b16 %v342
    %v1321 = vunpack.c.l.b16 %v343
    %v1322 = vunpack.c.h.b16 %v343
    %v1323 = vunpack.c.l.b16 %v344
    %v1324 = vunpack.c.h.b16 %v344
    %v1325 = vunpack.c.l.b16 %v345
    %v1326 = vunpack.c.l.b16 %v346
    %v1327 = vunpack.c.h.b16 %v346
    %v1328 = vunpack.c.l.b16 %v347
    %v1329 = vunpack.c.h.b16 %v347
    %v1330 = vunpack.c.l.b16 %v348
    %v1331 = vunpack.c.h.b16 %v348
    %v1332 = vunpack.c.l.b16 %v349
    %v1333 = vunpack.c.l.b16 %v350
    %v1334 = vunpack.c.h.b16 %v350
    %v1335 = vunpack.c.l.b16 %v351
    %v1336 = vunpack.c.h.b16 %v351
    %v1337 = vunpack.c.l.b16 %v352
    %v1338 = vunpack.c.h.b16 %v352
    %v1339 = vunpack.c.l.b16 %v353
    %v1340 = vunpack.c.l.b16 %v354
    %v1341 = vunpack.c.h.b16 %v354
    %v1342 = vunpack.c.l.b16 %v355
    %v1343 = vunpack.c.h.b16 %v355
    %v1344 = vunpack.c.l.b16 %v356
    %v1345 = vunpack.c.h.b16 %v356
    %v1346 = vunpack.c.l.b16 %v357
    %v1347 = vunpack.c.l.b16 %v358
    %v1348 = vunpack.c.h.b16 %v358
    %v1349 = vunpack.c.l.b16 %v359
    %v1350 = vunpack.c.h.b16 %v359
    %v1351 = vunpack.c.l.b16 %v360
    %v1352 = vunpack.c.h.b16 %v360
    %v1353 = vunpack.c.l.b16 %v361
    %v1354 = vunpack.c.l.b16 %v362
    %v1355 = vunpack.c.h.b16 %v362
    %v1356 = vunpack.c.l.b16 %v363
    %v1357 = vunpack.c.h.b16 %v363
    %v1358 = vunpack.c.l.b16 %v364
    %v1359 = vunpack.c.h.b16 %v364
    %v1360 = vunpack.c.l.b16 %v365
    %v1361 = vunpack.c.l.b16 %v366
    %v1362 = vunpack.c.h.b16 %v366
    %v1363 = vunpack.c.l.b16 %v367
    %v1364 = vunpack.c.h.b16 %v367
    %v1365 = vunpack.c.l.b16 %v368
    %v1366 = vunpack.c.h.b16 %v368
    %v1367 = vunpack.c.l.b16 %v369
    %v1368 = vunpack.c.l.b16 %v370
    %v1369 = vunpack.c.h.b16 %v370
    %v1370 = vunpack.c.l.b16 %v371
    %v1371 = vunpack.c.h.b16 %v371
    %v1372 = vunpack.c.l.b16 %v372
    %v1373 = vunpack.c.h.b16 %v372
    %v1374 = vunpack.c.l.b16 %v373
    %v1375 = vunpack.c.l.b16 %v374
    %v1376 = vunpack.c.h.b16 %v374
    %v1377 = vunpack.c.l.b16 %v375
    %v1378 = vunpack.c.h.b16 %v375
    %v1379 = vunpack.c.l.b16 %v376
    %v1380 = vunpack.c.h.b16 %v376
    %v1381 = vunpack.c.l.b16 %v377
    %v1382 = vunpack.c.l.b16 %v378
    %v1383 = vunpack.c.h.b16 %v378
    %v1384 = vunpack.c.l.b16 %v379
    %v1385 = vunpack.c.h.b16 %v379
    %v1386 = vunpack.c.l.b16 %v380
    %v1387 = vunpack.c.h.b16 %v380
    %v1388 = vunpack.c.l.b16 %v381
    %v1389 = vunpack.c.l.b16 %v382
    %v1390 = vunpack.c.h.b16 %v382
    %v1391 = vunpack.c.l.b16 %v383
    %v1392 = vunpack.c.h.b16 %v383
    %v1393 = vunpack.c.l.b16 %v384
    %v1394 = vunpack.c.h.b16 %v384
    %v1395 = vunpack.c.l.b16 %v385
    %v1396 = vunpack.c.l.b16 %v386
    %v1397 = vunpack.c.h.b16 %v386
    %v1398 = vunpack.c.l.b16 %v387
    %v1399 = vunpack.c.h.b16 %v387
    %v1400 = vunpack.c.l.b16 %v388
    %v1401 = vunpack.c.h.b16 %v388
    %v1402 = vunpack.c.l.b16 %v389
    %v1403 = vunpack.c.l.b16 %v390
    %v1404 = vunpack.c.h.b16 %v390
    %v1405 = vunpack.c.l.b16 %v391
    %v1406 = vunpack.c.h.b16 %v391
    %v1407 = vunpack.c.l.b16 %v392
    %v1408 = vunpack.c.h.b16 %v392
    %v1409 = vunpack.c.l.b16 %v393
    %v1410 = vunpack.c.l.b16 %v394
    %v1411 = vunpack.c.h.b16 %v394
    %v1412 = vunpack.c.l.b16 %v395
    %v1413 = vunpack.c.h.b16 %v395
    %v1414 = vunpack.c.l.b16 %v396
    %v1415 = vunpack.c.h.b16 %v396
    %v1416 = vunpack.c.l.b16 %v397
    %v1417 = vunpack.c.l.b16 %v398
    %v1418 = vunpack.c.h.b16 %v398
    %v1419 = vunpack.c.l.b16 %v399
    %v1420 = vunpack.c.h.b16 %v399
    %v1421 = vunpack.c.l.b16 %v400
    %v1422 = vunpack.c.h.b16 %v400
    %v1423 = vunpack.c.l.b16 %v401
    %v1424 = vunpack.c.l.b16 %v402
    %v1425 = vunpack.c.h.b16 %v402
    %v1426 = vunpack.c.l.b16 %v403
    %v1427 = vunpack.c.h.b16 %v403
    %v1428 = vunpack.c.l.b16 %v404
    %v1429 = vunpack.c.h.b16 %v404
    %v1430 = vunpack.c.l.b16 %v405
    %v1431 = vunpack.c.l.b16 %v406
    %v1432 = vunpack.c.h.b16 %v406
    %v1433 = vunpack.c.l.b16 %v407
    %v1434 = vunpack.c.h.b16 %v407
    %v1435 = vunpack.c.l.b16 %v408
    %v1436 = vunpack.c.h.b16 %v408
    %v1437 = vunpack.c.l.b16 %v409
    %v1438 = vunpack.c.l.b16 %v410
    %v1439 = vunpack.c.h.b16 %v410
    %v1440 = vunpack.c.l.b16 %v411
    %v1441 = vunpack.c.h.b16 %v411
    %v1442 = vunpack.c.l.b16 %v412
    %v1443 = vunpack.c.h.b16 %v412
    %v1444 = vunpack.c.l.b16 %v413
    %v1445 = vunpack.c.l.b16 %v414
    %v1446 = vunpack.c.h.b16 %v414
    %v1447 = vunpack.c.l.b16 %v415
    %v1448 = vunpack.c.h.b16 %v415
    %v1449 = vunpack.c.l.b16 %v416
    %v1450 = vunpack.c.h.b16 %v416
    %v1451 = vunpack.c.l.b16 %v417
    %v1452 = vunpack.c.l.b16 %v418
    %v1453 = vunpack.c.h.b16 %v418
    %v1454 = vunpack.c.l.b16 %v419
    %v1455 = vunpack.c.h.b16 %v419
    %v1456 = vunpack.c.l.b16 %v420
    %v1457 = vunpack.c.h.b16 %v420
    %v1458 = vunpack.c.l.b16 %v421
    %v1459 = vunpack.c.l.b16 %v422
    %v1460 = vunpack.c.h.b16 %v422
    %v1461 = vunpack.c.l.b16 %v423
    %v1462 = vunpack.c.h.b16 %v423
    %v1463 = vunpack.c.l.b16 %v424
    %v1464 = vunpack.c.h.b16 %v424
    %v1465 = vunpack.c.l.b16 %v425
    %v1466 = vunpack.c.l.b16 %v426
    %v1467 = vunpack.c.h.b16 %v426
    %v1468 = vunpack.c.l.b16 %v427
    %v1469 = vunpack.c.h.b16 %v427
    %v1470 = vunpack.c.l.b16 %v428
    %v1471 = vunpack.c.h.b16 %v428
    %v1472 = vunpack.c.l.b16 %v429
    %v1473 = vunpack.c.l.b16 %v430
    %v1474 = vunpack.c.h.b16 %v430
    %v1475 = vunpack.c.l.b16 %v431
    %v1476 = vunpack.c.h.b16 %v431
    %v1477 = vunpack.c.l.b16 %v432
    %v1478 = vunpack.c.h.b16 %v432
    %v1479 = vunpack.c.l.b16 %v433
    %v1480 = vunpack.c.l.b16 %v434
    %v1481 = vunpack.c.h.b16 %v434
    %v1482 = vunpack.c.l.b16 %v435
    %v1483 = vunpack.c.h.b16 %v435
    %v1484 = vunpack.c.l.b16 %v436
    %v1485 = vunpack.c.h.b16 %v436
    %v1486 = vunpack.c.l.b16 %v437
    %v1487 = vunpack.c.l.b16 %v438
    %v1488 = vunpack.c.h.b16 %v438
    %v1489 = vunpack.c.l.b16 %v439
    %v1490 = vunpack.c.h.b16 %v439
    %v1491 = vunpack.c.l.b16 %v440
    %v1492 = vunpack.c.h.b16 %v440
    %v1493 = vunpack.c.l.b16 %v441
    %v1494 = vunpack.c.l.b16 %v442
    %v1495 = vunpack.c.h.b16 %v442
    %v1496 = vunpack.c.l.b16 %v443
    %v1497 = vunpack.c.h.b16 %v443
    %v1498 = vunpack.c.l.b16 %v444
    %v1499 = vunpack.c.h.b16 %v444
    %v1500 = vunpack.c.l.b16 %v445
    %v1501 = vunpack.c.l.b16 %v446
    %v1502 = vunpack.c.h.b16 %v446
    %v1503 = vunpack.c.l.b16 %v447
    %v1504 = vunpack.c.h.b16 %v447
    %v1505 = vunpack.c.l.b16 %v448
    %v1506 = vunpack.c.h.b16 %v448
    %v1507 = vunpack.c.l.b16 %v449
    %v1508 = vunpack.c.l.b16 %v450
    %v1509 = vunpack.c.h.b16 %v450
    %v1510 = vunpack.c.l.b16 %v451
    %v1511 = vunpack.c.h.b16 %v451
    %v1512 = vunpack.c.l.b16 %v452
    %v1513 = vunpack.c.h.b16 %v452
    %v1514 = vunpack.c.l.b16 %v453
    %v1515 = vunpack.c.l.b16 %v454
    %v1516 = vunpack.c.h.b16 %v454
    %v1517 = vunpack.c.l.b16 %v455
    %v1518 = vunpack.c.h.b16 %v455
    %v1519 = vunpack.c.l.b16 %v456
    %v1520 = vunpack.c.h.b16 %v456
    %v1521 = vunpack.c.l.b16 %v457
    %v1522 = vunpack.c.l.b16 %v458
    %v1523 = vunpack.c.h.b16 %v458
    %v1524 = vunpack.c.l.b16 %v459
    %v1525 = vunpack.c.h.b16 %v459
    %v1526 = vunpack.c.l.b16 %v460
    %v1527 = vunpack.c.h.b16 %v460
    %v1528 = vunpack.c.l.b16 %v461
    %v1529 = vunpack.c.l.b16 %v462
    %v1530 = vunpack.c.h.b16 %v462
    %v1531 = vunpack.c.l.b16 %v463
    %v1532 = vunpack.c.h.b16 %v463
    %v1533 = vunpack.c.l.b16 %v464
    %v1534 = vunpack.c.h.b16 %v464
    %v1535 = vunpack.c.l.b16 %v465
    %v1536 = vunpack.c.l.b16 %v466
    %v1537 = vunpack.c.h.b16 %v466
    %v1538 = vunpack.c.l.b16 %v467
    %v1539 = vunpack.c.h.b16 %v467
    %v1540 = vunpack.c.l.b16 %v468
    %v1541 = vunpack.c.h.b16 %v468
    %v1542 = vunpack.c.l.b16 %v469
    %v1543 = vunpack.c.l.b16 %v470
    %v1544 = vunpack.c.h.b16 %v470
    %v1545 = vunpack.c.l.b16 %v471
    %v1546 = vunpack.c.h.b16 %v471
    %v1547 = vunpack.c.l.b16 %v472
    %v1548 = vunpack.c.h.b16 %v472
    %v1549 = vunpack.c.l.b16 %v473
    %v1550 = vunpack.c.l.b16 %v474
    %v1551 = vunpack.c.h.b16 %v474
    %v1552 = vunpack.c.l.b16 %v475
    %v1553 = vunpack.c.h.b16 %v475
    %v1554 = vunpack.c.l.b16 %v476
    %v1555 = vunpack.c.h.b16 %v476
    %v1556 = vunpack.c.l.b16 %v477
    %v1557 = vunpack.c.l.b16 %v478
    %v1558 = vunpack.c.h.b16 %v478
    %v1559 = vunpack.c.l.b16 %v479
    %v1560 = vunpack.c.h.b16 %v479
    %v1561 = vunpack.c.l.b16 %v480
    %v1562 = vunpack.c.h.b16 %v480
    %v1563 = vunpack.c.l.b16 %v481
    %v1564 = vunpack.c.l.b16 %v482
    %v1565 = vunpack.c.h.b16 %v482
    %v1566 = vunpack.c.l.b16 %v483
    %v1567 = vunpack.c.h.b16 %v483
    %v1568 = vunpack.c.l.b16 %v484
    %v1569 = vunpack.c.h.b16 %v484
    %v1570 = vunpack.c.l.b16 %v485
    %v1571 = vunpack.c.l.b16 %v486
    %v1572 = vunpack.c.h.b16 %v486
    %v1573 = vunpack.c.l.b16 %v487
    %v1574 = vunpack.c.h.b16 %v487
    %v1575 = vunpack.c.l.b16 %v488
    %v1576 = vunpack.c.h.b16 %v488
    %v1577 = vunpack.c.l.b16 %v489
    %v1578 = vunpack.c.l.b16 %v490
    %v1579 = vunpack.c.h.b16 %v490
    %v1580 = vunpack.c.l.b16 %v491
    %v1581 = vunpack.c.h.b16 %v491
    %v1582 = vunpack.c.l.b16 %v492
    %v1583 = vunpack.c.h.b16 %v492
    %v1584 = vunpack.c.l.b16 %v493
    %v1585 = vunpack.c.l.b16 %v494
    %v1586 = vunpack.c.h.b16 %v494
    %v1587 = vunpack.c.l.b16 %v495
    %v1588 = vunpack.c.h.b16 %v495
    %v1589 = vunpack.c.l.b16 %v496
    %v1590 = vunpack.c.h.b16 %v496
    %v1591 = vunpack.c.l.b16 %v497
    %v1592 = vunpack.c.l.b16 %v498
    %v1593 = vunpack.c.h.b16 %v498
    %v1594 = vunpack.c.l.b16 %v499
    %v1595 = vunpack.c.h.b16 %v499
    %v1596 = vunpack.c.l.b16 %v500
    %v1597 = vunpack.c.h.b16 %v500
    %v1598 = vunpack.c.l.b16 %v501
    %v1599 = vunpack.c.l.b16 %v502
    %v1600 = vunpack.c.h.b16 %v502
    %v1601 = vunpack.c.l.b16 %v503
    %v1602 = vunpack.c.h.b16 %v503
    %v1603 = vunpack.c.l.b16 %v504
    %v1604 = vunpack.c.h.b16 %v504
    %v1605 = vunpack.c.l.b16 %v505
    %v1606 = vunpack.c.l.b16 %v506
    %v1607 = vunpack.c.h.b16 %v506
    %v1608 = vunpack.c.l.b16 %v507
    %v1609 = vunpack.c.h.b16 %v507
    %v1610 = vunpack.c.l.b16 %v508
    %v1611 = vunpack.c.h.b16 %v508
    %v1612 = vunpack.c.l.b16 %v509
    %v1613 = vunpack.c.l.b16 %v510
    %v1614 = vunpack.c.h.b16 %v510
    %v1615 = vunpack.c.l.b16 %v511
    %v1616 = vunpack.c.h.b16 %v511
    %v1617 = vunpack.c.l.b16 %v512
    %v1618 = vunpack.c.h.b16 %v512
    %v1619 = vunpack.c.l.b16 %v513
    %v1620 = vunpack.c.l.b16 %v514
    %v1621 = vunpack.c.h.b16 %v514
    %v1622 = vunpack.c.l.b16 %v515
    %v1623 = vunpack.c.h.b16 %v515
    %v1624 = vunpack.c.l.b16 %v516
    %v1625 = vunpack.c.h.b16 %v516
    %v1626 = vunpack.c.l.b16 %v517
    %v1627 = vunpack.c.l.b16 %v518
    %v1628 = vunpack.c.h.b16 %v518
    %v1629 = vunpack.c.l.b16 %v519
    %v1630 = vunpack.c.h.b16 %v519
    %v1631 = vunpack.c.l.b16 %v520
    %v1632 = vunpack.c.h.b16 %v520
    %v1633 = vunpack.c.l.b16 %v521
    %v1634 = vunpack.c.l.b16 %v522
    %v1635 = vunpack.c.h.b16 %v522
    %v1636 = vunpack.c.l.b16 %v523
    %v1637 = vunpack.c.h.b16 %v523
    %v1638 = vunpack.c.l.b16 %v524
    %v1639 = vunpack.c.h.b16 %v524
    %v1640 = vunpack.c.l.b16 %v525
    %v1641 = vpack.c.b16 %v962, %v955
    %v1642 = vpack.c.b16 %v963, %v956
    %v1643 = vpack.c.b16 %v964, %v957
    %v1644 = vpack.c.b16 %v965, %v958
    %v1645 = vpack.c.b16 %v966, %v959
    %v1646 = vpack.c.b16 %v967, %v960
    %v1647 = vpack.c.b16 %v968, %v961
    %v1648 = vpack.c.b16 %v976, %v969
    %v1649 = vpack.c.b16 %v977, %v970
    %v1650 = vpack.c.b16 %v978, %v971
    %v1651 = vpack.c.b16 %v979, %v972
    %v1652 = vpack.c.b16 %v980, %v973
    %v1653 = vpack.c.b16 %v981, %v974
    %v1654 = vpack.c.b16 %v982, %v975
    %v1655 = vpack.c.b16 %v990, %v983
    %v1656 = vpack.c.b16 %v991, %v984
    %v1657 = vpack.c.b16 %v992, %v985
    %v1658 = vpack.c.b16 %v993, %v986
    %v1659 = vpack.c.b16 %v994, %v987
    %v1660 = vpack.c.b16 %v995, %v988
    %v1661 = vpack.c.b16 %v996, %v989
    %v1662 = vpack.c.b16 %v1004, %v997
    %v1663 = vpack.c.b16 %v1005, %v998
    %v1664 = vpack.c.b16 %v1006, %v999
    %v1665 = vpack.c.b16 %v1007, %v1000
    %v1666 = vpack.c.b16 %v1008, %v1001
    %v1667 = vpack.c.b16 %v1009, %v1002
    %v1668 = vpack.c.b16 %v1010, %v1003
    %v1669 = vpack.c.b16 %v1018, %v1011
    %v1670 = vpack.c.b16 %v1019, %v1012
    %v1671 = vpack.c.b16 %v1020, %v1013
    %v1672 = vpack.c.b16 %v1021, %v1014
    %v1673 = vpack.c.b16 %v1022, %v1015
    %v1674 = vpack.c.b16 %v1023, %v1016
    %v1675 = vpack.c.b16 %v1024, %v1017
    %v1676 = vpack.c.b16 %v1032, %v1025
    %v1677 = vpack.c.b16 %v1033, %v1026
    %v1678 = vpack.c.b16 %v1034, %v1027
    %v1679 = vpack.c.b16 %v1035, %v1028
    %v1680 = vpack.c.b16 %v1036, %v1029
    %v1681 = vpack.c.b16 %v1037, %v1030
    %v1682 = vpack.c.b16 %v1038, %v1031
    %v1683 = vpack.c.b16 %v1046, %v1039
    %v1684 = vpack.c.b16 %v1047, %v1040
    %v1685 = vpack.c.b16 %v1048, %v1041
    %v1686 = vpack.c.b16 %v1049, %v1042
    %v1687 = vpack.c.b16 %v1050, %v1043
    %v1688 = vpack.c.b16 %v1051, %v1044
    %v1689 = vpack.c.b16 %v1052, %v1045
    %v1690 = vpack.c.b16 %v1060, %v1053
    %v1691 = vpack.c.b16 %v1061, %v1054
    %v1692 = vpack.c.b16 %v1062, %v1055
    %v1693 = vpack.c.b16 %v1063, %v1056
    %v1694 = vpack.c.b16 %v1064, %v1057
    %v1695 = vpack.c.b16 %v1065, %v1058
    %v1696 = vpack.c.b16 %v1066, %v1059
    %v1697 = vpack.c.b16 %v1074, %v1067
    %v1698 = vpack.c.b16 %v1075, %v1068
    %v1699 = vpack.c.b16 %v1076, %v1069
    %v1700 = vpack.c.b16 %v1077, %v1070
    %v1701 = vpack.c.b16 %v1078, %v1071
    %v1702 = vpack.c.b16 %v1079, %v1072
    %v1703 = vpack.c.b16 %v1080, %v1073
    %v1704 = vpack.c.b16 %v1088, %v1081
    %v1705 = vpack.c.b16 %v1089, %v1082
    %v1706 = vpack.c.b16 %v1090, %v1083
    %v1707 = vpack.c.b16 %v1091, %v1084
    %v1708 = vpack.c.b16 %v1092, %v1085
    %v1709 = vpack.c.b16 %v1093, %v1086
    %v1710 = vpack.c.b16 %v1094, %v1087
    %v1711 = vpack.c.b16 %v1102, %v1095
    %v1712 = vpack.c.b16 %v1103, %v1096
    %v1713 = vpack.c.b16 %v1104, %v1097
    %v1714 = vpack.c.b16 %v1105, %v1098
    %v1715 = vpack.c.b16 %v1106, %v1099
    %v1716 = vpack.c.b16 %v1107, %v1100
    %v1717 = vpack.c.b16 %v1108, %v1101
    %v1718 = vpack.c.b16 %v1116, %v1109
    %v1719 = vpack.c.b16 %v1117, %v1110
    %v1720 = vpack.c.b16 %v1118, %v1111
    %v1721 = vpack.c.b16 %v1119, %v1112
    %v1722 = vpack.c.b16 %v1120, %v1113
    %v1723 = vpack.c.b16 %v1121, %v1114
    %v1724 = vpack.c.b16 %v1122, %v1115
    %v1725 = vpack.c.b16 %v1130, %v1123
    %v1726 = vpack.c.b16 %v1131, %v1124
    %v1727 = vpack.c.b16 %v1132, %v1125
    %v1728 = vpack.c.b16 %v1133, %v1126
    %v1729 = vpack.c.b16 %v1134, %v1127
    %v1730 = vpack.c.b16 %v1135, %v1128
    %v1731 = vpack.c.b16 %v1136, %v1129
    %v1732 = vpack.c.b16 %v1144, %v1137
    %v1733 = vpack.c.b16 %v1145, %v1138
    %v1734 = vpack.c.b16 %v1146, %v1139
    %v1735 = vpack.c.b16 %v1147, %v1140
    %v1736 = vpack.c.b16 %v1148, %v1141
    %v1737 = vpack.c.b16 %v1149, %v1142
    %v1738 = vpack.c.b16 %v1150, %v1143
    %v1739 = vpack.c.b16 %v1158, %v1151
    %v1740 = vpack.c.b16 %v1159, %v1152
    %v1741 = vpack.c.b16 %v1160, %v1153
    %v1742 = vpack.c.b16 %v1161, %v1154
    %v1743 = vpack.c.b16 %v1162, %v1155
    %v1744 = vpack.c.b16 %v1163, %v1156
    %v1745 = vpack.c.b16 %v1164, %v1157
    %v1746 = vpack.c.b16 %v1172, %v1165
    %v1747 = vpack.c.b16 %v1173, %v1166
    %v1748 = vpack.c.b16 %v1174, %v1167
    %v1749 = vpack.c.b16 %v1175, %v1168
    %v1750 = vpack.c.b16 %v1176, %v1169
    %v1751 = vpack.c.b16 %v1177, %v1170
    %v1752 = vpack.c.b16 %v1178, %v1171
    %v1753 = vpack.c.b16 %v1186, %v1179
    %v1754 = vpack.c.b16 %v1187, %v1180
    %v1755 = vpack.c.b16 %v1188, %v1181
    %v1756 = vpack.c.b16 %v1189, %v1182
    %v1757 = vpack.c.b16 %v1190, %v1183
    %v1758 = vpack.c.b16 %v1191, %v1184
    %v1759 = vpack.c.b16 %v1192, %v1185
    %v1760 = vpack.c.b16 %v1200, %v1193
    %v1761 = vpack.c.b16 %v1201, %v1194
    %v1762 = vpack.c.b16 %v1202, %v1195
    %v1763 = vpack.c.b16 %v1203, %v1196
    %v1764 = vpack.c.b16 %v1204, %v1197
    %v1765 = vpack.c.b16 %v1205, %v1198
    %v1766 = vpack.c.b16 %v1206, %v1199
    %v1767 = vpack.c.b16 %v1214, %v1207
    %v1768 = vpack.c.b16 %v1215, %v1208
    %v1769 = vpack.c.b16 %v1216, %v1209
    %v1770 = vpack.c.b16 %v1217, %v1210
    %v1771 = vpack.c.b16 %v1218, %v1211
    %v1772 = vpack.c.b16 %v1219, %v1212
    %v1773 = vpack.c.b16 %v1220, %v1213
    %v1774 = vpack.c.b16 %v1228, %v1221
    %v1775 = vpack.c.b16 %v1229, %v1222
    %v1776 = vpack.c.b16 %v1230, %v1223
    %v1777 = vpack.c.b16 %v1231, %v1224
    %v1778 = vpack.c.b16 %v1232, %v1225
    %v1779 = vpack.c.b16 %v1233, %v1226
    %v1780 = vpack.c.b16 %v1234, %v1227
    %v1781 = vpack.c.b16 %v1242, %v1235
    %v1782 = vpack.c.b16 %v1243, %v1236
    %v1783 = vpack.c.b16 %v1244, %v1237
    %v1784 = vpack.c.b16 %v1245, %v1238
    %v1785 = vpack.c.b16 %v1246, %v1239
    %v1786 = vpack.c.b16 %v1247, %v1240
    %v1787 = vpack.c.b16 %v1248, %v1241
    %v1788 = vpack.c.b16 %v1256, %v1249
    %v1789 = vpack.c.b16 %v1257, %v1250
    %v1790 = vpack.c.b16 %v1258, %v1251
    %v1791 = vpack.c.b16 %v1259, %v1252
    %v1792 = vpack.c.b16 %v1260, %v1253
    %v1793 = vpack.c.b16 %v1261, %v1254
    %v1794 = vpack.c.b16 %v1262, %v1255
    %v1795 = vpack.c.b16 %v1270, %v1263
    %v1796 = vpack.c.b16 %v1271, %v1264
    %v1797 = vpack.c.b16 %v1272, %v1265
    %v1798 = vpack.c.b16 %v1273, %v1266
    %v1799 = vpack.c.b16 %v1274, %v1267
    %v1800 = vpack.c.b16 %v1275, %v1268
    %v1801 = vpack.c.b16 %v1276, %v1269
    %v1802 = vpack.c.b16 %v1284, %v1277
    %v1803 = vpack.c.b16 %v1285, %v1278
    %v1804 = vpack.c.b16 %v1286, %v1279
    %v1805 = vpack.c.b16 %v1287, %v1280
    %v1806 = vpack.c.b16 %v1288, %v1281
    %v1807 = vpack.c.b16 %v1289, %v1282
    %v1808 = vpack.c.b16 %v1290, %v1283
    %v1809 = vpack.c.b16 %v1298, %v1291
    %v1810 = vpack.c.b16 %v1299, %v1292
    %v1811 = vpack.c.b16 %v1300, %v1293
    %v1812 = vpack.c.b16 %v1301, %v1294
    %v1813 = vpack.c.b16 %v1302, %v1295
    %v1814 = vpack.c.b16 %v1303, %v1296
    %v1815 = vpack.c.b16 %v1304, %v1297
    %v1816 = vpack.c.b16 %v1312, %v1305
    %v1817 = vpack.c.b16 %v1313, %v1306
    %v1818 = vpack.c.b16 %v1314, %v1307
    %v1819 = vpack.c.b16 %v1315, %v1308
    %v1820 = vpack.c.b16 %v1316, %v1309
    %v1821 = vpack.c.b16 %v1317, %v1310
    %v1822 = vpack.c.b16 %v1318, %v1311
    %v1823 = vpack.c.b16 %v1326, %v1319
    %v1824 = vpack.c.b16 %v1327, %v1320
    %v1825 = vpack.c.b16 %v1328, %v1321
    %v1826 = vpack.c.b16 %v1329, %v1322
    %v1827 = vpack.c.b16 %v1330, %v1323
    %v1828 = vpack.c.b16 %v1331, %v1324
    %v1829 = vpack.c.b16 %v1332, %v1325
    %v1830 = vpack.c.b16 %v1340, %v1333
    %v1831 = vpack.c.b16 %v1341, %v1334
    %v1832 = vpack.c.b16 %v1342, %v1335
    %v1833 = vpack.c.b16 %v1343, %v1336
    %v1834 = vpack.c.b16 %v1344, %v1337
    %v1835 = vpack.c.b16 %v1345, %v1338
    %v1836 = vpack.c.b16 %v1346, %v1339
    %v1837 = vpack.c.b16 %v1354, %v1347
    %v1838 = vpack.c.b16 %v1355, %v1348
    %v1839 = vpack.c.b16 %v1356, %v1349
    %v1840 = vpack.c.b16 %v1357, %v1350
    %v1841 = vpack.c.b16 %v1358, %v1351
    %v1842 = vpack.c.b16 %v1359, %v1352
    %v1843 = vpack.c.b16 %v1360, %v1353
    %v1844 = vpack.c.b16 %v1368, %v1361
    %v1845 = vpack.c.b16 %v1369, %v1362
    %v1846 = vpack.c.b16 %v1370, %v1363
    %v1847 = vpack.c.b16 %v1371, %v1364
    %v1848 = vpack.c.b16 %v1372, %v1365
    %v1849 = vpack.c.b16 %v1373, %v1366
    %v1850 = vpack.c.b16 %v1374, %v1367
    %v1851 = vpack.c.b16 %v1382, %v1375
    %v1852 = vpack.c.b16 %v1383, %v1376
    %v1853 = vpack.c.b16 %v1384, %v1377
    %v1854 = vpack.c.b16 %v1385, %v1378
    %v1855 = vpack.c.b16 %v1386, %v1379
    %v1856 = vpack.c.b16 %v1387, %v1380
    %v1857 = vpack.c.b16 %v1388, %v1381
    %v1858 = vpack.c.b16 %v1396, %v1389
    %v1859 = vpack.c.b16 %v1397, %v1390
    %v1860 = vpack.c.b16 %v1398, %v1391
    %v1861 = vpack.c.b16 %v1399, %v1392
    %v1862 = vpack.c.b16 %v1400, %v1393
    %v1863 = vpack.c.b16 %v1401, %v1394
    %v1864 = vpack.c.b16 %v1402, %v1395
    %v1865 = vpack.c.b16 %v1410, %v1403
    %v1866 = vpack.c.b16 %v1411, %v1404
    %v1867 = vpack.c.b16 %v1412, %v1405
    %v1868 = vpack.c.b16 %v1413, %v1406
    %v1869 = vpack.c.b16 %v1414, %v1407
    %v1870 = vpack.c.b16 %v1415, %v1408
    %v1871 = vpack.c.b16 %v1416, %v1409
    %v1872 = vpack.c.b16 %v1424, %v1417
    %v1873 = vpack.c.b16 %v1425, %v1418
    %v1874 = vpack.c.b16 %v1426, %v1419
    %v1875 = vpack.c.b16 %v1427, %v1420
    %v1876 = vpack.c.b16 %v1428, %v1421
    %v1877 = vpack.c.b16 %v1429, %v1422
    %v1878 = vpack.c.b16 %v1430, %v1423
    %v1879 = vpack.c.b16 %v1438, %v1431
    %v1880 = vpack.c.b16 %v1439, %v1432
    %v1881 = vpack.c.b16 %v1440, %v1433
    %v1882 = vpack.c.b16 %v1441, %v1434
    %v1883 = vpack.c.b16 %v1442, %v1435
    %v1884 = vpack.c.b16 %v1443, %v1436
    %v1885 = vpack.c.b16 %v1444, %v1437
    %v1886 = vpack.c.b16 %v1452, %v1445
    %v1887 = vpack.c.b16 %v1453, %v1446
    %v1888 = vpack.c.b16 %v1454, %v1447
    %v1889 = vpack.c.b16 %v1455, %v1448
    %v1890 = vpack.c.b16 %v1456, %v1449
    %v1891 = vpack.c.b16 %v1457, %v1450
    %v1892 = vpack.c.b16 %v1458, %v1451
    %v1893 = vpack.c.b16 %v1466, %v1459
    %v1894 = vpack.c.b16 %v1467, %v1460
    %v1895 = vpack.c.b16 %v1468, %v1461
    %v1896 = vpack.c.b16 %v1469, %v1462
    %v1897 = vpack.c.b16 %v1470, %v1463
    %v1898 = vpack.c.b16 %v1471, %v1464
    %v1899 = vpack.c.b16 %v1472, %v1465
    %v1900 = vpack.c.b16 %v1480, %v1473
    %v1901 = vpack.c.b16 %v1481, %v1474
    %v1902 = vpack.c.b16 %v1482, %v1475
    %v1903 = vpack.c.b16 %v1483, %v1476
    %v1904 = vpack.c.b16 %v1484, %v1477
    %v1905 = vpack.c.b16 %v1485, %v1478
    %v1906 = vpack.c.b16 %v1486, %v1479
    %v1907 = vpack.c.b16 %v1494, %v1487
    %v1908 = vpack.c.b16 %v1495, %v1488
    %v1909 = vpack.c.b16 %v1496, %v1489
    %v1910 = vpack.c.b16 %v1497, %v1490
    %v1911 = vpack.c.b16 %v1498, %v1491
    %v1912 = vpack.c.b16 %v1499, %v1492
    %v1913 = vpack.c.b16 %v1500, %v1493
    %v1914 = vpack.c.b16 %v1508, %v1501
    %v1915 = vpack.c.b16 %v1509, %v1502
    %v1916 = vpack.c.b16 %v1510, %v1503
    %v1917 = vpack.c.b16 %v1511, %v1504
    %v1918 = vpack.c.b16 %v1512, %v1505
    %v1919 = vpack.c.b16 %v1513, %v1506
    %v1920 = vpack.c.b16 %v1514, %v1507
    %v1921 = vpack.c.b16 %v1522, %v1515
    %v1922 = vpack.c.b16 %v1523, %v1516
    %v1923 = vpack.c.b16 %v1524, %v1517
    %v1924 = vpack.c.b16 %v1525, %v1518
    %v1925 = vpack.c.b16 %v1526, %v1519
    %v1926 = vpack.c.b16 %v1527, %v1520
    %v1927 = vpack.c.b16 %v1528, %v1521
    %v1928 = vpack.c.b16 %v1536, %v1529
    %v1929 = vpack.c.b16 %v1537, %v1530
    %v1930 = vpack.c.b16 %v1538, %v1531
    %v1931 = vpack.c.b16 %v1539, %v1532
    %v1932 = vpack.c.b16 %v1540, %v1533
    %v1933 = vpack.c.b16 %v1541, %v1534
    %v1934 = vpack.c.b16 %v1542, %v1535
    %v1935 = vpack.c.b16 %v1550, %v1543
    %v1936 = vpack.c.b16 %v1551, %v1544
    %v1937 = vpack.c.b16 %v1552, %v1545
    %v1938 = vpack.c.b16 %v1553, %v1546
    %v1939 = vpack.c.b16 %v1554, %v1547
    %v1940 = vpack.c.b16 %v1555, %v1548
    %v1941 = vpack.c.b16 %v1556, %v1549
    %v1942 = vpack.c.b16 %v1564, %v1557
    %v1943 = vpack.c.b16 %v1565, %v1558
    %v1944 = vpack.c.b16 %v1566, %v1559
    %v1945 = vpack.c.b16 %v1567, %v1560
    %v1946 = vpack.c.b16 %v1568, %v1561
    %v1947 = vpack.c.b16 %v1569, %v1562
    %v1948 = vpack.c.b16 %v1570, %v1563
    %v1949 = vpack.c.b16 %v1578, %v1571
    %v1950 = vpack.c.b16 %v1579, %v1572
    %v1951 = vpack.c.b16 %v1580, %v1573
    %v1952 = vpack.c.b16 %v1581, %v1574
    %v1953 = vpack.c.b16 %v1582, %v1575
    %v1954 = vpack.c.b16 %v1583, %v1576
    %v1955 = vpack.c.b16 %v1584, %v1577
    %v1956 = vpack.c.b16 %v1592, %v1585
    %v1957 = vpack.c.b16 %v1593, %v1586
    %v1958 = vpack.c.b16 %v1594, %v1587
    %v1959 = vpack.c.b16 %v1595, %v1588
    %v1960 = vpack.c.b16 %v1596, %v1589
    %v1961 = vpack.c.b16 %v1597, %v1590
    %v1962 = vpack.c.b16 %v1598, %v1591
    %v1963 = vpack.c.b16 %v1606, %v1599
    %v1964 = vpack.c.b16 %v1607, %v1600
    %v1965 = vpack.c.b16 %v1608, %v1601
    %v1966 = vpack.c.b16 %v1609, %v1602
    %v1967 = vpack.c.b16 %v1610, %v1603
    %v1968 = vpack.c.b16 %v1611, %v1604
    %v1969 = vpack.c.b16 %v1612, %v1605
    %v1970 = vpack.c.b16 %v1620, %v1613
    %v1971 = vpack.c.b16 %v1621, %v1614
    %v1972 = vpack.c.b16 %v1622, %v1615
    %v1973 = vpack.c.b16 %v1623, %v1616
    %v1974 = vpack.c.b16 %v1624, %v1617
    %v1975 = vpack.c.b16 %v1625, %v1618
    %v1976 = vpack.c.b16 %v1626, %v1619
    %v1977 = vpack.c.b16 %v1634, %v1627
    %v1978 = vpack.c.b16 %v1635, %v1628
    %v1979 = vpack.c.b16 %v1636, %v1629
    %v1980 = vpack.c.b16 %v1637, %v1630
    %v1981 = vpack.c.b16 %v1638, %v1631
    %v1982 = vpack.c.b16 %v1639, %v1632
    %v1983 = vpack.c.b16 %v1640, %v1633
    %vm2327 = vcmask 130048
    %v2329 = vsel %vm2327, %v133, 0
    %2331 = vmatprep.subr.bf16.mxu0 %v1642
    %2332 = vmatpush1.bf16.msra.mxu0 %v1641
    %2333 = vmatprep.subr.bf16.mxu0 %v1649
    %2334 = vmatpush1.bf16.msra.mxu0 %v1648
    %2335 = vmatprep.subr.bf16.mxu0 %v1656
    %2336 = vmatpush1.bf16.msra.mxu0 %v1655
    %2337 = vmatprep.subr.bf16.mxu0 %v1663
    %2338 = vmatpush1.bf16.msra.mxu0 %v1662
    %2339 = vmatprep.subr.bf16.mxu0 %v1670
    %2340 = vmatpush1.bf16.msra.mxu0 %v1669
    %2341 = vmatprep.subr.bf16.mxu0 %v1677
    %2342 = vmatpush1.bf16.msra.mxu0 %v1676
    %2343 = vmatprep.subr.bf16.mxu0 %v1684
    %2344 = vmatpush1.bf16.msra.mxu0 %v1683
    %2345 = vmatprep.subr.bf16.mxu0 %v1691
    %2346 = vmatpush1.bf16.msra.mxu0 %v1690
    %2347 = vmatprep.subr.bf16.mxu0 %v1698
    %2348 = vmatpush1.bf16.msra.mxu0 %v1697
    %2349 = vmatprep.subr.bf16.mxu0 %v1705
    %2350 = vmatpush1.bf16.msra.mxu0 %v1704
    %2351 = vmatprep.subr.bf16.mxu0 %v1712
    %2352 = vmatpush1.bf16.msra.mxu0 %v1711
    %2353 = vmatprep.subr.bf16.mxu0 %v1719
    %2354 = vmatpush1.bf16.msra.mxu0 %v1718
    %2355 = vmatprep.subr.bf16.mxu0 %v1726
    %2356 = vmatpush1.bf16.msra.mxu0 %v1725
    %2357 = vmatprep.subr.bf16.mxu0 %v1733
    %2358 = vmatpush1.bf16.msra.mxu0 %v1732
    %2359 = vmatprep.subr.bf16.mxu0 %v1740
    %2360 = vmatpush1.bf16.msra.mxu0 %v1739
    %2361 = vmatprep.subr.bf16.mxu0 %v1747
    %2362 = vmatpush1.bf16.msra.mxu0 %v1746
    %2363 = vmatprep.mubr.bf16.mxu0 %v128
    %2364 = vmatmul.mubr.bf16.gmra.mrb[0].mxu0 %v127
    %v2365 = vpop.f32.mrb[0].mxu0
    %v2366 = vadd.f32 %v531, %v2365
    %v2367 = vpop.f32.mrb[0].mxu0
    %v2368 = vadd.f32 %v535, %v2367
    %v2369 = vpop.f32.mrb[0].mxu0
    %v2370 = vpop.f32.mrb[0].mxu0
    %2371 = vdwg.mxu0
    %2372 = vmatprep.subr.bf16.mxu0 %v1754
    %2373 = vmatpush1.bf16.msra.mxu0 %v1753
    %2374 = vmatprep.subr.bf16.mxu0 %v1761
    %2375 = vmatpush1.bf16.msra.mxu0 %v1760
    %2376 = vmatprep.subr.bf16.mxu0 %v1768
    %2377 = vmatpush1.bf16.msra.mxu0 %v1767
    %2378 = vmatprep.subr.bf16.mxu0 %v1775
    %2379 = vmatpush1.bf16.msra.mxu0 %v1774
    %2380 = vmatprep.subr.bf16.mxu0 %v1782
    %2381 = vmatpush1.bf16.msra.mxu0 %v1781
    %2382 = vmatprep.subr.bf16.mxu0 %v1789
    %2383 = vmatpush1.bf16.msra.mxu0 %v1788
    %2384 = vmatprep.subr.bf16.mxu0 %v1796
    %2385 = vmatpush1.bf16.msra.mxu0 %v1795
    %2386 = vmatprep.subr.bf16.mxu0 %v1803
    %2387 = vmatpush1.bf16.msra.mxu0 %v1802
    %2388 = vmatprep.subr.bf16.mxu0 %v1810
    %2389 = vmatpush1.bf16.msra.mxu0 %v1809
    %2390 = vmatprep.subr.bf16.mxu0 %v1817
    %2391 = vmatpush1.bf16.msra.mxu0 %v1816
    %2392 = vmatprep.subr.bf16.mxu0 %v1824
    %2393 = vmatpush1.bf16.msra.mxu0 %v1823
    %2394 = vmatprep.subr.bf16.mxu0 %v1831
    %2395 = vmatpush1.bf16.msra.mxu0 %v1830
    %2396 = vmatprep.subr.bf16.mxu0 %v1838
    %2397 = vmatpush1.bf16.msra.mxu0 %v1837
    %2398 = vmatprep.subr.bf16.mxu0 %v1845
    %2399 = vmatpush1.bf16.msra.mxu0 %v1844
    %2400 = vmatprep.subr.bf16.mxu0 %v1852
    %2401 = vmatpush1.bf16.msra.mxu0 %v1851
    %2402 = vmatprep.subr.bf16.mxu0 %v1859
    %2403 = vmatpush1.bf16.msra.mxu0 %v1858
    %2404 = vmatprep.mubr.bf16.mxu0 %v130
    %2405 = vmatmul.mubr.bf16.gmra.mrb[0].mxu0 %v129
    %v2406 = vpop.f32.mrb[0].mxu0
    %v2407 = vadd.f32 %v2366, %v2406
    %v2408 = vpop.f32.mrb[0].mxu0
    %v2409 = vadd.f32 %v2368, %v2408
    %v2410 = vpop.f32.mrb[0].mxu0
    %v2411 = vpop.f32.mrb[0].mxu0
    %2412 = vdwg.mxu0
    %2413 = vmatprep.subr.bf16.mxu0 %v1866
    %2414 = vmatpush1.bf16.msra.mxu0 %v1865
    %2415 = vmatprep.subr.bf16.mxu0 %v1873
    %2416 = vmatpush1.bf16.msra.mxu0 %v1872
    %2417 = vmatprep.subr.bf16.mxu0 %v1880
    %2418 = vmatpush1.bf16.msra.mxu0 %v1879
    %2419 = vmatprep.subr.bf16.mxu0 %v1887
    %2420 = vmatpush1.bf16.msra.mxu0 %v1886
    %2421 = vmatprep.subr.bf16.mxu0 %v1894
    %2422 = vmatpush1.bf16.msra.mxu0 %v1893
    %2423 = vmatprep.subr.bf16.mxu0 %v1901
    %2424 = vmatpush1.bf16.msra.mxu0 %v1900
    %2425 = vmatprep.subr.bf16.mxu0 %v1908
    %2426 = vmatpush1.bf16.msra.mxu0 %v1907
    %2427 = vmatprep.subr.bf16.mxu0 %v1915
    %2428 = vmatpush1.bf16.msra.mxu0 %v1914
    %2429 = vmatprep.subr.bf16.mxu0 %v1922
    %2430 = vmatpush1.bf16.msra.mxu0 %v1921
    %2431 = vmatprep.subr.bf16.mxu0 %v1929
    %2432 = vmatpush1.bf16.msra.mxu0 %v1928
    %2433 = vmatprep.subr.bf16.mxu0 %v1936
    %2434 = vmatpush1.bf16.msra.mxu0 %v1935
    %2435 = vmatprep.subr.bf16.mxu0 %v1943
    %2436 = vmatpush1.bf16.msra.mxu0 %v1942
    %2437 = vmatprep.subr.bf16.mxu0 %v1950
    %2438 = vmatpush1.bf16.msra.mxu0 %v1949
    %2439 = vmatprep.subr.bf16.mxu0 %v1957
    %2440 = vmatpush1.bf16.msra.mxu0 %v1956
    %2441 = vmatprep.subr.bf16.mxu0 %v1964
    %2442 = vmatpush1.bf16.msra.mxu0 %v1963
    %2443 = vmatprep.subr.bf16.mxu0 %v1971
    %2444 = vmatpush1.bf16.msra.mxu0 %v1970
    %2445 = vmatprep.mubr.bf16.mxu0 %v132
    %2446 = vmatmul.mubr.bf16.gmra.mrb[0].mxu0 %v131
    %v2447 = vpop.f32.mrb[0].mxu0
    %v2448 = vadd.f32 %v2407, %v2447
    %v2449 = vpop.f32.mrb[0].mxu0
    %v2450 = vadd.f32 %v2409, %v2449
    %v2451 = vpop.f32.mrb[0].mxu0
    %v2452 = vpop.f32.mrb[0].mxu0
    %2453 = vdwg.mxu0
    %2454 = vmatprep.subr.bf16.mxu0 %v1978
    %2455 = vmatpush1.bf16.msra.mxu0 %v1977
    %2456 = vmatprep.subr.bf16.mxu0 0
    %2457 = vmatpush1.bf16.msra.mxu0 0
    %2458 = vmatprep.subr.bf16.mxu0 0
    %2459 = vmatpush1.bf16.msra.mxu0 0
    %2460 = vmatprep.subr.bf16.mxu0 0
    %2461 = vmatpush1.bf16.msra.mxu0 0
    %2462 = vmatprep.subr.bf16.mxu0 0
    %2463 = vmatpush1.bf16.msra.mxu0 0
    %2464 = vmatprep.subr.bf16.mxu0 0
    %2465 = vmatpush1.bf16.msra.mxu0 0
    %2466 = vmatprep.subr.bf16.mxu0 0
    %2467 = vmatpush1.bf16.msra.mxu0 0
    %2468 = vmatprep.subr.bf16.mxu0 0
    %2469 = vmatpush1.bf16.msra.mxu0 0
    %2470 = vmatprep.subr.bf16.mxu0 0
    %2471 = vmatpush1.bf16.msra.mxu0 0
    %2472 = vmatprep.subr.bf16.mxu0 0
    %2473 = vmatpush1.bf16.msra.mxu0 0
    %2474 = vmatprep.subr.bf16.mxu0 0
    %2475 = vmatpush1.bf16.msra.mxu0 0
    %2476 = vmatprep.subr.bf16.mxu0 0
    %2477 = vmatpush1.bf16.msra.mxu0 0
    %2478 = vmatprep.subr.bf16.mxu0 0
    %2479 = vmatpush1.bf16.msra.mxu0 0
    %2480 = vmatprep.subr.bf16.mxu0 0
    %2481 = vmatpush1.bf16.msra.mxu0 0
    %2482 = vmatprep.subr.bf16.mxu0 0
    %2483 = vmatpush1.bf16.msra.mxu0 0
    %2484 = vmatprep.subr.bf16.mxu0 0
    %2485 = vmatpush1.bf16.msra.mxu0 0
    %2486 = vmatprep.mubr.bf16.mxu0 0
    %2487 = vmatmul.mubr.bf16.gmra.mrb[0].mxu0 %v2329
    %v2488 = vpop.f32.mrb[0].mxu0
    %v2489 = vadd.f32 %v2448, %v2488
    %v2490 = vpop.f32.mrb[0].mxu0
    %v2491 = vadd.f32 %v2450, %v2490
    %v2492 = vpop.f32.mrb[0].mxu0
    %v2493 = vpop.f32.mrb[0].mxu0
    %2494 = vdwg.mxu0
    %2495 = vmatprep.subr.bf16.mxu0 %v1644
    %2496 = vmatpush1.bf16.msra.mxu0 %v1643
    %2497 = vmatprep.subr.bf16.mxu0 %v1651
    %2498 = vmatpush1.bf16.msra.mxu0 %v1650
    %2499 = vmatprep.subr.bf16.mxu0 %v1658
    %2500 = vmatpush1.bf16.msra.mxu0 %v1657
    %2501 = vmatprep.subr.bf16.mxu0 %v1665
    %2502 = vmatpush1.bf16.msra.mxu0 %v1664
    %2503 = vmatprep.subr.bf16.mxu0 %v1672
    %2504 = vmatpush1.bf16.msra.mxu0 %v1671
    %2505 = vmatprep.subr.bf16.mxu0 %v1679
    %2506 = vmatpush1.bf16.msra.mxu0 %v1678
    %2507 = vmatprep.subr.bf16.mxu0 %v1686
    %2508 = vmatpush1.bf16.msra.mxu0 %v1685
    %2509 = vmatprep.subr.bf16.mxu0 %v1693
    %2510 = vmatpush1.bf16.msra.mxu0 %v1692
    %2511 = vmatprep.subr.bf16.mxu0 %v1700
    %2512 = vmatpush1.bf16.msra.mxu0 %v1699
    %2513 = vmatprep.subr.bf16.mxu0 %v1707
    %2514 = vmatpush1.bf16.msra.mxu0 %v1706
    %2515 = vmatprep.subr.bf16.mxu0 %v1714
    %2516 = vmatpush1.bf16.msra.mxu0 %v1713
    %2517 = vmatprep.subr.bf16.mxu0 %v1721
    %2518 = vmatpush1.bf16.msra.mxu0 %v1720
    %2519 = vmatprep.subr.bf16.mxu0 %v1728
    %2520 = vmatpush1.bf16.msra.mxu0 %v1727
    %2521 = vmatprep.subr.bf16.mxu0 %v1735
    %2522 = vmatpush1.bf16.msra.mxu0 %v1734
    %2523 = vmatprep.subr.bf16.mxu0 %v1742
    %2524 = vmatpush1.bf16.msra.mxu0 %v1741
    %2525 = vmatprep.subr.bf16.mxu0 %v1749
    %2526 = vmatpush1.bf16.msra.mxu0 %v1748
    %2527 = vmatprep.mubr.bf16.mxu0 %v128
    %2528 = vmatmul.mubr.bf16.gmra.mrb[0].mxu0 %v127
    %v2529 = vpop.f32.mrb[0].mxu0
    %v2530 = vadd.f32 %v539, %v2529
    %v2531 = vpop.f32.mrb[0].mxu0
    %v2532 = vadd.f32 %v543, %v2531
    %v2533 = vpop.f32.mrb[0].mxu0
    %v2534 = vpop.f32.mrb[0].mxu0
    %2535 = vdwg.mxu0
    %2536 = vmatprep.subr.bf16.mxu0 %v1756
    %2537 = vmatpush1.bf16.msra.mxu0 %v1755
    %2538 = vmatprep.subr.bf16.mxu0 %v1763
    %2539 = vmatpush1.bf16.msra.mxu0 %v1762
    %2540 = vmatprep.subr.bf16.mxu0 %v1770
    %2541 = vmatpush1.bf16.msra.mxu0 %v1769
    %2542 = vmatprep.subr.bf16.mxu0 %v1777
    %2543 = vmatpush1.bf16.msra.mxu0 %v1776
    %2544 = vmatprep.subr.bf16.mxu0 %v1784
    %2545 = vmatpush1.bf16.msra.mxu0 %v1783
    %2546 = vmatprep.subr.bf16.mxu0 %v1791
    %2547 = vmatpush1.bf16.msra.mxu0 %v1790
    %2548 = vmatprep.subr.bf16.mxu0 %v1798
    %2549 = vmatpush1.bf16.msra.mxu0 %v1797
    %2550 = vmatprep.subr.bf16.mxu0 %v1805
    %2551 = vmatpush1.bf16.msra.mxu0 %v1804
    %2552 = vmatprep.subr.bf16.mxu0 %v1812
    %2553 = vmatpush1.bf16.msra.mxu0 %v1811
    %2554 = vmatprep.subr.bf16.mxu0 %v1819
    %2555 = vmatpush1.bf16.msra.mxu0 %v1818
    %2556 = vmatprep.subr.bf16.mxu0 %v1826
    %2557 = vmatpush1.bf16.msra.mxu0 %v1825
    %2558 = vmatprep.subr.bf16.mxu0 %v1833
    %2559 = vmatpush1.bf16.msra.mxu0 %v1832
    %2560 = vmatprep.subr.bf16.mxu0 %v1840
    %2561 = vmatpush1.bf16.msra.mxu0 %v1839
    %2562 = vmatprep.subr.bf16.mxu0 %v1847
    %2563 = vmatpush1.bf16.msra.mxu0 %v1846
    %2564 = vmatprep.subr.bf16.mxu0 %v1854
    %2565 = vmatpush1.bf16.msra.mxu0 %v1853
    %2566 = vmatprep.subr.bf16.mxu0 %v1861
    %2567 = vmatpush1.bf16.msra.mxu0 %v1860
    %2568 = vmatprep.mubr.bf16.mxu0 %v130
    %2569 = vmatmul.mubr.bf16.gmra.mrb[0].mxu0 %v129
    %v2570 = vpop.f32.mrb[0].mxu0
    %v2571 = vadd.f32 %v2530, %v2570
    %v2572 = vpop.f32.mrb[0].mxu0
    %v2573 = vadd.f32 %v2532, %v2572
    %v2574 = vpop.f32.mrb[0].mxu0
    %v2575 = vpop.f32.mrb[0].mxu0
    %2576 = vdwg.mxu0
    %2577 = vmatprep.subr.bf16.mxu0 %v1868
    %2578 = vmatpush1.bf16.msra.mxu0 %v1867
    %2579 = vmatprep.subr.bf16.mxu0 %v1875
    %2580 = vmatpush1.bf16.msra.mxu0 %v1874
    %2581 = vmatprep.subr.bf16.mxu0 %v1882
    %2582 = vmatpush1.bf16.msra.mxu0 %v1881
    %2583 = vmatprep.subr.bf16.mxu0 %v1889
    %2584 = vmatpush1.bf16.msra.mxu0 %v1888
    %2585 = vmatprep.subr.bf16.mxu0 %v1896
    %2586 = vmatpush1.bf16.msra.mxu0 %v1895
    %2587 = vmatprep.subr.bf16.mxu0 %v1903
    %2588 = vmatpush1.bf16.msra.mxu0 %v1902
    %2589 = vmatprep.subr.bf16.mxu0 %v1910
    %2590 = vmatpush1.bf16.msra.mxu0 %v1909
    %2591 = vmatprep.subr.bf16.mxu0 %v1917
    %2592 = vmatpush1.bf16.msra.mxu0 %v1916
    %2593 = vmatprep.subr.bf16.mxu0 %v1924
    %2594 = vmatpush1.bf16.msra.mxu0 %v1923
    %2595 = vmatprep.subr.bf16.mxu0 %v1931
    %2596 = vmatpush1.bf16.msra.mxu0 %v1930
    %2597 = vmatprep.subr.bf16.mxu0 %v1938
    %2598 = vmatpush1.bf16.msra.mxu0 %v1937
    %2599 = vmatprep.subr.bf16.mxu0 %v1945
    %2600 = vmatpush1.bf16.msra.mxu0 %v1944
    %2601 = vmatprep.subr.bf16.mxu0 %v1952
    %2602 = vmatpush1.bf16.msra.mxu0 %v1951
    %2603 = vmatprep.subr.bf16.mxu0 %v1959
    %2604 = vmatpush1.bf16.msra.mxu0 %v1958
    %2605 = vmatprep.subr.bf16.mxu0 %v1966
    %2606 = vmatpush1.bf16.msra.mxu0 %v1965
    %2607 = vmatprep.subr.bf16.mxu0 %v1973
    %2608 = vmatpush1.bf16.msra.mxu0 %v1972
    %2609 = vmatprep.mubr.bf16.mxu0 %v132
    %2610 = vmatmul.mubr.bf16.gmra.mrb[0].mxu0 %v131
    %v2611 = vpop.f32.mrb[0].mxu0
    %v2612 = vadd.f32 %v2571, %v2611
    %v2613 = vpop.f32.mrb[0].mxu0
    %v2614 = vadd.f32 %v2573, %v2613
    %v2615 = vpop.f32.mrb[0].mxu0
    %v2616 = vpop.f32.mrb[0].mxu0
    %2617 = vdwg.mxu0
    %2618 = vmatprep.subr.bf16.mxu0 %v1980
    %2619 = vmatpush1.bf16.msra.mxu0 %v1979
    %2620 = vmatprep.subr.bf16.mxu0 0
    %2621 = vmatpush1.bf16.msra.mxu0 0
    %2622 = vmatprep.subr.bf16.mxu0 0
    %2623 = vmatpush1.bf16.msra.mxu0 0
    %2624 = vmatprep.subr.bf16.mxu0 0
    %2625 = vmatpush1.bf16.msra.mxu0 0
    %2626 = vmatprep.subr.bf16.mxu0 0
    %2627 = vmatpush1.bf16.msra.mxu0 0
    %2628 = vmatprep.subr.bf16.mxu0 0
    %2629 = vmatpush1.bf16.msra.mxu0 0
    %2630 = vmatprep.subr.bf16.mxu0 0
    %2631 = vmatpush1.bf16.msra.mxu0 0
    %2632 = vmatprep.subr.bf16.mxu0 0
    %2633 = vmatpush1.bf16.msra.mxu0 0
    %2634 = vmatprep.subr.bf16.mxu0 0
    %2635 = vmatpush1.bf16.msra.mxu0 0
    %2636 = vmatprep.subr.bf16.mxu0 0
    %2637 = vmatpush1.bf16.msra.mxu0 0
    %2638 = vmatprep.subr.bf16.mxu0 0
    %2639 = vmatpush1.bf16.msra.mxu0 0
    %2640 = vmatprep.subr.bf16.mxu0 0
    %2641 = vmatpush1.bf16.msra.mxu0 0
    %2642 = vmatprep.subr.bf16.mxu0 0
    %2643 = vmatpush1.bf16.msra.mxu0 0
    %2644 = vmatprep.subr.bf16.mxu0 0
    %2645 = vmatpush1.bf16.msra.mxu0 0
    %2646 = vmatprep.subr.bf16.mxu0 0
    %2647 = vmatpush1.bf16.msra.mxu0 0
    %2648 = vmatprep.subr.bf16.mxu0 0
    %2649 = vmatpush1.bf16.msra.mxu0 0
    %2650 = vmatprep.mubr.bf16.mxu0 0
    %2651 = vmatmul.mubr.bf16.gmra.mrb[0].mxu0 %v2329
    %v2652 = vpop.f32.mrb[0].mxu0
    %v2653 = vadd.f32 %v2612, %v2652
    %v2654 = vpop.f32.mrb[0].mxu0
    %v2655 = vadd.f32 %v2614, %v2654
    %v2656 = vpop.f32.mrb[0].mxu0
    %v2657 = vpop.f32.mrb[0].mxu0
    %2658 = vdwg.mxu0
    %2659 = vmatprep.subr.bf16.mxu0 %v1646
    %2660 = vmatpush1.bf16.msra.mxu0 %v1645
    %2661 = vmatprep.subr.bf16.mxu0 %v1653
    %2662 = vmatpush1.bf16.msra.mxu0 %v1652
    %2663 = vmatprep.subr.bf16.mxu0 %v1660
    %2664 = vmatpush1.bf16.msra.mxu0 %v1659
    %2665 = vmatprep.subr.bf16.mxu0 %v1667
    %2666 = vmatpush1.bf16.msra.mxu0 %v1666
    %2667 = vmatprep.subr.bf16.mxu0 %v1674
    %2668 = vmatpush1.bf16.msra.mxu0 %v1673
    %2669 = vmatprep.subr.bf16.mxu0 %v1681
    %2670 = vmatpush1.bf16.msra.mxu0 %v1680
    %2671 = vmatprep.subr.bf16.mxu0 %v1688
    %2672 = vmatpush1.bf16.msra.mxu0 %v1687
    %2673 = vmatprep.subr.bf16.mxu0 %v1695
    %2674 = vmatpush1.bf16.msra.mxu0 %v1694
    %2675 = vmatprep.subr.bf16.mxu0 %v1702
    %2676 = vmatpush1.bf16.msra.mxu0 %v1701
    %2677 = vmatprep.subr.bf16.mxu0 %v1709
    %2678 = vmatpush1.bf16.msra.mxu0 %v1708
    %2679 = vmatprep.subr.bf16.mxu0 %v1716
    %2680 = vmatpush1.bf16.msra.mxu0 %v1715
    %2681 = vmatprep.subr.bf16.mxu0 %v1723
    %2682 = vmatpush1.bf16.msra.mxu0 %v1722
    %2683 = vmatprep.subr.bf16.mxu0 %v1730
    %2684 = vmatpush1.bf16.msra.mxu0 %v1729
    %2685 = vmatprep.subr.bf16.mxu0 %v1737
    %2686 = vmatpush1.bf16.msra.mxu0 %v1736
    %2687 = vmatprep.subr.bf16.mxu0 %v1744
    %2688 = vmatpush1.bf16.msra.mxu0 %v1743
    %2689 = vmatprep.subr.bf16.mxu0 %v1751
    %2690 = vmatpush1.bf16.msra.mxu0 %v1750
    %2691 = vmatprep.mubr.bf16.mxu0 %v128
    %2692 = vmatmul.mubr.bf16.gmra.mrb[0].mxu0 %v127
    %v2693 = vpop.f32.mrb[0].mxu0
    %v2694 = vadd.f32 %v547, %v2693
    %v2695 = vpop.f32.mrb[0].mxu0
    %v2696 = vadd.f32 %v551, %v2695
    %v2697 = vpop.f32.mrb[0].mxu0
    %v2698 = vpop.f32.mrb[0].mxu0
    %2699 = vdwg.mxu0
    %2700 = vmatprep.subr.bf16.mxu0 %v1758
    %2701 = vmatpush1.bf16.msra.mxu0 %v1757
    %2702 = vmatprep.subr.bf16.mxu0 %v1765
    %2703 = vmatpush1.bf16.msra.mxu0 %v1764
    %2704 = vmatprep.subr.bf16.mxu0 %v1772
    %2705 = vmatpush1.bf16.msra.mxu0 %v1771
    %2706 = vmatprep.subr.bf16.mxu0 %v1779
    %2707 = vmatpush1.bf16.msra.mxu0 %v1778
    %2708 = vmatprep.subr.bf16.mxu0 %v1786
    %2709 = vmatpush1.bf16.msra.mxu0 %v1785
    %2710 = vmatprep.subr.bf16.mxu0 %v1793
    %2711 = vmatpush1.bf16.msra.mxu0 %v1792
    %2712 = vmatprep.subr.bf16.mxu0 %v1800
    %2713 = vmatpush1.bf16.msra.mxu0 %v1799
    %2714 = vmatprep.subr.bf16.mxu0 %v1807
    %2715 = vmatpush1.bf16.msra.mxu0 %v1806
    %2716 = vmatprep.subr.bf16.mxu0 %v1814
    %2717 = vmatpush1.bf16.msra.mxu0 %v1813
    %2718 = vmatprep.subr.bf16.mxu0 %v1821
    %2719 = vmatpush1.bf16.msra.mxu0 %v1820
    %2720 = vmatprep.subr.bf16.mxu0 %v1828
    %2721 = vmatpush1.bf16.msra.mxu0 %v1827
    %2722 = vmatprep.subr.bf16.mxu0 %v1835
    %2723 = vmatpush1.bf16.msra.mxu0 %v1834
    %2724 = vmatprep.subr.bf16.mxu0 %v1842
    %2725 = vmatpush1.bf16.msra.mxu0 %v1841
    %2726 = vmatprep.subr.bf16.mxu0 %v1849
    %2727 = vmatpush1.bf16.msra.mxu0 %v1848
    %2728 = vmatprep.subr.bf16.mxu0 %v1856
    %2729 = vmatpush1.bf16.msra.mxu0 %v1855
    %2730 = vmatprep.subr.bf16.mxu0 %v1863
    %2731 = vmatpush1.bf16.msra.mxu0 %v1862
    %2732 = vmatprep.mubr.bf16.mxu0 %v130
    %2733 = vmatmul.mubr.bf16.gmra.mrb[0].mxu0 %v129
    %v2734 = vpop.f32.mrb[0].mxu0
    %v2735 = vadd.f32 %v2694, %v2734
    %v2736 = vpop.f32.mrb[0].mxu0
    %v2737 = vadd.f32 %v2696, %v2736
    %v2738 = vpop.f32.mrb[0].mxu0
    %v2739 = vpop.f32.mrb[0].mxu0
    %2740 = vdwg.mxu0
    %2741 = vmatprep.subr.bf16.mxu0 %v1870
    %2742 = vmatpush1.bf16.msra.mxu0 %v1869
    %2743 = vmatprep.subr.bf16.mxu0 %v1877
    %2744 = vmatpush1.bf16.msra.mxu0 %v1876
    %2745 = vmatprep.subr.bf16.mxu0 %v1884
    %2746 = vmatpush1.bf16.msra.mxu0 %v1883
    %2747 = vmatprep.subr.bf16.mxu0 %v1891
    %2748 = vmatpush1.bf16.msra.mxu0 %v1890
    %2749 = vmatprep.subr.bf16.mxu0 %v1898
    %2750 = vmatpush1.bf16.msra.mxu0 %v1897
    %2751 = vmatprep.subr.bf16.mxu0 %v1905
    %2752 = vmatpush1.bf16.msra.mxu0 %v1904
    %2753 = vmatprep.subr.bf16.mxu0 %v1912
    %2754 = vmatpush1.bf16.msra.mxu0 %v1911
    %2755 = vmatprep.subr.bf16.mxu0 %v1919
    %2756 = vmatpush1.bf16.msra.mxu0 %v1918
    %2757 = vmatprep.subr.bf16.mxu0 %v1926
    %2758 = vmatpush1.bf16.msra.mxu0 %v1925
    %2759 = vmatprep.subr.bf16.mxu0 %v1933
    %2760 = vmatpush1.bf16.msra.mxu0 %v1932
    %2761 = vmatprep.subr.bf16.mxu0 %v1940
    %2762 = vmatpush1.bf16.msra.mxu0 %v1939
    %2763 = vmatprep.subr.bf16.mxu0 %v1947
    %2764 = vmatpush1.bf16.msra.mxu0 %v1946
    %2765 = vmatprep.subr.bf16.mxu0 %v1954
    %2766 = vmatpush1.bf16.msra.mxu0 %v1953
    %2767 = vmatprep.subr.bf16.mxu0 %v1961
    %2768 = vmatpush1.bf16.msra.mxu0 %v1960
    %2769 = vmatprep.subr.bf16.mxu0 %v1968
    %2770 = vmatpush1.bf16.msra.mxu0 %v1967
    %2771 = vmatprep.subr.bf16.mxu0 %v1975
    %2772 = vmatpush1.bf16.msra.mxu0 %v1974
    %2773 = vmatprep.mubr.bf16.mxu0 %v132
    %2774 = vmatmul.mubr.bf16.gmra.mrb[0].mxu0 %v131
    %v2775 = vpop.f32.mrb[0].mxu0
    %v2776 = vadd.f32 %v2735, %v2775
    %v2777 = vpop.f32.mrb[0].mxu0
    %v2778 = vadd.f32 %v2737, %v2777
    %v2779 = vpop.f32.mrb[0].mxu0
    %v2780 = vpop.f32.mrb[0].mxu0
    %2781 = vdwg.mxu0
    %2782 = vmatprep.subr.bf16.mxu0 %v1982
    %2783 = vmatpush1.bf16.msra.mxu0 %v1981
    %2784 = vmatprep.subr.bf16.mxu0 0
    %2785 = vmatpush1.bf16.msra.mxu0 0
    %2786 = vmatprep.subr.bf16.mxu0 0
    %2787 = vmatpush1.bf16.msra.mxu0 0
    %2788 = vmatprep.subr.bf16.mxu0 0
    %2789 = vmatpush1.bf16.msra.mxu0 0
    %2790 = vmatprep.subr.bf16.mxu0 0
    %2791 = vmatpush1.bf16.msra.mxu0 0
    %2792 = vmatprep.subr.bf16.mxu0 0
    %2793 = vmatpush1.bf16.msra.mxu0 0
    %2794 = vmatprep.subr.bf16.mxu0 0
    %2795 = vmatpush1.bf16.msra.mxu0 0
    %2796 = vmatprep.subr.bf16.mxu0 0
    %2797 = vmatpush1.bf16.msra.mxu0 0
    %2798 = vmatprep.subr.bf16.mxu0 0
    %2799 = vmatpush1.bf16.msra.mxu0 0
    %2800 = vmatprep.subr.bf16.mxu0 0
    %2801 = vmatpush1.bf16.msra.mxu0 0
    %2802 = vmatprep.subr.bf16.mxu0 0
    %2803 = vmatpush1.bf16.msra.mxu0 0
    %2804 = vmatprep.subr.bf16.mxu0 0
    %2805 = vmatpush1.bf16.msra.mxu0 0
    %2806 = vmatprep.subr.bf16.mxu0 0
    %2807 = vmatpush1.bf16.msra.mxu0 0
    %2808 = vmatprep.subr.bf16.mxu0 0
    %2809 = vmatpush1.bf16.msra.mxu0 0
    %2810 = vmatprep.subr.bf16.mxu0 0
    %2811 = vmatpush1.bf16.msra.mxu0 0
    %2812 = vmatprep.subr.bf16.mxu0 0
    %2813 = vmatpush1.bf16.msra.mxu0 0
    %2814 = vmatprep.mubr.bf16.mxu0 0
    %2815 = vmatmul.mubr.bf16.gmra.mrb[0].mxu0 %v2329
    %v2816 = vpop.f32.mrb[0].mxu0
    %v2817 = vadd.f32 %v2776, %v2816
    %v2818 = vpop.f32.mrb[0].mxu0
    %v2819 = vadd.f32 %v2778, %v2818
    %v2820 = vpop.f32.mrb[0].mxu0
    %v2821 = vpop.f32.mrb[0].mxu0
    %2822 = vdwg.mxu0
    %2823 = vmatprep.subr.bf16.mxu0 0
    %2824 = vmatpush1.bf16.msra.mxu0 %v1647
    %2825 = vmatprep.subr.bf16.mxu0 0
    %2826 = vmatpush1.bf16.msra.mxu0 %v1654
    %2827 = vmatprep.subr.bf16.mxu0 0
    %2828 = vmatpush1.bf16.msra.mxu0 %v1661
    %2829 = vmatprep.subr.bf16.mxu0 0
    %2830 = vmatpush1.bf16.msra.mxu0 %v1668
    %2831 = vmatprep.subr.bf16.mxu0 0
    %2832 = vmatpush1.bf16.msra.mxu0 %v1675
    %2833 = vmatprep.subr.bf16.mxu0 0
    %2834 = vmatpush1.bf16.msra.mxu0 %v1682
    %2835 = vmatprep.subr.bf16.mxu0 0
    %2836 = vmatpush1.bf16.msra.mxu0 %v1689
    %2837 = vmatprep.subr.bf16.mxu0 0
    %2838 = vmatpush1.bf16.msra.mxu0 %v1696
    %2839 = vmatprep.subr.bf16.mxu0 0
    %2840 = vmatpush1.bf16.msra.mxu0 %v1703
    %2841 = vmatprep.subr.bf16.mxu0 0
    %2842 = vmatpush1.bf16.msra.mxu0 %v1710
    %2843 = vmatprep.subr.bf16.mxu0 0
    %2844 = vmatpush1.bf16.msra.mxu0 %v1717
    %2845 = vmatprep.subr.bf16.mxu0 0
    %2846 = vmatpush1.bf16.msra.mxu0 %v1724
    %2847 = vmatprep.subr.bf16.mxu0 0
    %2848 = vmatpush1.bf16.msra.mxu0 %v1731
    %2849 = vmatprep.subr.bf16.mxu0 0
    %2850 = vmatpush1.bf16.msra.mxu0 %v1738
    %2851 = vmatprep.subr.bf16.mxu0 0
    %2852 = vmatpush1.bf16.msra.mxu0 %v1745
    %2853 = vmatprep.subr.bf16.mxu0 0
    %2854 = vmatpush1.bf16.msra.mxu0 %v1752
    %2855 = vmatprep.mubr.bf16.mxu0 %v128
    %2856 = vmatmul.mubr.bf16.gmra.mrb[0].mxu0 %v127
    %v2857 = vpop.f32.mrb[0].mxu0
    %v2858 = vadd.f32 %v555, %v2857
    %v2859 = vpop.f32.mrb[0].mxu0
    %v2860 = vpop.f32.mrb[0].mxu0
    %v2861 = vpop.f32.mrb[0].mxu0
    %2862 = vdwg.mxu0
    %2863 = vmatprep.subr.bf16.mxu0 0
    %2864 = vmatpush1.bf16.msra.mxu0 %v1759
    %2865 = vmatprep.subr.bf16.mxu0 0
    %2866 = vmatpush1.bf16.msra.mxu0 %v1766
    %2867 = vmatprep.subr.bf16.mxu0 0
    %2868 = vmatpush1.bf16.msra.mxu0 %v1773
    %2869 = vmatprep.subr.bf16.mxu0 0
    %2870 = vmatpush1.bf16.msra.mxu0 %v1780
    %2871 = vmatprep.subr.bf16.mxu0 0
    %2872 = vmatpush1.bf16.msra.mxu0 %v1787
    %2873 = vmatprep.subr.bf16.mxu0 0
    %2874 = vmatpush1.bf16.msra.mxu0 %v1794
    %2875 = vmatprep.subr.bf16.mxu0 0
    %2876 = vmatpush1.bf16.msra.mxu0 %v1801
    %2877 = vmatprep.subr.bf16.mxu0 0
    %2878 = vmatpush1.bf16.msra.mxu0 %v1808
    %2879 = vmatprep.subr.bf16.mxu0 0
    %2880 = vmatpush1.bf16.msra.mxu0 %v1815
    %2881 = vmatprep.subr.bf16.mxu0 0
    %2882 = vmatpush1.bf16.msra.mxu0 %v1822
    %2883 = vmatprep.subr.bf16.mxu0 0
    %2884 = vmatpush1.bf16.msra.mxu0 %v1829
    %2885 = vmatprep.subr.bf16.mxu0 0
    %2886 = vmatpush1.bf16.msra.mxu0 %v1836
    %2887 = vmatprep.subr.bf16.mxu0 0
    %2888 = vmatpush1.bf16.msra.mxu0 %v1843
    %2889 = vmatprep.subr.bf16.mxu0 0
    %2890 = vmatpush1.bf16.msra.mxu0 %v1850
    %2891 = vmatprep.subr.bf16.mxu0 0
    %2892 = vmatpush1.bf16.msra.mxu0 %v1857
    %2893 = vmatprep.subr.bf16.mxu0 0
    %2894 = vmatpush1.bf16.msra.mxu0 %v1864
    %2895 = vmatprep.mubr.bf16.mxu0 %v130
    %2896 = vmatmul.mubr.bf16.gmra.mrb[0].mxu0 %v129
    %v2897 = vpop.f32.mrb[0].mxu0
    %v2898 = vadd.f32 %v2858, %v2897
    %v2899 = vpop.f32.mrb[0].mxu0
    %v2900 = vpop.f32.mrb[0].mxu0
    %v2901 = vpop.f32.mrb[0].mxu0
    %2902 = vdwg.mxu0
    %2903 = vmatprep.subr.bf16.mxu0 0
    %2904 = vmatpush1.bf16.msra.mxu0 %v1871
    %2905 = vmatprep.subr.bf16.mxu0 0
    %2906 = vmatpush1.bf16.msra.mxu0 %v1878
    %2907 = vmatprep.subr.bf16.mxu0 0
    %2908 = vmatpush1.bf16.msra.mxu0 %v1885
    %2909 = vmatprep.subr.bf16.mxu0 0
    %2910 = vmatpush1.bf16.msra.mxu0 %v1892
    %2911 = vmatprep.subr.bf16.mxu0 0
    %2912 = vmatpush1.bf16.msra.mxu0 %v1899
    %2913 = vmatprep.subr.bf16.mxu0 0
    %2914 = vmatpush1.bf16.msra.mxu0 %v1906
    %2915 = vmatprep.subr.bf16.mxu0 0
    %2916 = vmatpush1.bf16.msra.mxu0 %v1913
    %2917 = vmatprep.subr.bf16.mxu0 0
    %2918 = vmatpush1.bf16.msra.mxu0 %v1920
    %2919 = vmatprep.subr.bf16.mxu0 0
    %2920 = vmatpush1.bf16.msra.mxu0 %v1927
    %2921 = vmatprep.subr.bf16.mxu0 0
    %2922 = vmatpush1.bf16.msra.mxu0 %v1934
    %2923 = vmatprep.subr.bf16.mxu0 0
    %2924 = vmatpush1.bf16.msra.mxu0 %v1941
    %2925 = vmatprep.subr.bf16.mxu0 0
    %2926 = vmatpush1.bf16.msra.mxu0 %v1948
    %2927 = vmatprep.subr.bf16.mxu0 0
    %2928 = vmatpush1.bf16.msra.mxu0 %v1955
    %2929 = vmatprep.subr.bf16.mxu0 0
    %2930 = vmatpush1.bf16.msra.mxu0 %v1962
    %2931 = vmatprep.subr.bf16.mxu0 0
    %2932 = vmatpush1.bf16.msra.mxu0 %v1969
    %2933 = vmatprep.subr.bf16.mxu0 0
    %2934 = vmatpush1.bf16.msra.mxu0 %v1976
    %2935 = vmatprep.mubr.bf16.mxu0 %v132
    %2936 = vmatmul.mubr.bf16.gmra.mrb[0].mxu0 %v131
    %v2937 = vpop.f32.mrb[0].mxu0
    %v2938 = vadd.f32 %v2898, %v2937
    %v2939 = vpop.f32.mrb[0].mxu0
    %v2940 = vpop.f32.mrb[0].mxu0
    %v2941 = vpop.f32.mrb[0].mxu0
    %2942 = vdwg.mxu0
    %2943 = vmatprep.subr.bf16.mxu0 0
    %2944 = vmatpush1.bf16.msra.mxu0 %v1983
    %2945 = vmatprep.subr.bf16.mxu0 0
    %2946 = vmatpush1.bf16.msra.mxu0 0
    %2947 = vmatprep.subr.bf16.mxu0 0
    %2948 = vmatpush1.bf16.msra.mxu0 0
    %2949 = vmatprep.subr.bf16.mxu0 0
    %2950 = vmatpush1.bf16.msra.mxu0 0
    %2951 = vmatprep.subr.bf16.mxu0 0
    %2952 = vmatpush1.bf16.msra.mxu0 0
    %2953 = vmatprep.subr.bf16.mxu0 0
    %2954 = vmatpush1.bf16.msra.mxu0 0
    %2955 = vmatprep.subr.bf16.mxu0 0
    %2956 = vmatpush1.bf16.msra.mxu0 0
    %2957 = vmatprep.subr.bf16.mxu0 0
    %2958 = vmatpush1.bf16.msra.mxu0 0
    %2959 = vmatprep.subr.bf16.mxu0 0
    %2960 = vmatpush1.bf16.msra.mxu0 0
    %2961 = vmatprep.subr.bf16.mxu0 0
    %2962 = vmatpush1.bf16.msra.mxu0 0
    %2963 = vmatprep.subr.bf16.mxu0 0
    %2964 = vmatpush1.bf16.msra.mxu0 0
    %2965 = vmatprep.subr.bf16.mxu0 0
    %2966 = vmatpush1.bf16.msra.mxu0 0
    %2967 = vmatprep.subr.bf16.mxu0 0
    %2968 = vmatpush1.bf16.msra.mxu0 0
    %2969 = vmatprep.subr.bf16.mxu0 0
    %2970 = vmatpush1.bf16.msra.mxu0 0
    %2971 = vmatprep.subr.bf16.mxu0 0
    %2972 = vmatpush1.bf16.msra.mxu0 0
    %2973 = vmatprep.subr.bf16.mxu0 0
    %2974 = vmatpush1.bf16.msra.mxu0 0
    %2975 = vmatprep.mubr.bf16.mxu0 0
    %2976 = vmatmul.mubr.bf16.gmra.mrb[0].mxu0 %v2329
    %v2977 = vpop.f32.mrb[0].mxu0
    %v2978 = vadd.f32 %v2938, %v2977
    %v2979 = vpop.f32.mrb[0].mxu0
    %v2980 = vpop.f32.mrb[0].mxu0
    %v2981 = vpop.f32.mrb[0].mxu0
    %2982 = vdwg.mxu0
    %v2983 = vmax.f32 %v2489, 0.0
    %v2984 = vmax.f32 %v2491, 0.0
    %v2985 = vmax.f32 %v2653, 0.0
    %v2986 = vmax.f32 %v2655, 0.0
    %v2987 = vmax.f32 %v2817, 0.0
    %v2988 = vmax.f32 %v2819, 0.0
    %v2989 = vmax.f32 %v2978, 0.0
    %v2990 = vpack.c.bf16 %v2983, %v2983
    %v2991 = vpack.c.bf16 %v2984, %v2984
    %v2992 = vpack.c.bf16 %v2985, %v2985
    %v2993 = vpack.c.bf16 %v2986, %v2986
    %v2994 = vpack.c.bf16 %v2987, %v2987
    %v2995 = vpack.c.bf16 %v2988, %v2988
    %v2996 = vpack.c.bf16 %v2989, %v2989
    %s2997 = smul.u32 4, 98
    %s2998 = smul.u32 %s2997, 7
    %s2999 = sshll.u32 %s2998, 4
    %3000 = dma.done [#allocation4], %s2999
    %v3001 = vld [vmem:[#allocation2] sm:$0xff]
    %v3002 = vld [vmem:[#allocation2 + $0x8] sm:$0xff]
    %v3003 = vld [vmem:[#allocation2 + $0x10] sm:$0xff]
    %v3004 = vld [vmem:[#allocation2 + $0x18] sm:$0xff]
    %v3005 = vld [vmem:[#allocation2 + $0x20] sm:$0xff]
    %v3006 = vld [vmem:[#allocation2 + $0x28] sm:$0xff]
    %v3007 = vld [vmem:[#allocation2 + $0x30] sm:$0xff]
    %v3008 = vld [vmem:[#allocation2 + $0x38] sm:$0xff]
    %v3009 = vld [vmem:[#allocation2 + $0x40] sm:$0xff]
    %v3010 = vld [vmem:[#allocation2 + $0x48] sm:$0xff]
    %v3011 = vld [vmem:[#allocation2 + $0x50] sm:$0xff]
    %v3012 = vld [vmem:[#allocation2 + $0x58] sm:$0xff]
    %v3013 = vld [vmem:[#allocation2 + $0x60] sm:$0xff]
    %v3014 = vld [vmem:[#allocation2 + $0x68] sm:$0xff]
    %v3015 = vld [vmem:[#allocation2 + $0x70] sm:$0xff]
    %v3016 = vld [vmem:[#allocation2 + $0x78] sm:$0xff]
    %v3017 = vld [vmem:[#allocation2 + $0x80] sm:$0xff]
    %v3018 = vld [vmem:[#allocation2 + $0x88] sm:$0xff]
    %v3019 = vld [vmem:[#allocation2 + $0x90] sm:$0xff]
    %v3020 = vld [vmem:[#allocation2 + $0x98] sm:$0xff]
    %v3021 = vld [vmem:[#allocation2 + $0xa0] sm:$0xff]
    %v3022 = vld [vmem:[#allocation2 + $0xa8] sm:$0xff]
    %v3023 = vld [vmem:[#allocation2 + $0xb0] sm:$0xff]
    %v3024 = vld [vmem:[#allocation2 + $0xb8] sm:$0xff]
    %v3025 = vld [vmem:[#allocation2 + $0xc0] sm:$0xff]
    %v3026 = vld [vmem:[#allocation2 + $0xc8] sm:$0xff]
    %v3027 = vld [vmem:[#allocation2 + $0xd0] sm:$0xff]
    %v3028 = vld [vmem:[#allocation2 + $0xd8] sm:$0xff]
    %v3029 = vld [vmem:[#allocation2 + $0xe0] sm:$0xff]
    %v3030 = vld [vmem:[#allocation2 + $0xe8] sm:$0xff]
    %v3031 = vld [vmem:[#allocation2 + $0xf0] sm:$0xff]
    %v3032 = vld [vmem:[#allocation2 + $0xf8] sm:$0xff]
    %v3033 = vld [vmem:[#allocation2 + $0x100] sm:$0xff]
    %v3034 = vld [vmem:[#allocation2 + $0x108] sm:$0xff]
    %v3035 = vld [vmem:[#allocation2 + $0x110] sm:$0xff]
    %v3036 = vld [vmem:[#allocation2 + $0x118] sm:$0xff]
    %v3037 = vld [vmem:[#allocation2 + $0x120] sm:$0xff]
    %v3038 = vld [vmem:[#allocation2 + $0x128] sm:$0xff]
    %v3039 = vld [vmem:[#allocation2 + $0x130] sm:$0xff]
    %v3040 = vld [vmem:[#allocation2 + $0x138] sm:$0xff]
    %v3041 = vld [vmem:[#allocation2 + $0x140] sm:$0xff]
    %v3042 = vld [vmem:[#allocation2 + $0x148] sm:$0xff]
    %v3043 = vld [vmem:[#allocation2 + $0x150] sm:$0xff]
    %v3044 = vld [vmem:[#allocation2 + $0x158] sm:$0xff]
    %v3045 = vld [vmem:[#allocation2 + $0x160] sm:$0xff]
    %v3046 = vld [vmem:[#allocation2 + $0x168] sm:$0xff]
    %v3047 = vld [vmem:[#allocation2 + $0x170] sm:$0xff]
    %v3048 = vld [vmem:[#allocation2 + $0x178] sm:$0xff]
    %v3049 = vld [vmem:[#allocation2 + $0x180] sm:$0xff]
    %v3050 = vld [vmem:[#allocation2 + $0x188] sm:$0xff]
    %v3051 = vld [vmem:[#allocation2 + $0x190] sm:$0xff]
    %v3052 = vld [vmem:[#allocation2 + $0x198] sm:$0xff]
    %v3053 = vld [vmem:[#allocation2 + $0x1a0] sm:$0xff]
    %v3054 = vld [vmem:[#allocation2 + $0x1a8] sm:$0xff]
    %v3055 = vld [vmem:[#allocation2 + $0x1b0] sm:$0xff]
    %v3056 = vld [vmem:[#allocation2 + $0x1b8] sm:$0xff]
    %v3057 = vld [vmem:[#allocation2 + $0x1c0] sm:$0xff]
    %v3058 = vld [vmem:[#allocation2 + $0x1c8] sm:$0xff]
    %v3059 = vld [vmem:[#allocation2 + $0x1d0] sm:$0xff]
    %v3060 = vld [vmem:[#allocation2 + $0x1d8] sm:$0xff]
    %v3061 = vld [vmem:[#allocation2 + $0x1e0] sm:$0xff]
    %v3062 = vld [vmem:[#allocation2 + $0x1e8] sm:$0xff]
    %v3063 = vld [vmem:[#allocation2 + $0x1f0] sm:$0xff]
    %v3064 = vld [vmem:[#allocation2 + $0x1f8] sm:$0xff]
    %v3065 = vld [vmem:[#allocation2 + $0x200] sm:$0xff]
    %v3066 = vld [vmem:[#allocation2 + $0x208] sm:$0xff]
    %v3067 = vld [vmem:[#allocation2 + $0x210] sm:$0xff]
    %v3068 = vld [vmem:[#allocation2 + $0x218] sm:$0xff]
    %v3069 = vld [vmem:[#allocation2 + $0x220] sm:$0xff]
    %v3070 = vld [vmem:[#allocation2 + $0x228] sm:$0xff]
    %v3071 = vld [vmem:[#allocation2 + $0x230] sm:$0xff]
    %v3072 = vld [vmem:[#allocation2 + $0x238] sm:$0xff]
    %v3073 = vld [vmem:[#allocation2 + $0x240] sm:$0xff]
    %v3074 = vld [vmem:[#allocation2 + $0x248] sm:$0xff]
    %v3075 = vld [vmem:[#allocation2 + $0x250] sm:$0xff]
    %v3076 = vld [vmem:[#allocation2 + $0x258] sm:$0xff]
    %v3077 = vld [vmem:[#allocation2 + $0x260] sm:$0xff]
    %v3078 = vld [vmem:[#allocation2 + $0x268] sm:$0xff]
    %v3079 = vld [vmem:[#allocation2 + $0x270] sm:$0xff]
    %v3080 = vld [vmem:[#allocation2 + $0x278] sm:$0xff]
    %v3081 = vld [vmem:[#allocation2 + $0x280] sm:$0xff]
    %v3082 = vld [vmem:[#allocation2 + $0x288] sm:$0xff]
    %v3083 = vld [vmem:[#allocation2 + $0x290] sm:$0xff]
    %v3084 = vld [vmem:[#allocation2 + $0x298] sm:$0xff]
    %v3085 = vld [vmem:[#allocation2 + $0x2a0] sm:$0xff]
    %v3086 = vld [vmem:[#allocation2 + $0x2a8] sm:$0xff]
    %v3087 = vld [vmem:[#allocation2 + $0x2b0] sm:$0xff]
    %v3088 = vld [vmem:[#allocation2 + $0x2b8] sm:$0xff]
    %v3089 = vld [vmem:[#allocation2 + $0x2c0] sm:$0xff]
    %v3090 = vld [vmem:[#allocation2 + $0x2c8] sm:$0xff]
    %v3091 = vld [vmem:[#allocation2 + $0x2d0] sm:$0xff]
    %v3092 = vld [vmem:[#allocation2 + $0x2d8] sm:$0xff]
    %v3093 = vld [vmem:[#allocation2 + $0x2e0] sm:$0xff]
    %v3094 = vld [vmem:[#allocation2 + $0x2e8] sm:$0xff]
    %v3095 = vld [vmem:[#allocation2 + $0x2f0] sm:$0xff]
    %v3096 = vld [vmem:[#allocation2 + $0x2f8] sm:$0xff]
    %v3097 = vld [vmem:[#allocation2 + $0x300] sm:$0xff]
    %v3098 = vld [vmem:[#allocation2 + $0x308] sm:$0xff]
    %v3099 = vld [vmem:[#allocation2 + $0x310] sm:$0xff]
    %v3100 = vld [vmem:[#allocation2 + $0x318] sm:$0xff]
    %v3101 = vld [vmem:[#allocation2 + $0x320] sm:$0xff]
    %v3102 = vld [vmem:[#allocation2 + $0x328] sm:$0xff]
    %v3103 = vld [vmem:[#allocation2 + $0x330] sm:$0xff]
    %v3104 = vld [vmem:[#allocation2 + $0x338] sm:$0xff]
    %v3105 = vld [vmem:[#allocation2 + $0x340] sm:$0xff]
    %v3106 = vld [vmem:[#allocation2 + $0x348] sm:$0xff]
    %v3107 = vld [vmem:[#allocation2 + $0x350] sm:$0xff]
    %v3108 = vld [vmem:[#allocation2 + $0x358] sm:$0xff]
    %v3109 = vld [vmem:[#allocation2 + $0x360] sm:$0xff]
    %v3110 = vld [vmem:[#allocation2 + $0x368] sm:$0xff]
    %v3111 = vld [vmem:[#allocation2 + $0x370] sm:$0xff]
    %v3112 = vld [vmem:[#allocation2 + $0x378] sm:$0xff]
    %v3113 = vld [vmem:[#allocation2 + $0x380] sm:$0xff]
    %v3114 = vld [vmem:[#allocation2 + $0x388] sm:$0xff]
    %v3115 = vld [vmem:[#allocation2 + $0x390] sm:$0xff]
    %v3116 = vld [vmem:[#allocation2 + $0x398] sm:$0xff]
    %v3117 = vld [vmem:[#allocation2 + $0x3a0] sm:$0xff]
    %v3118 = vld [vmem:[#allocation2 + $0x3a8] sm:$0xff]
    %v3119 = vld [vmem:[#allocation2 + $0x3b0] sm:$0xff]
    %v3120 = vld [vmem:[#allocation2 + $0x3b8] sm:$0xff]
    %v3121 = vld [vmem:[#allocation2 + $0x3c0] sm:$0xff]
    %v3122 = vld [vmem:[#allocation2 + $0x3c8] sm:$0xff]
    %v3123 = vld [vmem:[#allocation2 + $0x3d0] sm:$0xff]
    %v3124 = vld [vmem:[#allocation2 + $0x3d8] sm:$0xff]
    %v3125 = vld [vmem:[#allocation2 + $0x3e0] sm:$0xff]
    %v3126 = vld [vmem:[#allocation2 + $0x3e8] sm:$0xff]
    %v3127 = vld [vmem:[#allocation2 + $0x3f0] sm:$0xff]
    %v3128 = vld [vmem:[#allocation2 + $0x3f8] sm:$0xff]
    %v3129 = vld [vmem:[#allocation2 + $0x400] sm:$0xff]
    %v3130 = vld [vmem:[#allocation2 + $0x408] sm:$0xff]
    %v3131 = vld [vmem:[#allocation2 + $0x410] sm:$0xff]
    %v3132 = vld [vmem:[#allocation2 + $0x418] sm:$0xff]
    %v3133 = vld [vmem:[#allocation2 + $0x420] sm:$0xff]
    %v3134 = vld [vmem:[#allocation2 + $0x428] sm:$0xff]
    %v3135 = vld [vmem:[#allocation2 + $0x430] sm:$0xff]
    %v3136 = vld [vmem:[#allocation2 + $0x438] sm:$0xff]
    %v3137 = vld [vmem:[#allocation2 + $0x440] sm:$0xff]
    %v3138 = vld [vmem:[#allocation2 + $0x448] sm:$0xff]
    %v3139 = vld [vmem:[#allocation2 + $0x450] sm:$0xff]
    %v3140 = vld [vmem:[#allocation2 + $0x458] sm:$0xff]
    %v3141 = vld [vmem:[#allocation2 + $0x460] sm:$0xff]
    %v3142 = vld [vmem:[#allocation2 + $0x468] sm:$0xff]
    %v3143 = vld [vmem:[#allocation2 + $0x470] sm:$0xff]
    %v3144 = vld [vmem:[#allocation2 + $0x478] sm:$0xff]
    %v3145 = vld [vmem:[#allocation2 + $0x480] sm:$0xff]
    %v3146 = vld [vmem:[#allocation2 + $0x488] sm:$0xff]
    %v3147 = vld [vmem:[#allocation2 + $0x490] sm:$0xff]
    %v3148 = vld [vmem:[#allocation2 + $0x498] sm:$0xff]
    %v3149 = vld [vmem:[#allocation2 + $0x4a0] sm:$0xff]
    %v3150 = vld [vmem:[#allocation2 + $0x4a8] sm:$0xff]
    %v3151 = vld [vmem:[#allocation2 + $0x4b0] sm:$0xff]
    %v3152 = vld [vmem:[#allocation2 + $0x4b8] sm:$0xff]
    %v3153 = vld [vmem:[#allocation2 + $0x4c0] sm:$0xff]
    %v3154 = vld [vmem:[#allocation2 + $0x4c8] sm:$0xff]
    %v3155 = vld [vmem:[#allocation2 + $0x4d0] sm:$0xff]
    %v3156 = vld [vmem:[#allocation2 + $0x4d8] sm:$0xff]
    %v3157 = vld [vmem:[#allocation2 + $0x4e0] sm:$0xff]
    %v3158 = vld [vmem:[#allocation2 + $0x4e8] sm:$0xff]
    %v3159 = vld [vmem:[#allocation2 + $0x4f0] sm:$0xff]
    %v3160 = vld [vmem:[#allocation2 + $0x4f8] sm:$0xff]
    %v3161 = vld [vmem:[#allocation2 + $0x500] sm:$0xff]
    %v3162 = vld [vmem:[#allocation2 + $0x508] sm:$0xff]
    %v3163 = vld [vmem:[#allocation2 + $0x510] sm:$0xff]
    %v3164 = vld [vmem:[#allocation2 + $0x518] sm:$0xff]
    %v3165 = vld [vmem:[#allocation2 + $0x520] sm:$0xff]
    %v3166 = vld [vmem:[#allocation2 + $0x528] sm:$0xff]
    %v3167 = vld [vmem:[#allocation2 + $0x530] sm:$0xff]
    %v3168 = vld [vmem:[#allocation2 + $0x538] sm:$0xff]
    %v3169 = vld [vmem:[#allocation2 + $0x540] sm:$0xff]
    %v3170 = vld [vmem:[#allocation2 + $0x548] sm:$0xff]
    %v3171 = vld [vmem:[#allocation2 + $0x550] sm:$0xff]
    %v3172 = vld [vmem:[#allocation2 + $0x558] sm:$0xff]
    %v3173 = vld [vmem:[#allocation2 + $0x560] sm:$0xff]
    %v3174 = vld [vmem:[#allocation2 + $0x568] sm:$0xff]
    %v3175 = vld [vmem:[#allocation2 + $0x570] sm:$0xff]
    %v3176 = vld [vmem:[#allocation2 + $0x578] sm:$0xff]
    %v3177 = vld [vmem:[#allocation2 + $0x580] sm:$0xff]
    %v3178 = vld [vmem:[#allocation2 + $0x588] sm:$0xff]
    %v3179 = vld [vmem:[#allocation2 + $0x590] sm:$0xff]
    %v3180 = vld [vmem:[#allocation2 + $0x598] sm:$0xff]
    %v3181 = vld [vmem:[#allocation2 + $0x5a0] sm:$0xff]
    %v3182 = vld [vmem:[#allocation2 + $0x5a8] sm:$0xff]
    %v3183 = vld [vmem:[#allocation2 + $0x5b0] sm:$0xff]
    %v3184 = vld [vmem:[#allocation2 + $0x5b8] sm:$0xff]
    %v3185 = vld [vmem:[#allocation2 + $0x5c0] sm:$0xff]
    %v3186 = vld [vmem:[#allocation2 + $0x5c8] sm:$0xff]
    %v3187 = vld [vmem:[#allocation2 + $0x5d0] sm:$0xff]
    %v3188 = vld [vmem:[#allocation2 + $0x5d8] sm:$0xff]
    %v3189 = vld [vmem:[#allocation2 + $0x5e0] sm:$0xff]
    %v3190 = vld [vmem:[#allocation2 + $0x5e8] sm:$0xff]
    %v3191 = vld [vmem:[#allocation2 + $0x5f0] sm:$0xff]
    %v3192 = vld [vmem:[#allocation2 + $0x5f8] sm:$0xff]
    %v3193 = vld [vmem:[#allocation2 + $0x600] sm:$0xff]
    %v3194 = vld [vmem:[#allocation2 + $0x608] sm:$0xff]
    %v3195 = vld [vmem:[#allocation2 + $0x610] sm:$0xff]
    %v3196 = vld [vmem:[#allocation2 + $0x618] sm:$0xff]
    %v3197 = vld [vmem:[#allocation2 + $0x620] sm:$0xff]
    %v3198 = vld [vmem:[#allocation2 + $0x628] sm:$0xff]
    %v3199 = vld [vmem:[#allocation2 + $0x630] sm:$0xff]
    %v3200 = vld [vmem:[#allocation2 + $0x638] sm:$0xff]
    %v3201 = vld [vmem:[#allocation2 + $0x640] sm:$0xff]
    %v3202 = vld [vmem:[#allocation2 + $0x648] sm:$0xff]
    %v3203 = vld [vmem:[#allocation2 + $0x650] sm:$0xff]
    %v3204 = vld [vmem:[#allocation2 + $0x658] sm:$0xff]
    %v3205 = vld [vmem:[#allocation2 + $0x660] sm:$0xff]
    %v3206 = vld [vmem:[#allocation2 + $0x668] sm:$0xff]
    %v3207 = vld [vmem:[#allocation2 + $0x670] sm:$0xff]
    %v3208 = vld [vmem:[#allocation2 + $0x678] sm:$0xff]
    %v3209 = vld [vmem:[#allocation2 + $0x680] sm:$0xff]
    %v3210 = vld [vmem:[#allocation2 + $0x688] sm:$0xff]
    %v3211 = vld [vmem:[#allocation2 + $0x690] sm:$0xff]
    %v3212 = vld [vmem:[#allocation2 + $0x698] sm:$0xff]
    %v3213 = vld [vmem:[#allocation2 + $0x6a0] sm:$0xff]
    %v3214 = vld [vmem:[#allocation2 + $0x6a8] sm:$0xff]
    %v3215 = vld [vmem:[#allocation2 + $0x6b0] sm:$0xff]
    %v3216 = vld [vmem:[#allocation2 + $0x6b8] sm:$0xff]
    %v3217 = vld [vmem:[#allocation2 + $0x6c0] sm:$0xff]
    %v3218 = vld [vmem:[#allocation2 + $0x6c8] sm:$0xff]
    %v3219 = vld [vmem:[#allocation2 + $0x6d0] sm:$0xff]
    %v3220 = vld [vmem:[#allocation2 + $0x6d8] sm:$0xff]
    %v3221 = vld [vmem:[#allocation2 + $0x6e0] sm:$0xff]
    %v3222 = vld [vmem:[#allocation2 + $0x6e8] sm:$0xff]
    %v3223 = vld [vmem:[#allocation2 + $0x6f0] sm:$0xff]
    %v3224 = vld [vmem:[#allocation2 + $0x6f8] sm:$0xff]
    %v3225 = vld [vmem:[#allocation2 + $0x700] sm:$0xff]
    %v3226 = vld [vmem:[#allocation2 + $0x708] sm:$0xff]
    %v3227 = vld [vmem:[#allocation2 + $0x710] sm:$0xff]
    %v3228 = vld [vmem:[#allocation2 + $0x718] sm:$0xff]
    %v3229 = vld [vmem:[#allocation2 + $0x720] sm:$0xff]
    %v3230 = vld [vmem:[#allocation2 + $0x728] sm:$0xff]
    %v3231 = vld [vmem:[#allocation2 + $0x730] sm:$0xff]
    %v3232 = vld [vmem:[#allocation2 + $0x738] sm:$0xff]
    %v3233 = vld [vmem:[#allocation2 + $0x740] sm:$0xff]
    %v3234 = vld [vmem:[#allocation2 + $0x748] sm:$0xff]
    %v3235 = vld [vmem:[#allocation2 + $0x750] sm:$0xff]
    %v3236 = vld [vmem:[#allocation2 + $0x758] sm:$0xff]
    %v3237 = vld [vmem:[#allocation2 + $0x760] sm:$0xff]
    %v3238 = vld [vmem:[#allocation2 + $0x768] sm:$0xff]
    %v3239 = vld [vmem:[#allocation2 + $0x770] sm:$0xff]
    %v3240 = vld [vmem:[#allocation2 + $0x778] sm:$0xff]
    %v3241 = vld [vmem:[#allocation2 + $0x780] sm:$0xff]
    %v3242 = vld [vmem:[#allocation2 + $0x788] sm:$0xff]
    %v3243 = vld [vmem:[#allocation2 + $0x790] sm:$0xff]
    %v3244 = vld [vmem:[#allocation2 + $0x798] sm:$0xff]
    %v3245 = vld [vmem:[#allocation2 + $0x7a0] sm:$0xff]
    %v3246 = vld [vmem:[#allocation2 + $0x7a8] sm:$0xff]
    %v3247 = vld [vmem:[#allocation2 + $0x7b0] sm:$0xff]
    %v3248 = vld [vmem:[#allocation2 + $0x7b8] sm:$0xff]
    %v3249 = vld [vmem:[#allocation2 + $0x7c0] sm:$0xff]
    %v3250 = vld [vmem:[#allocation2 + $0x7c8] sm:$0xff]
    %v3251 = vld [vmem:[#allocation2 + $0x7d0] sm:$0xff]
    %v3252 = vld [vmem:[#allocation2 + $0x7d8] sm:$0xff]
    %v3253 = vld [vmem:[#allocation2 + $0x7e0] sm:$0xff]
    %v3254 = vld [vmem:[#allocation2 + $0x7e8] sm:$0xff]
    %v3255 = vld [vmem:[#allocation2 + $0x7f0] sm:$0xff]
    %v3256 = vld [vmem:[#allocation2 + $0x7f8] sm:$0xff]
    %v3257 = vld [vmem:[#allocation2 + $0x800] sm:$0xff]
    %v3258 = vld [vmem:[#allocation2 + $0x808] sm:$0xff]
    %v3259 = vld [vmem:[#allocation2 + $0x810] sm:$0xff]
    %v3260 = vld [vmem:[#allocation2 + $0x818] sm:$0xff]
    %v3261 = vld [vmem:[#allocation2 + $0x820] sm:$0xff]
    %v3262 = vld [vmem:[#allocation2 + $0x828] sm:$0xff]
    %v3263 = vld [vmem:[#allocation2 + $0x830] sm:$0xff]
    %v3264 = vld [vmem:[#allocation2 + $0x838] sm:$0xff]
    %v3265 = vld [vmem:[#allocation2 + $0x840] sm:$0xff]
    %v3266 = vld [vmem:[#allocation2 + $0x848] sm:$0xff]
    %v3267 = vld [vmem:[#allocation2 + $0x850] sm:$0xff]
    %v3268 = vld [vmem:[#allocation2 + $0x858] sm:$0xff]
    %v3269 = vld [vmem:[#allocation2 + $0x860] sm:$0xff]
    %v3270 = vld [vmem:[#allocation2 + $0x868] sm:$0xff]
    %v3271 = vld [vmem:[#allocation2 + $0x870] sm:$0xff]
    %v3272 = vld [vmem:[#allocation2 + $0x878] sm:$0xff]
    %v3273 = vld [vmem:[#allocation2 + $0x880] sm:$0xff]
    %v3274 = vld [vmem:[#allocation2 + $0x888] sm:$0xff]
    %v3275 = vld [vmem:[#allocation2 + $0x890] sm:$0xff]
    %v3276 = vld [vmem:[#allocation2 + $0x898] sm:$0xff]
    %v3277 = vld [vmem:[#allocation2 + $0x8a0] sm:$0xff]
    %v3278 = vld [vmem:[#allocation2 + $0x8a8] sm:$0xff]
    %v3279 = vld [vmem:[#allocation2 + $0x8b0] sm:$0xff]
    %v3280 = vld [vmem:[#allocation2 + $0x8b8] sm:$0xff]
    %v3281 = vld [vmem:[#allocation2 + $0x8c0] sm:$0xff]
    %v3282 = vld [vmem:[#allocation2 + $0x8c8] sm:$0xff]
    %v3283 = vld [vmem:[#allocation2 + $0x8d0] sm:$0xff]
    %v3284 = vld [vmem:[#allocation2 + $0x8d8] sm:$0xff]
    %v3285 = vld [vmem:[#allocation2 + $0x8e0] sm:$0xff]
    %v3286 = vld [vmem:[#allocation2 + $0x8e8] sm:$0xff]
    %v3287 = vld [vmem:[#allocation2 + $0x8f0] sm:$0xff]
    %v3288 = vld [vmem:[#allocation2 + $0x8f8] sm:$0xff]
    %v3289 = vld [vmem:[#allocation2 + $0x900] sm:$0xff]
    %v3290 = vld [vmem:[#allocation2 + $0x908] sm:$0xff]
    %v3291 = vld [vmem:[#allocation2 + $0x910] sm:$0xff]
    %v3292 = vld [vmem:[#allocation2 + $0x918] sm:$0xff]
    %v3293 = vld [vmem:[#allocation2 + $0x920] sm:$0xff]
    %v3294 = vld [vmem:[#allocation2 + $0x928] sm:$0xff]
    %v3295 = vld [vmem:[#allocation2 + $0x930] sm:$0xff]
    %v3296 = vld [vmem:[#allocation2 + $0x938] sm:$0xff]
    %v3297 = vld [vmem:[#allocation2 + $0x940] sm:$0xff]
    %v3298 = vld [vmem:[#allocation2 + $0x948] sm:$0xff]
    %v3299 = vld [vmem:[#allocation2 + $0x950] sm:$0xff]
    %v3300 = vld [vmem:[#allocation2 + $0x958] sm:$0xff]
    %v3301 = vld [vmem:[#allocation2 + $0x960] sm:$0xff]
    %v3302 = vld [vmem:[#allocation2 + $0x968] sm:$0xff]
    %v3303 = vld [vmem:[#allocation2 + $0x970] sm:$0xff]
    %v3304 = vld [vmem:[#allocation2 + $0x978] sm:$0xff]
    %v3305 = vld [vmem:[#allocation2 + $0x980] sm:$0xff]
    %v3306 = vld [vmem:[#allocation2 + $0x988] sm:$0xff]
    %v3307 = vld [vmem:[#allocation2 + $0x990] sm:$0xff]
    %v3308 = vld [vmem:[#allocation2 + $0x998] sm:$0xff]
    %v3309 = vld [vmem:[#allocation2 + $0x9a0] sm:$0xff]
    %v3310 = vld [vmem:[#allocation2 + $0x9a8] sm:$0xff]
    %v3311 = vld [vmem:[#allocation2 + $0x9b0] sm:$0xff]
    %v3312 = vld [vmem:[#allocation2 + $0x9b8] sm:$0xff]
    %v3313 = vld [vmem:[#allocation2 + $0x9c0] sm:$0xff]
    %v3314 = vld [vmem:[#allocation2 + $0x9c8] sm:$0xff]
    %v3315 = vld [vmem:[#allocation2 + $0x9d0] sm:$0xff]
    %v3316 = vld [vmem:[#allocation2 + $0x9d8] sm:$0xff]
    %v3317 = vld [vmem:[#allocation2 + $0x9e0] sm:$0xff]
    %v3318 = vld [vmem:[#allocation2 + $0x9e8] sm:$0xff]
    %v3319 = vld [vmem:[#allocation2 + $0x9f0] sm:$0xff]
    %v3320 = vld [vmem:[#allocation2 + $0x9f8] sm:$0xff]
    %v3321 = vld [vmem:[#allocation2 + $0xa00] sm:$0xff]
    %v3322 = vld [vmem:[#allocation2 + $0xa08] sm:$0xff]
    %v3323 = vld [vmem:[#allocation2 + $0xa10] sm:$0xff]
    %v3324 = vld [vmem:[#allocation2 + $0xa18] sm:$0xff]
    %v3325 = vld [vmem:[#allocation2 + $0xa20] sm:$0xff]
    %v3326 = vld [vmem:[#allocation2 + $0xa28] sm:$0xff]
    %v3327 = vld [vmem:[#allocation2 + $0xa30] sm:$0xff]
    %v3328 = vld [vmem:[#allocation2 + $0xa38] sm:$0xff]
    %v3329 = vld [vmem:[#allocation2 + $0xa40] sm:$0xff]
    %v3330 = vld [vmem:[#allocation2 + $0xa48] sm:$0xff]
    %v3331 = vld [vmem:[#allocation2 + $0xa50] sm:$0xff]
    %v3332 = vld [vmem:[#allocation2 + $0xa58] sm:$0xff]
    %v3333 = vld [vmem:[#allocation2 + $0xa60] sm:$0xff]
    %v3334 = vld [vmem:[#allocation2 + $0xa68] sm:$0xff]
    %v3335 = vld [vmem:[#allocation2 + $0xa70] sm:$0xff]
    %v3336 = vld [vmem:[#allocation2 + $0xa78] sm:$0xff]
    %v3337 = vld [vmem:[#allocation2 + $0xa80] sm:$0xff]
    %v3338 = vld [vmem:[#allocation2 + $0xa88] sm:$0xff]
    %v3339 = vld [vmem:[#allocation2 + $0xa90] sm:$0xff]
    %v3340 = vld [vmem:[#allocation2 + $0xa98] sm:$0xff]
    %v3341 = vld [vmem:[#allocation2 + $0xaa0] sm:$0xff]
    %v3342 = vld [vmem:[#allocation2 + $0xaa8] sm:$0xff]
    %v3343 = vld [vmem:[#allocation2 + $0xab0] sm:$0xff]
    %v3344 = vld [vmem:[#allocation10] sm:$0x7f]
    %v3346 = vlaneseq
    %v3347 = vshrl.u32 %v3346, 7
    %v3348 = vsub.s32 0, %v3347
    %v3349 = vrot.slane %v3344, %v3348
    %v3350 = vlaneseq
    %v3351 = vshrl.u32 %v3350, 7
    %v3352 = vsub.s32 1, %v3351
    %v3353 = vrot.slane %v3344, %v3352
    %v3354 = vlaneseq
    %v3355 = vshrl.u32 %v3354, 7
    %v3356 = vsub.s32 2, %v3355
    %v3357 = vrot.slane %v3344, %v3356
    %v3358 = vlaneseq
    %v3359 = vshrl.u32 %v3358, 7
    %v3360 = vsub.s32 3, %v3359
    %v3361 = vrot.slane %v3344, %v3360
    %v3362 = vlaneseq
    %v3363 = vshrl.u32 %v3362, 7
    %v3364 = vsub.s32 4, %v3363
    %v3365 = vrot.slane %v3344, %v3364
    %v3366 = vlaneseq
    %v3367 = vshrl.u32 %v3366, 7
    %v3368 = vsub.s32 5, %v3367
    %v3369 = vrot.slane %v3344, %v3368
    %v3370 = vlaneseq
    %v3371 = vshrl.u32 %v3370, 7
    %v3372 = vsub.s32 6, %v3371
    %v3373 = vrot.slane %v3344, %v3372
    %v3382 = vsel %vm2327, %v2996, 0
    %3384 = vmatprep.subr.bf16.mxu0 %v3002
    %3385 = vmatpush1.bf16.msra.mxu0 %v3001
    %3386 = vmatprep.subr.bf16.mxu0 %v3009
    %3387 = vmatpush1.bf16.msra.mxu0 %v3008
    %3388 = vmatprep.subr.bf16.mxu0 %v3016
    %3389 = vmatpush1.bf16.msra.mxu0 %v3015
    %3390 = vmatprep.subr.bf16.mxu0 %v3023
    %3391 = vmatpush1.bf16.msra.mxu0 %v3022
    %3392 = vmatprep.subr.bf16.mxu0 %v3030
    %3393 = vmatpush1.bf16.msra.mxu0 %v3029
    %3394 = vmatprep.subr.bf16.mxu0 %v3037
    %3395 = vmatpush1.bf16.msra.mxu0 %v3036
    %3396 = vmatprep.subr.bf16.mxu0 %v3044
    %3397 = vmatpush1.bf16.msra.mxu0 %v3043
    %3398 = vmatprep.subr.bf16.mxu0 %v3051
    %3399 = vmatpush1.bf16.msra.mxu0 %v3050
    %3400 = vmatprep.subr.bf16.mxu0 %v3058
    %3401 = vmatpush1.bf16.msra.mxu0 %v3057
    %3402 = vmatprep.subr.bf16.mxu0 %v3065
    %3403 = vmatpush1.bf16.msra.mxu0 %v3064
    %3404 = vmatprep.subr.bf16.mxu0 %v3072
    %3405 = vmatpush1.bf16.msra.mxu0 %v3071
    %3406 = vmatprep.subr.bf16.mxu0 %v3079
    %3407 = vmatpush1.bf16.msra.mxu0 %v3078
    %3408 = vmatprep.subr.bf16.mxu0 %v3086
    %3409 = vmatpush1.bf16.msra.mxu0 %v3085
    %3410 = vmatprep.subr.bf16.mxu0 %v3093
    %3411 = vmatpush1.bf16.msra.mxu0 %v3092
    %3412 = vmatprep.subr.bf16.mxu0 %v3100
    %3413 = vmatpush1.bf16.msra.mxu0 %v3099
    %3414 = vmatprep.subr.bf16.mxu0 %v3107
    %3415 = vmatpush1.bf16.msra.mxu0 %v3106
    %3416 = vmatprep.mubr.bf16.mxu0 %v2991
    %3417 = vmatmul.mubr.bf16.gmra.mrb[0].mxu0 %v2990
    %v3418 = vpop.f32.mrb[0].mxu0
    %v3419 = vadd.f32 %v3349, %v3418
    %v3420 = vpop.f32.mrb[0].mxu0
    %v3421 = vadd.f32 %v3353, %v3420
    %v3422 = vpop.f32.mrb[0].mxu0
    %v3423 = vpop.f32.mrb[0].mxu0
    %3424 = vdwg.mxu0
    %3425 = vmatprep.subr.bf16.mxu0 %v3114
    %3426 = vmatpush1.bf16.msra.mxu0 %v3113
    %3427 = vmatprep.subr.bf16.mxu0 %v3121
    %3428 = vmatpush1.bf16.msra.mxu0 %v3120
    %3429 = vmatprep.subr.bf16.mxu0 %v3128
    %3430 = vmatpush1.bf16.msra.mxu0 %v3127
    %3431 = vmatprep.subr.bf16.mxu0 %v3135
    %3432 = vmatpush1.bf16.msra.mxu0 %v3134
    %3433 = vmatprep.subr.bf16.mxu0 %v3142
    %3434 = vmatpush1.bf16.msra.mxu0 %v3141
    %3435 = vmatprep.subr.bf16.mxu0 %v3149
    %3436 = vmatpush1.bf16.msra.mxu0 %v3148
    %3437 = vmatprep.subr.bf16.mxu0 %v3156
    %3438 = vmatpush1.bf16.msra.mxu0 %v3155
    %3439 = vmatprep.subr.bf16.mxu0 %v3163
    %3440 = vmatpush1.bf16.msra.mxu0 %v3162
    %3441 = vmatprep.subr.bf16.mxu0 %v3170
    %3442 = vmatpush1.bf16.msra.mxu0 %v3169
    %3443 = vmatprep.subr.bf16.mxu0 %v3177
    %3444 = vmatpush1.bf16.msra.mxu0 %v3176
    %3445 = vmatprep.subr.bf16.mxu0 %v3184
    %3446 = vmatpush1.bf16.msra.mxu0 %v3183
    %3447 = vmatprep.subr.bf16.mxu0 %v3191
    %3448 = vmatpush1.bf16.msra.mxu0 %v3190
    %3449 = vmatprep.subr.bf16.mxu0 %v3198
    %3450 = vmatpush1.bf16.msra.mxu0 %v3197
    %3451 = vmatprep.subr.bf16.mxu0 %v3205
    %3452 = vmatpush1.bf16.msra.mxu0 %v3204
    %3453 = vmatprep.subr.bf16.mxu0 %v3212
    %3454 = vmatpush1.bf16.msra.mxu0 %v3211
    %3455 = vmatprep.subr.bf16.mxu0 %v3219
    %3456 = vmatpush1.bf16.msra.mxu0 %v3218
    %3457 = vmatprep.mubr.bf16.mxu0 %v2993
    %3458 = vmatmul.mubr.bf16.gmra.mrb[0].mxu0 %v2992
    %v3459 = vpop.f32.mrb[0].mxu0
    %v3460 = vadd.f32 %v3419, %v3459
    %v3461 = vpop.f32.mrb[0].mxu0
    %v3462 = vadd.f32 %v3421, %v3461
    %v3463 = vpop.f32.mrb[0].mxu0
    %v3464 = vpop.f32.mrb[0].mxu0
    %3465 = vdwg.mxu0
    %3466 = vmatprep.subr.bf16.mxu0 %v3226
    %3467 = vmatpush1.bf16.msra.mxu0 %v3225
    %3468 = vmatprep.subr.bf16.mxu0 %v3233
    %3469 = vmatpush1.bf16.msra.mxu0 %v3232
    %3470 = vmatprep.subr.bf16.mxu0 %v3240
    %3471 = vmatpush1.bf16.msra.mxu0 %v3239
    %3472 = vmatprep.subr.bf16.mxu0 %v3247
    %3473 = vmatpush1.bf16.msra.mxu0 %v3246
    %3474 = vmatprep.subr.bf16.mxu0 %v3254
    %3475 = vmatpush1.bf16.msra.mxu0 %v3253
    %3476 = vmatprep.subr.bf16.mxu0 %v3261
    %3477 = vmatpush1.bf16.msra.mxu0 %v3260
    %3478 = vmatprep.subr.bf16.mxu0 %v3268
    %3479 = vmatpush1.bf16.msra.mxu0 %v3267
    %3480 = vmatprep.subr.bf16.mxu0 %v3275
    %3481 = vmatpush1.bf16.msra.mxu0 %v3274
    %3482 = vmatprep.subr.bf16.mxu0 %v3282
    %3483 = vmatpush1.bf16.msra.mxu0 %v3281
    %3484 = vmatprep.subr.bf16.mxu0 %v3289
    %3485 = vmatpush1.bf16.msra.mxu0 %v3288
    %3486 = vmatprep.subr.bf16.mxu0 %v3296
    %3487 = vmatpush1.bf16.msra.mxu0 %v3295
    %3488 = vmatprep.subr.bf16.mxu0 %v3303
    %3489 = vmatpush1.bf16.msra.mxu0 %v3302
    %3490 = vmatprep.subr.bf16.mxu0 %v3310
    %3491 = vmatpush1.bf16.msra.mxu0 %v3309
    %3492 = vmatprep.subr.bf16.mxu0 %v3317
    %3493 = vmatpush1.bf16.msra.mxu0 %v3316
    %3494 = vmatprep.subr.bf16.mxu0 %v3324
    %3495 = vmatpush1.bf16.msra.mxu0 %v3323
    %3496 = vmatprep.subr.bf16.mxu0 %v3331
    %3497 = vmatpush1.bf16.msra.mxu0 %v3330
    %3498 = vmatprep.mubr.bf16.mxu0 %v2995
    %3499 = vmatmul.mubr.bf16.gmra.mrb[0].mxu0 %v2994
    %v3500 = vpop.f32.mrb[0].mxu0
    %v3501 = vadd.f32 %v3460, %v3500
    %v3502 = vpop.f32.mrb[0].mxu0
    %v3503 = vadd.f32 %v3462, %v3502
    %v3504 = vpop.f32.mrb[0].mxu0
    %v3505 = vpop.f32.mrb[0].mxu0
    %3506 = vdwg.mxu0
    %3507 = vmatprep.subr.bf16.mxu0 %v3338
    %3508 = vmatpush1.bf16.msra.mxu0 %v3337
    %3509 = vmatprep.subr.bf16.mxu0 0
    %3510 = vmatpush1.bf16.msra.mxu0 0
    %3511 = vmatprep.subr.bf16.mxu0 0
    %3512 = vmatpush1.bf16.msra.mxu0 0
    %3513 = vmatprep.subr.bf16.mxu0 0
    %3514 = vmatpush1.bf16.msra.mxu0 0
    %3515 = vmatprep.subr.bf16.mxu0 0
    %3516 = vmatpush1.bf16.msra.mxu0 0
    %3517 = vmatprep.subr.bf16.mxu0 0
    %3518 = vmatpush1.bf16.msra.mxu0 0
    %3519 = vmatprep.subr.bf16.mxu0 0
    %3520 = vmatpush1.bf16.msra.mxu0 0
    %3521 = vmatprep.subr.bf16.mxu0 0
    %3522 = vmatpush1.bf16.msra.mxu0 0
    %3523 = vmatprep.subr.bf16.mxu0 0
    %3524 = vmatpush1.bf16.msra.mxu0 0
    %3525 = vmatprep.subr.bf16.mxu0 0
    %3526 = vmatpush1.bf16.msra.mxu0 0
    %3527 = vmatprep.subr.bf16.mxu0 0
    %3528 = vmatpush1.bf16.msra.mxu0 0
    %3529 = vmatprep.subr.bf16.mxu0 0
    %3530 = vmatpush1.bf16.msra.mxu0 0
    %3531 = vmatprep.subr.bf16.mxu0 0
    %3532 = vmatpush1.bf16.msra.mxu0 0
    %3533 = vmatprep.subr.bf16.mxu0 0
    %3534 = vmatpush1.bf16.msra.mxu0 0
    %3535 = vmatprep.subr.bf16.mxu0 0
    %3536 = vmatpush1.bf16.msra.mxu0 0
    %3537 = vmatprep.subr.bf16.mxu0 0
    %3538 = vmatpush1.bf16.msra.mxu0 0
    %3539 = vmatprep.mubr.bf16.mxu0 0
    %3540 = vmatmul.mubr.bf16.gmra.mrb[0].mxu0 %v3382
    %v3541 = vpop.f32.mrb[0].mxu0
    %v3542 = vadd.f32 %v3501, %v3541
    %v3543 = vpop.f32.mrb[0].mxu0
    %v3544 = vadd.f32 %v3503, %v3543
    %v3545 = vpop.f32.mrb[0].mxu0
    %v3546 = vpop.f32.mrb[0].mxu0
    %3547 = vdwg.mxu0
    %3548 = vmatprep.subr.bf16.mxu0 %v3004
    %3549 = vmatpush1.bf16.msra.mxu0 %v3003
    %3550 = vmatprep.subr.bf16.mxu0 %v3011
    %3551 = vmatpush1.bf16.msra.mxu0 %v3010
    %3552 = vmatprep.subr.bf16.mxu0 %v3018
    %3553 = vmatpush1.bf16.msra.mxu0 %v3017
    %3554 = vmatprep.subr.bf16.mxu0 %v3025
    %3555 = vmatpush1.bf16.msra.mxu0 %v3024
    %3556 = vmatprep.subr.bf16.mxu0 %v3032
    %3557 = vmatpush1.bf16.msra.mxu0 %v3031
    %3558 = vmatprep.subr.bf16.mxu0 %v3039
    %3559 = vmatpush1.bf16.msra.mxu0 %v3038
    %3560 = vmatprep.subr.bf16.mxu0 %v3046
    %3561 = vmatpush1.bf16.msra.mxu0 %v3045
    %3562 = vmatprep.subr.bf16.mxu0 %v3053
    %3563 = vmatpush1.bf16.msra.mxu0 %v3052
    %3564 = vmatprep.subr.bf16.mxu0 %v3060
    %3565 = vmatpush1.bf16.msra.mxu0 %v3059
    %3566 = vmatprep.subr.bf16.mxu0 %v3067
    %3567 = vmatpush1.bf16.msra.mxu0 %v3066
    %3568 = vmatprep.subr.bf16.mxu0 %v3074
    %3569 = vmatpush1.bf16.msra.mxu0 %v3073
    %3570 = vmatprep.subr.bf16.mxu0 %v3081
    %3571 = vmatpush1.bf16.msra.mxu0 %v3080
    %3572 = vmatprep.subr.bf16.mxu0 %v3088
    %3573 = vmatpush1.bf16.msra.mxu0 %v3087
    %3574 = vmatprep.subr.bf16.mxu0 %v3095
    %3575 = vmatpush1.bf16.msra.mxu0 %v3094
    %3576 = vmatprep.subr.bf16.mxu0 %v3102
    %3577 = vmatpush1.bf16.msra.mxu0 %v3101
    %3578 = vmatprep.subr.bf16.mxu0 %v3109
    %3579 = vmatpush1.bf16.msra.mxu0 %v3108
    %3580 = vmatprep.mubr.bf16.mxu0 %v2991
    %3581 = vmatmul.mubr.bf16.gmra.mrb[0].mxu0 %v2990
    %v3582 = vpop.f32.mrb[0].mxu0
    %v3583 = vadd.f32 %v3357, %v3582
    %v3584 = vpop.f32.mrb[0].mxu0
    %v3585 = vadd.f32 %v3361, %v3584
    %v3586 = vpop.f32.mrb[0].mxu0
    %v3587 = vpop.f32.mrb[0].mxu0
    %3588 = vdwg.mxu0
    %3589 = vmatprep.subr.bf16.mxu0 %v3116
    %3590 = vmatpush1.bf16.msra.mxu0 %v3115
    %3591 = vmatprep.subr.bf16.mxu0 %v3123
    %3592 = vmatpush1.bf16.msra.mxu0 %v3122
    %3593 = vmatprep.subr.bf16.mxu0 %v3130
    %3594 = vmatpush1.bf16.msra.mxu0 %v3129
    %3595 = vmatprep.subr.bf16.mxu0 %v3137
    %3596 = vmatpush1.bf16.msra.mxu0 %v3136
    %3597 = vmatprep.subr.bf16.mxu0 %v3144
    %3598 = vmatpush1.bf16.msra.mxu0 %v3143
    %3599 = vmatprep.subr.bf16.mxu0 %v3151
    %3600 = vmatpush1.bf16.msra.mxu0 %v3150
    %3601 = vmatprep.subr.bf16.mxu0 %v3158
    %3602 = vmatpush1.bf16.msra.mxu0 %v3157
    %3603 = vmatprep.subr.bf16.mxu0 %v3165
    %3604 = vmatpush1.bf16.msra.mxu0 %v3164
    %3605 = vmatprep.subr.bf16.mxu0 %v3172
    %3606 = vmatpush1.bf16.msra.mxu0 %v3171
    %3607 = vmatprep.subr.bf16.mxu0 %v3179
    %3608 = vmatpush1.bf16.msra.mxu0 %v3178
    %3609 = vmatprep.subr.bf16.mxu0 %v3186
    %3610 = vmatpush1.bf16.msra.mxu0 %v3185
    %3611 = vmatprep.subr.bf16.mxu0 %v3193
    %3612 = vmatpush1.bf16.msra.mxu0 %v3192
    %3613 = vmatprep.subr.bf16.mxu0 %v3200
    %3614 = vmatpush1.bf16.msra.mxu0 %v3199
    %3615 = vmatprep.subr.bf16.mxu0 %v3207
    %3616 = vmatpush1.bf16.msra.mxu0 %v3206
    %3617 = vmatprep.subr.bf16.mxu0 %v3214
    %3618 = vmatpush1.bf16.msra.mxu0 %v3213
    %3619 = vmatprep.subr.bf16.mxu0 %v3221
    %3620 = vmatpush1.bf16.msra.mxu0 %v3220
    %3621 = vmatprep.mubr.bf16.mxu0 %v2993
    %3622 = vmatmul.mubr.bf16.gmra.mrb[0].mxu0 %v2992
    %v3623 = vpop.f32.mrb[0].mxu0
    %v3624 = vadd.f32 %v3583, %v3623
    %v3625 = vpop.f32.mrb[0].mxu0
    %v3626 = vadd.f32 %v3585, %v3625
    %v3627 = vpop.f32.mrb[0].mxu0
    %v3628 = vpop.f32.mrb[0].mxu0
    %3629 = vdwg.mxu0
    %3630 = vmatprep.subr.bf16.mxu0 %v3228
    %3631 = vmatpush1.bf16.msra.mxu0 %v3227
    %3632 = vmatprep.subr.bf16.mxu0 %v3235
    %3633 = vmatpush1.bf16.msra.mxu0 %v3234
    %3634 = vmatprep.subr.bf16.mxu0 %v3242
    %3635 = vmatpush1.bf16.msra.mxu0 %v3241
    %3636 = vmatprep.subr.bf16.mxu0 %v3249
    %3637 = vmatpush1.bf16.msra.mxu0 %v3248
    %3638 = vmatprep.subr.bf16.mxu0 %v3256
    %3639 = vmatpush1.bf16.msra.mxu0 %v3255
    %3640 = vmatprep.subr.bf16.mxu0 %v3263
    %3641 = vmatpush1.bf16.msra.mxu0 %v3262
    %3642 = vmatprep.subr.bf16.mxu0 %v3270
    %3643 = vmatpush1.bf16.msra.mxu0 %v3269
    %3644 = vmatprep.subr.bf16.mxu0 %v3277
    %3645 = vmatpush1.bf16.msra.mxu0 %v3276
    %3646 = vmatprep.subr.bf16.mxu0 %v3284
    %3647 = vmatpush1.bf16.msra.mxu0 %v3283
    %3648 = vmatprep.subr.bf16.mxu0 %v3291
    %3649 = vmatpush1.bf16.msra.mxu0 %v3290
    %3650 = vmatprep.subr.bf16.mxu0 %v3298
    %3651 = vmatpush1.bf16.msra.mxu0 %v3297
    %3652 = vmatprep.subr.bf16.mxu0 %v3305
    %3653 = vmatpush1.bf16.msra.mxu0 %v3304
    %3654 = vmatprep.subr.bf16.mxu0 %v3312
    %3655 = vmatpush1.bf16.msra.mxu0 %v3311
    %3656 = vmatprep.subr.bf16.mxu0 %v3319
    %3657 = vmatpush1.bf16.msra.mxu0 %v3318
    %3658 = vmatprep.subr.bf16.mxu0 %v3326
    %3659 = vmatpush1.bf16.msra.mxu0 %v3325
    %3660 = vmatprep.subr.bf16.mxu0 %v3333
    %3661 = vmatpush1.bf16.msra.mxu0 %v3332
    %3662 = vmatprep.mubr.bf16.mxu0 %v2995
    %3663 = vmatmul.mubr.bf16.gmra.mrb[0].mxu0 %v2994
    %v3664 = vpop.f32.mrb[0].mxu0
    %v3665 = vadd.f32 %v3624, %v3664
    %v3666 = vpop.f32.mrb[0].mxu0
    %v3667 = vadd.f32 %v3626, %v3666
    %v3668 = vpop.f32.mrb[0].mxu0
    %v3669 = vpop.f32.mrb[0].mxu0
    %3670 = vdwg.mxu0
    %3671 = vmatprep.subr.bf16.mxu0 %v3340
    %3672 = vmatpush1.bf16.msra.mxu0 %v3339
    %3673 = vmatprep.subr.bf16.mxu0 0
    %3674 = vmatpush1.bf16.msra.mxu0 0
    %3675 = vmatprep.subr.bf16.mxu0 0
    %3676 = vmatpush1.bf16.msra.mxu0 0
    %3677 = vmatprep.subr.bf16.mxu0 0
    %3678 = vmatpush1.bf16.msra.mxu0 0
    %3679 = vmatprep.subr.bf16.mxu0 0
    %3680 = vmatpush1.bf16.msra.mxu0 0
    %3681 = vmatprep.subr.bf16.mxu0 0
    %3682 = vmatpush1.bf16.msra.mxu0 0
    %3683 = vmatprep.subr.bf16.mxu0 0
    %3684 = vmatpush1.bf16.msra.mxu0 0
    %3685 = vmatprep.subr.bf16.mxu0 0
    %3686 = vmatpush1.bf16.msra.mxu0 0
    %3687 = vmatprep.subr.bf16.mxu0 0
    %3688 = vmatpush1.bf16.msra.mxu0 0
    %3689 = vmatprep.subr.bf16.mxu0 0
    %3690 = vmatpush1.bf16.msra.mxu0 0
    %3691 = vmatprep.subr.bf16.mxu0 0
    %3692 = vmatpush1.bf16.msra.mxu0 0
    %3693 = vmatprep.subr.bf16.mxu0 0
    %3694 = vmatpush1.bf16.msra.mxu0 0
    %3695 = vmatprep.subr.bf16.mxu0 0
    %3696 = vmatpush1.bf16.msra.mxu0 0
    %3697 = vmatprep.subr.bf16.mxu0 0
    %3698 = vmatpush1.bf16.msra.mxu0 0
    %3699 = vmatprep.subr.bf16.mxu0 0
    %3700 = vmatpush1.bf16.msra.mxu0 0
    %3701 = vmatprep.subr.bf16.mxu0 0
    %3702 = vmatpush1.bf16.msra.mxu0 0
    %3703 = vmatprep.mubr.bf16.mxu0 0
    %3704 = vmatmul.mubr.bf16.gmra.mrb[0].mxu0 %v3382
    %v3705 = vpop.f32.mrb[0].mxu0
    %v3706 = vadd.f32 %v3665, %v3705
    %v3707 = vpop.f32.mrb[0].mxu0
    %v3708 = vadd.f32 %v3667, %v3707
    %v3709 = vpop.f32.mrb[0].mxu0
    %v3710 = vpop.f32.mrb[0].mxu0
    %3711 = vdwg.mxu0
    %3712 = vmatprep.subr.bf16.mxu0 %v3006
    %3713 = vmatpush1.bf16.msra.mxu0 %v3005
    %3714 = vmatprep.subr.bf16.mxu0 %v3013
    %3715 = vmatpush1.bf16.msra.mxu0 %v3012
    %3716 = vmatprep.subr.bf16.mxu0 %v3020
    %3717 = vmatpush1.bf16.msra.mxu0 %v3019
    %3718 = vmatprep.subr.bf16.mxu0 %v3027
    %3719 = vmatpush1.bf16.msra.mxu0 %v3026
    %3720 = vmatprep.subr.bf16.mxu0 %v3034
    %3721 = vmatpush1.bf16.msra.mxu0 %v3033
    %3722 = vmatprep.subr.bf16.mxu0 %v3041
    %3723 = vmatpush1.bf16.msra.mxu0 %v3040
    %3724 = vmatprep.subr.bf16.mxu0 %v3048
    %3725 = vmatpush1.bf16.msra.mxu0 %v3047
    %3726 = vmatprep.subr.bf16.mxu0 %v3055
    %3727 = vmatpush1.bf16.msra.mxu0 %v3054
    %3728 = vmatprep.subr.bf16.mxu0 %v3062
    %3729 = vmatpush1.bf16.msra.mxu0 %v3061
    %3730 = vmatprep.subr.bf16.mxu0 %v3069
    %3731 = vmatpush1.bf16.msra.mxu0 %v3068
    %3732 = vmatprep.subr.bf16.mxu0 %v3076
    %3733 = vmatpush1.bf16.msra.mxu0 %v3075
    %3734 = vmatprep.subr.bf16.mxu0 %v3083
    %3735 = vmatpush1.bf16.msra.mxu0 %v3082
    %3736 = vmatprep.subr.bf16.mxu0 %v3090
    %3737 = vmatpush1.bf16.msra.mxu0 %v3089
    %3738 = vmatprep.subr.bf16.mxu0 %v3097
    %3739 = vmatpush1.bf16.msra.mxu0 %v3096
    %3740 = vmatprep.subr.bf16.mxu0 %v3104
    %3741 = vmatpush1.bf16.msra.mxu0 %v3103
    %3742 = vmatprep.subr.bf16.mxu0 %v3111
    %3743 = vmatpush1.bf16.msra.mxu0 %v3110
    %3744 = vmatprep.mubr.bf16.mxu0 %v2991
    %3745 = vmatmul.mubr.bf16.gmra.mrb[0].mxu0 %v2990
    %v3746 = vpop.f32.mrb[0].mxu0
    %v3747 = vadd.f32 %v3365, %v3746
    %v3748 = vpop.f32.mrb[0].mxu0
    %v3749 = vadd.f32 %v3369, %v3748
    %v3750 = vpop.f32.mrb[0].mxu0
    %v3751 = vpop.f32.mrb[0].mxu0
    %3752 = vdwg.mxu0
    %3753 = vmatprep.subr.bf16.mxu0 %v3118
    %3754 = vmatpush1.bf16.msra.mxu0 %v3117
    %3755 = vmatprep.subr.bf16.mxu0 %v3125
    %3756 = vmatpush1.bf16.msra.mxu0 %v3124
    %3757 = vmatprep.subr.bf16.mxu0 %v3132
    %3758 = vmatpush1.bf16.msra.mxu0 %v3131
    %3759 = vmatprep.subr.bf16.mxu0 %v3139
    %3760 = vmatpush1.bf16.msra.mxu0 %v3138
    %3761 = vmatprep.subr.bf16.mxu0 %v3146
    %3762 = vmatpush1.bf16.msra.mxu0 %v3145
    %3763 = vmatprep.subr.bf16.mxu0 %v3153
    %3764 = vmatpush1.bf16.msra.mxu0 %v3152
    %3765 = vmatprep.subr.bf16.mxu0 %v3160
    %3766 = vmatpush1.bf16.msra.mxu0 %v3159
    %3767 = vmatprep.subr.bf16.mxu0 %v3167
    %3768 = vmatpush1.bf16.msra.mxu0 %v3166
    %3769 = vmatprep.subr.bf16.mxu0 %v3174
    %3770 = vmatpush1.bf16.msra.mxu0 %v3173
    %3771 = vmatprep.subr.bf16.mxu0 %v3181
    %3772 = vmatpush1.bf16.msra.mxu0 %v3180
    %3773 = vmatprep.subr.bf16.mxu0 %v3188
    %3774 = vmatpush1.bf16.msra.mxu0 %v3187
    %3775 = vmatprep.subr.bf16.mxu0 %v3195
    %3776 = vmatpush1.bf16.msra.mxu0 %v3194
    %3777 = vmatprep.subr.bf16.mxu0 %v3202
    %3778 = vmatpush1.bf16.msra.mxu0 %v3201
    %3779 = vmatprep.subr.bf16.mxu0 %v3209
    %3780 = vmatpush1.bf16.msra.mxu0 %v3208
    %3781 = vmatprep.subr.bf16.mxu0 %v3216
    %3782 = vmatpush1.bf16.msra.mxu0 %v3215
    %3783 = vmatprep.subr.bf16.mxu0 %v3223
    %3784 = vmatpush1.bf16.msra.mxu0 %v3222
    %3785 = vmatprep.mubr.bf16.mxu0 %v2993
    %3786 = vmatmul.mubr.bf16.gmra.mrb[0].mxu0 %v2992
    %v3787 = vpop.f32.mrb[0].mxu0
    %v3788 = vadd.f32 %v3747, %v3787
    %v3789 = vpop.f32.mrb[0].mxu0
    %v3790 = vadd.f32 %v3749, %v3789
    %v3791 = vpop.f32.mrb[0].mxu0
    %v3792 = vpop.f32.mrb[0].mxu0
    %3793 = vdwg.mxu0
    %3794 = vmatprep.subr.bf16.mxu0 %v3230
    %3795 = vmatpush1.bf16.msra.mxu0 %v3229
    %3796 = vmatprep.subr.bf16.mxu0 %v3237
    %3797 = vmatpush1.bf16.msra.mxu0 %v3236
    %3798 = vmatprep.subr.bf16.mxu0 %v3244
    %3799 = vmatpush1.bf16.msra.mxu0 %v3243
    %3800 = vmatprep.subr.bf16.mxu0 %v3251
    %3801 = vmatpush1.bf16.msra.mxu0 %v3250
    %3802 = vmatprep.subr.bf16.mxu0 %v3258
    %3803 = vmatpush1.bf16.msra.mxu0 %v3257
    %3804 = vmatprep.subr.bf16.mxu0 %v3265
    %3805 = vmatpush1.bf16.msra.mxu0 %v3264
    %3806 = vmatprep.subr.bf16.mxu0 %v3272
    %3807 = vmatpush1.bf16.msra.mxu0 %v3271
    %3808 = vmatprep.subr.bf16.mxu0 %v3279
    %3809 = vmatpush1.bf16.msra.mxu0 %v3278
    %3810 = vmatprep.subr.bf16.mxu0 %v3286
    %3811 = vmatpush1.bf16.msra.mxu0 %v3285
    %3812 = vmatprep.subr.bf16.mxu0 %v3293
    %3813 = vmatpush1.bf16.msra.mxu0 %v3292
    %3814 = vmatprep.subr.bf16.mxu0 %v3300
    %3815 = vmatpush1.bf16.msra.mxu0 %v3299
    %3816 = vmatprep.subr.bf16.mxu0 %v3307
    %3817 = vmatpush1.bf16.msra.mxu0 %v3306
    %3818 = vmatprep.subr.bf16.mxu0 %v3314
    %3819 = vmatpush1.bf16.msra.mxu0 %v3313
    %3820 = vmatprep.subr.bf16.mxu0 %v3321
    %3821 = vmatpush1.bf16.msra.mxu0 %v3320
    %3822 = vmatprep.subr.bf16.mxu0 %v3328
    %3823 = vmatpush1.bf16.msra.mxu0 %v3327
    %3824 = vmatprep.subr.bf16.mxu0 %v3335
    %3825 = vmatpush1.bf16.msra.mxu0 %v3334
    %3826 = vmatprep.mubr.bf16.mxu0 %v2995
    %3827 = vmatmul.mubr.bf16.gmra.mrb[0].mxu0 %v2994
    %v3828 = vpop.f32.mrb[0].mxu0
    %v3829 = vadd.f32 %v3788, %v3828
    %v3830 = vpop.f32.mrb[0].mxu0
    %v3831 = vadd.f32 %v3790, %v3830
    %v3832 = vpop.f32.mrb[0].mxu0
    %v3833 = vpop.f32.mrb[0].mxu0
    %3834 = vdwg.mxu0
    %3835 = vmatprep.subr.bf16.mxu0 %v3342
    %3836 = vmatpush1.bf16.msra.mxu0 %v3341
    %3837 = vmatprep.subr.bf16.mxu0 0
    %3838 = vmatpush1.bf16.msra.mxu0 0
    %3839 = vmatprep.subr.bf16.mxu0 0
    %3840 = vmatpush1.bf16.msra.mxu0 0
    %3841 = vmatprep.subr.bf16.mxu0 0
    %3842 = vmatpush1.bf16.msra.mxu0 0
    %3843 = vmatprep.subr.bf16.mxu0 0
    %3844 = vmatpush1.bf16.msra.mxu0 0
    %3845 = vmatprep.subr.bf16.mxu0 0
    %3846 = vmatpush1.bf16.msra.mxu0 0
    %3847 = vmatprep.subr.bf16.mxu0 0
    %3848 = vmatpush1.bf16.msra.mxu0 0
    %3849 = vmatprep.subr.bf16.mxu0 0
    %3850 = vmatpush1.bf16.msra.mxu0 0
    %3851 = vmatprep.subr.bf16.mxu0 0
    %3852 = vmatpush1.bf16.msra.mxu0 0
    %3853 = vmatprep.subr.bf16.mxu0 0
    %3854 = vmatpush1.bf16.msra.mxu0 0
    %3855 = vmatprep.subr.bf16.mxu0 0
    %3856 = vmatpush1.bf16.msra.mxu0 0
    %3857 = vmatprep.subr.bf16.mxu0 0
    %3858 = vmatpush1.bf16.msra.mxu0 0
    %3859 = vmatprep.subr.bf16.mxu0 0
    %3860 = vmatpush1.bf16.msra.mxu0 0
    %3861 = vmatprep.subr.bf16.mxu0 0
    %3862 = vmatpush1.bf16.msra.mxu0 0
    %3863 = vmatprep.subr.bf16.mxu0 0
    %3864 = vmatpush1.bf16.msra.mxu0 0
    %3865 = vmatprep.subr.bf16.mxu0 0
    %3866 = vmatpush1.bf16.msra.mxu0 0
    %3867 = vmatprep.mubr.bf16.mxu0 0
    %3868 = vmatmul.mubr.bf16.gmra.mrb[0].mxu0 %v3382
    %v3869 = vpop.f32.mrb[0].mxu0
    %v3870 = vadd.f32 %v3829, %v3869
    %v3871 = vpop.f32.mrb[0].mxu0
    %v3872 = vadd.f32 %v3831, %v3871
    %v3873 = vpop.f32.mrb[0].mxu0
    %v3874 = vpop.f32.mrb[0].mxu0
    %3875 = vdwg.mxu0
    %3876 = vmatprep.subr.bf16.mxu0 0
    %3877 = vmatpush1.bf16.msra.mxu0 %v3007
    %3878 = vmatprep.subr.bf16.mxu0 0
    %3879 = vmatpush1.bf16.msra.mxu0 %v3014
    %3880 = vmatprep.subr.bf16.mxu0 0
    %3881 = vmatpush1.bf16.msra.mxu0 %v3021
    %3882 = vmatprep.subr.bf16.mxu0 0
    %3883 = vmatpush1.bf16.msra.mxu0 %v3028
    %3884 = vmatprep.subr.bf16.mxu0 0
    %3885 = vmatpush1.bf16.msra.mxu0 %v3035
    %3886 = vmatprep.subr.bf16.mxu0 0
    %3887 = vmatpush1.bf16.msra.mxu0 %v3042
    %3888 = vmatprep.subr.bf16.mxu0 0
    %3889 = vmatpush1.bf16.msra.mxu0 %v3049
    %3890 = vmatprep.subr.bf16.mxu0 0
    %3891 = vmatpush1.bf16.msra.mxu0 %v3056
    %3892 = vmatprep.subr.bf16.mxu0 0
    %3893 = vmatpush1.bf16.msra.mxu0 %v3063
    %3894 = vmatprep.subr.bf16.mxu0 0
    %3895 = vmatpush1.bf16.msra.mxu0 %v3070
    %3896 = vmatprep.subr.bf16.mxu0 0
    %3897 = vmatpush1.bf16.msra.mxu0 %v3077
    %3898 = vmatprep.subr.bf16.mxu0 0
    %3899 = vmatpush1.bf16.msra.mxu0 %v3084
    %3900 = vmatprep.subr.bf16.mxu0 0
    %3901 = vmatpush1.bf16.msra.mxu0 %v3091
    %3902 = vmatprep.subr.bf16.mxu0 0
    %3903 = vmatpush1.bf16.msra.mxu0 %v3098
    %3904 = vmatprep.subr.bf16.mxu0 0
    %3905 = vmatpush1.bf16.msra.mxu0 %v3105
    %3906 = vmatprep.subr.bf16.mxu0 0
    %3907 = vmatpush1.bf16.msra.mxu0 %v3112
    %3908 = vmatprep.mubr.bf16.mxu0 %v2991
    %3909 = vmatmul.mubr.bf16.gmra.mrb[0].mxu0 %v2990
    %v3910 = vpop.f32.mrb[0].mxu0
    %v3911 = vadd.f32 %v3373, %v3910
    %v3912 = vpop.f32.mrb[0].mxu0
    %v3913 = vpop.f32.mrb[0].mxu0
    %v3914 = vpop.f32.mrb[0].mxu0
    %3915 = vdwg.mxu0
    %3916 = vmatprep.subr.bf16.mxu0 0
    %3917 = vmatpush1.bf16.msra.mxu0 %v3119
    %3918 = vmatprep.subr.bf16.mxu0 0
    %3919 = vmatpush1.bf16.msra.mxu0 %v3126
    %3920 = vmatprep.subr.bf16.mxu0 0
    %3921 = vmatpush1.bf16.msra.mxu0 %v3133
    %3922 = vmatprep.subr.bf16.mxu0 0
    %3923 = vmatpush1.bf16.msra.mxu0 %v3140
    %3924 = vmatprep.subr.bf16.mxu0 0
    %3925 = vmatpush1.bf16.msra.mxu0 %v3147
    %3926 = vmatprep.subr.bf16.mxu0 0
    %3927 = vmatpush1.bf16.msra.mxu0 %v3154
    %3928 = vmatprep.subr.bf16.mxu0 0
    %3929 = vmatpush1.bf16.msra.mxu0 %v3161
    %3930 = vmatprep.subr.bf16.mxu0 0
    %3931 = vmatpush1.bf16.msra.mxu0 %v3168
    %3932 = vmatprep.subr.bf16.mxu0 0
    %3933 = vmatpush1.bf16.msra.mxu0 %v3175
    %3934 = vmatprep.subr.bf16.mxu0 0
    %3935 = vmatpush1.bf16.msra.mxu0 %v3182
    %3936 = vmatprep.subr.bf16.mxu0 0
    %3937 = vmatpush1.bf16.msra.mxu0 %v3189
    %3938 = vmatprep.subr.bf16.mxu0 0
    %3939 = vmatpush1.bf16.msra.mxu0 %v3196
    %3940 = vmatprep.subr.bf16.mxu0 0
    %3941 = vmatpush1.bf16.msra.mxu0 %v3203
    %3942 = vmatprep.subr.bf16.mxu0 0
    %3943 = vmatpush1.bf16.msra.mxu0 %v3210
    %3944 = vmatprep.subr.bf16.mxu0 0
    %3945 = vmatpush1.bf16.msra.mxu0 %v3217
    %3946 = vmatprep.subr.bf16.mxu0 0
    %3947 = vmatpush1.bf16.msra.mxu0 %v3224
    %3948 = vmatprep.mubr.bf16.mxu0 %v2993
    %3949 = vmatmul.mubr.bf16.gmra.mrb[0].mxu0 %v2992
    %v3950 = vpop.f32.mrb[0].mxu0
    %v3951 = vadd.f32 %v3911, %v3950
    %v3952 = vpop.f32.mrb[0].mxu0
    %v3953 = vpop.f32.mrb[0].mxu0
    %v3954 = vpop.f32.mrb[0].mxu0
    %3955 = vdwg.mxu0
    %3956 = vmatprep.subr.bf16.mxu0 0
    %3957 = vmatpush1.bf16.msra.mxu0 %v3231
    %3958 = vmatprep.subr.bf16.mxu0 0
    %3959 = vmatpush1.bf16.msra.mxu0 %v3238
    %3960 = vmatprep.subr.bf16.mxu0 0
    %3961 = vmatpush1.bf16.msra.mxu0 %v3245
    %3962 = vmatprep.subr.bf16.mxu0 0
    %3963 = vmatpush1.bf16.msra.mxu0 %v3252
    %3964 = vmatprep.subr.bf16.mxu0 0
    %3965 = vmatpush1.bf16.msra.mxu0 %v3259
    %3966 = vmatprep.subr.bf16.mxu0 0
    %3967 = vmatpush1.bf16.msra.mxu0 %v3266
    %3968 = vmatprep.subr.bf16.mxu0 0
    %3969 = vmatpush1.bf16.msra.mxu0 %v3273
    %3970 = vmatprep.subr.bf16.mxu0 0
    %3971 = vmatpush1.bf16.msra.mxu0 %v3280
    %3972 = vmatprep.subr.bf16.mxu0 0
    %3973 = vmatpush1.bf16.msra.mxu0 %v3287
    %3974 = vmatprep.subr.bf16.mxu0 0
    %3975 = vmatpush1.bf16.msra.mxu0 %v3294
    %3976 = vmatprep.subr.bf16.mxu0 0
    %3977 = vmatpush1.bf16.msra.mxu0 %v3301
    %3978 = vmatprep.subr.bf16.mxu0 0
    %3979 = vmatpush1.bf16.msra.mxu0 %v3308
    %3980 = vmatprep.subr.bf16.mxu0 0
    %3981 = vmatpush1.bf16.msra.mxu0 %v3315
    %3982 = vmatprep.subr.bf16.mxu0 0
    %3983 = vmatpush1.bf16.msra.mxu0 %v3322
    %3984 = vmatprep.subr.bf16.mxu0 0
    %3985 = vmatpush1.bf16.msra.mxu0 %v3329
    %3986 = vmatprep.subr.bf16.mxu0 0
    %3987 = vmatpush1.bf16.msra.mxu0 %v3336
    %3988 = vmatprep.mubr.bf16.mxu0 %v2995
    %3989 = vmatmul.mubr.bf16.gmra.mrb[0].mxu0 %v2994
    %v3990 = vpop.f32.mrb[0].mxu0
    %v3991 = vadd.f32 %v3951, %v3990
    %v3992 = vpop.f32.mrb[0].mxu0
    %v3993 = vpop.f32.mrb[0].mxu0
    %v3994 = vpop.f32.mrb[0].mxu0
    %3995 = vdwg.mxu0
    %3996 = vmatprep.subr.bf16.mxu0 0
    %3997 = vmatpush1.bf16.msra.mxu0 %v3343
    %3998 = vmatprep.subr.bf16.mxu0 0
    %3999 = vmatpush1.bf16.msra.mxu0 0
    %4000 = vmatprep.subr.bf16.mxu0 0
    %4001 = vmatpush1.bf16.msra.mxu0 0
    %4002 = vmatprep.subr.bf16.mxu0 0
    %4003 = vmatpush1.bf16.msra.mxu0 0
    %4004 = vmatprep.subr.bf16.mxu0 0
    %4005 = vmatpush1.bf16.msra.mxu0 0
    %4006 = vmatprep.subr.bf16.mxu0 0
    %4007 = vmatpush1.bf16.msra.mxu0 0
    %4008 = vmatprep.subr.bf16.mxu0 0
    %4009 = vmatpush1.bf16.msra.mxu0 0
    %4010 = vmatprep.subr.bf16.mxu0 0
    %4011 = vmatpush1.bf16.msra.mxu0 0
    %4012 = vmatprep.subr.bf16.mxu0 0
    %4013 = vmatpush1.bf16.msra.mxu0 0
    %4014 = vmatprep.subr.bf16.mxu0 0
    %4015 = vmatpush1.bf16.msra.mxu0 0
    %4016 = vmatprep.subr.bf16.mxu0 0
    %4017 = vmatpush1.bf16.msra.mxu0 0
    %4018 = vmatprep.subr.bf16.mxu0 0
    %4019 = vmatpush1.bf16.msra.mxu0 0
    %4020 = vmatprep.subr.bf16.mxu0 0
    %4021 = vmatpush1.bf16.msra.mxu0 0
    %4022 = vmatprep.subr.bf16.mxu0 0
    %4023 = vmatpush1.bf16.msra.mxu0 0
    %4024 = vmatprep.subr.bf16.mxu0 0
    %4025 = vmatpush1.bf16.msra.mxu0 0
    %4026 = vmatprep.subr.bf16.mxu0 0
    %4027 = vmatpush1.bf16.msra.mxu0 0
    %4028 = vmatprep.mubr.bf16.mxu0 0
    %4029 = vmatmul.mubr.bf16.gmra.mrb[0].mxu0 %v3382
    %v4030 = vpop.f32.mrb[0].mxu0
    %v4031 = vadd.f32 %v3991, %v4030
    %v4032 = vpop.f32.mrb[0].mxu0
    %v4033 = vpop.f32.mrb[0].mxu0
    %v4034 = vpop.f32.mrb[0].mxu0
    %4035 = vdwg.mxu0
    %v4036 = vmax.f32 %v3542, 0.0
    %v4037 = vmax.f32 %v3544, 0.0
    %v4038 = vmax.f32 %v3706, 0.0
    %v4039 = vmax.f32 %v3708, 0.0
    %v4040 = vmax.f32 %v3870, 0.0
    %v4041 = vmax.f32 %v3872, 0.0
    %v4042 = vmax.f32 %v4031, 0.0
    %v4043 = vpack.c.bf16 %v4036, %v4036
    %v4044 = vpack.c.bf16 %v4037, %v4037
    %v4045 = vpack.c.bf16 %v4038, %v4038
    %v4046 = vpack.c.bf16 %v4039, %v4039
    %v4047 = vpack.c.bf16 %v4040, %v4040
    %v4048 = vpack.c.bf16 %v4041, %v4041
    %v4049 = vpack.c.bf16 %v4042, %v4042
    %s4050 = smul.u32 %s2997, 1
    %s4051 = sshll.u32 %s4050, 4
    %4052 = dma.done %s108, %s4051
    %v4053 = vld [vmem:[#allocation3] sm:$0xff]
    %v4054 = vld [vmem:[#allocation3 + $0x8] sm:$0xff]
    %v4055 = vld [vmem:[#allocation3 + $0x10] sm:$0xff]
    %v4056 = vld [vmem:[#allocation3 + $0x18] sm:$0xff]
    %v4057 = vld [vmem:[#allocation3 + $0x20] sm:$0xff]
    %v4058 = vld [vmem:[#allocation3 + $0x28] sm:$0xff]
    %v4059 = vld [vmem:[#allocation3 + $0x30] sm:$0xff]
    %v4060 = vld [vmem:[#allocation3 + $0x38] sm:$0xff]
    %v4061 = vld [vmem:[#allocation3 + $0x40] sm:$0xff]
    %v4062 = vld [vmem:[#allocation3 + $0x48] sm:$0xff]
    %v4063 = vld [vmem:[#allocation3 + $0x50] sm:$0xff]
    %v4064 = vld [vmem:[#allocation3 + $0x58] sm:$0xff]
    %v4065 = vld [vmem:[#allocation3 + $0x60] sm:$0xff]
    %v4066 = vld [vmem:[#allocation3 + $0x68] sm:$0xff]
    %v4067 = vld [vmem:[#allocation3 + $0x70] sm:$0xff]
    %v4068 = vld [vmem:[#allocation3 + $0x78] sm:$0xff]
    %v4069 = vld [vmem:[#allocation3 + $0x80] sm:$0xff]
    %v4070 = vld [vmem:[#allocation3 + $0x88] sm:$0xff]
    %v4071 = vld [vmem:[#allocation3 + $0x90] sm:$0xff]
    %v4072 = vld [vmem:[#allocation3 + $0x98] sm:$0xff]
    %v4073 = vld [vmem:[#allocation3 + $0xa0] sm:$0xff]
    %v4074 = vld [vmem:[#allocation3 + $0xa8] sm:$0xff]
    %v4075 = vld [vmem:[#allocation3 + $0xb0] sm:$0xff]
    %v4076 = vld [vmem:[#allocation3 + $0xb8] sm:$0xff]
    %v4077 = vld [vmem:[#allocation3 + $0xc0] sm:$0xff]
    %v4078 = vld [vmem:[#allocation3 + $0xc8] sm:$0xff]
    %v4079 = vld [vmem:[#allocation3 + $0xd0] sm:$0xff]
    %v4080 = vld [vmem:[#allocation3 + $0xd8] sm:$0xff]
    %v4081 = vld [vmem:[#allocation3 + $0xe0] sm:$0xff]
    %v4082 = vld [vmem:[#allocation3 + $0xe8] sm:$0xff]
    %v4083 = vld [vmem:[#allocation3 + $0xf0] sm:$0xff]
    %v4084 = vld [vmem:[#allocation3 + $0xf8] sm:$0xff]
    %v4085 = vld [vmem:[#allocation3 + $0x100] sm:$0xff]
    %v4086 = vld [vmem:[#allocation3 + $0x108] sm:$0xff]
    %v4087 = vld [vmem:[#allocation3 + $0x110] sm:$0xff]
    %v4088 = vld [vmem:[#allocation3 + $0x118] sm:$0xff]
    %v4089 = vld [vmem:[#allocation3 + $0x120] sm:$0xff]
    %v4090 = vld [vmem:[#allocation3 + $0x128] sm:$0xff]
    %v4091 = vld [vmem:[#allocation3 + $0x130] sm:$0xff]
    %v4092 = vld [vmem:[#allocation3 + $0x138] sm:$0xff]
    %v4093 = vld [vmem:[#allocation3 + $0x140] sm:$0xff]
    %v4094 = vld [vmem:[#allocation3 + $0x148] sm:$0xff]
    %v4095 = vld [vmem:[#allocation3 + $0x150] sm:$0xff]
    %v4096 = vld [vmem:[#allocation3 + $0x158] sm:$0xff]
    %v4097 = vld [vmem:[#allocation3 + $0x160] sm:$0xff]
    %v4098 = vld [vmem:[#allocation3 + $0x168] sm:$0xff]
    %v4099 = vld [vmem:[#allocation3 + $0x170] sm:$0xff]
    %v4100 = vld [vmem:[#allocation3 + $0x178] sm:$0xff]
    %v4101 = vld [vmem:[#allocation3 + $0x180] sm:$0xff]
    %v4102 = vld [vmem:[#allocation11] sm:$0x1]
    %v4104 = vlaneseq
    %v4105 = vshrl.u32 %v4104, 7
    %v4106 = vsub.s32 0, %v4105
    %v4107 = vrot.slane %v4102, %v4106
    %v4110 = vsel %vm2327, %v4049, 0
    %4112 = vmatprep.subr.bf16.mxu0 0
    %4113 = vmatpush1.bf16.msra.mxu0 %v4053
    %4114 = vmatprep.subr.bf16.mxu0 0
    %4115 = vmatpush1.bf16.msra.mxu0 %v4054
    %4116 = vmatprep.subr.bf16.mxu0 0
    %4117 = vmatpush1.bf16.msra.mxu0 %v4055
    %4118 = vmatprep.subr.bf16.mxu0 0
    %4119 = vmatpush1.bf16.msra.mxu0 %v4056
    %4120 = vmatprep.subr.bf16.mxu0 0
    %4121 = vmatpush1.bf16.msra.mxu0 %v4057
    %4122 = vmatprep.subr.bf16.mxu0 0
    %4123 = vmatpush1.bf16.msra.mxu0 %v4058
    %4124 = vmatprep.subr.bf16.mxu0 0
    %4125 = vmatpush1.bf16.msra.mxu0 %v4059
    %4126 = vmatprep.subr.bf16.mxu0 0
    %4127 = vmatpush1.bf16.msra.mxu0 %v4060
    %4128 = vmatprep.subr.bf16.mxu0 0
    %4129 = vmatpush1.bf16.msra.mxu0 %v4061
    %4130 = vmatprep.subr.bf16.mxu0 0
    %4131 = vmatpush1.bf16.msra.mxu0 %v4062
    %4132 = vmatprep.subr.bf16.mxu0 0
    %4133 = vmatpush1.bf16.msra.mxu0 %v4063
    %4134 = vmatprep.subr.bf16.mxu0 0
    %4135 = vmatpush1.bf16.msra.mxu0 %v4064
    %4136 = vmatprep.subr.bf16.mxu0 0
    %4137 = vmatpush1.bf16.msra.mxu0 %v4065
    %4138 = vmatprep.subr.bf16.mxu0 0
    %4139 = vmatpush1.bf16.msra.mxu0 %v4066
    %4140 = vmatprep.subr.bf16.mxu0 0
    %4141 = vmatpush1.bf16.msra.mxu0 %v4067
    %4142 = vmatprep.subr.bf16.mxu0 0
    %4143 = vmatpush1.bf16.msra.mxu0 %v4068
    %4144 = vmatprep.mubr.bf16.mxu0 %v4044
    %4145 = vmatmul.mubr.bf16.gmra.mrb[0].mxu0 %v4043
    %v4146 = vpop.f32.mrb[0].mxu0
    %v4147 = vadd.f32 %v4107, %v4146
    %v4148 = vpop.f32.mrb[0].mxu0
    %v4149 = vpop.f32.mrb[0].mxu0
    %v4150 = vpop.f32.mrb[0].mxu0
    %4151 = vdwg.mxu0
    %4152 = vmatprep.subr.bf16.mxu0 0
    %4153 = vmatpush1.bf16.msra.mxu0 %v4069
    %4154 = vmatprep.subr.bf16.mxu0 0
    %4155 = vmatpush1.bf16.msra.mxu0 %v4070
    %4156 = vmatprep.subr.bf16.mxu0 0
    %4157 = vmatpush1.bf16.msra.mxu0 %v4071
    %4158 = vmatprep.subr.bf16.mxu0 0
    %4159 = vmatpush1.bf16.msra.mxu0 %v4072
    %4160 = vmatprep.subr.bf16.mxu0 0
    %4161 = vmatpush1.bf16.msra.mxu0 %v4073
    %4162 = vmatprep.subr.bf16.mxu0 0
    %4163 = vmatpush1.bf16.msra.mxu0 %v4074
    %4164 = vmatprep.subr.bf16.mxu0 0
    %4165 = vmatpush1.bf16.msra.mxu0 %v4075
    %4166 = vmatprep.subr.bf16.mxu0 0
    %4167 = vmatpush1.bf16.msra.mxu0 %v4076
    %4168 = vmatprep.subr.bf16.mxu0 0
    %4169 = vmatpush1.bf16.msra.mxu0 %v4077
    %4170 = vmatprep.subr.bf16.mxu0 0
    %4171 = vmatpush1.bf16.msra.mxu0 %v4078
    %4172 = vmatprep.subr.bf16.mxu0 0
    %4173 = vmatpush1.bf16.msra.mxu0 %v4079
    %4174 = vmatprep.subr.bf16.mxu0 0
    %4175 = vmatpush1.bf16.msra.mxu0 %v4080
    %4176 = vmatprep.subr.bf16.mxu0 0
    %4177 = vmatpush1.bf16.msra.mxu0 %v4081
    %4178 = vmatprep.subr.bf16.mxu0 0
    %4179 = vmatpush1.bf16.msra.mxu0 %v4082
    %4180 = vmatprep.subr.bf16.mxu0 0
    %4181 = vmatpush1.bf16.msra.mxu0 %v4083
    %4182 = vmatprep.subr.bf16.mxu0 0
    %4183 = vmatpush1.bf16.msra.mxu0 %v4084
    %4184 = vmatprep.mubr.bf16.mxu0 %v4046
    %4185 = vmatmul.mubr.bf16.gmra.mrb[0].mxu0 %v4045
    %v4186 = vpop.f32.mrb[0].mxu0
    %v4187 = vadd.f32 %v4147, %v4186
    %v4188 = vpop.f32.mrb[0].mxu0
    %v4189 = vpop.f32.mrb[0].mxu0
    %v4190 = vpop.f32.mrb[0].mxu0
    %4191 = vdwg.mxu0
    %4192 = vmatprep.subr.bf16.mxu0 0
    %4193 = vmatpush1.bf16.msra.mxu0 %v4085
    %4194 = vmatprep.subr.bf16.mxu0 0
    %4195 = vmatpush1.bf16.msra.mxu0 %v4086
    %4196 = vmatprep.subr.bf16.mxu0 0
    %4197 = vmatpush1.bf16.msra.mxu0 %v4087
    %4198 = vmatprep.subr.bf16.mxu0 0
    %4199 = vmatpush1.bf16.msra.mxu0 %v4088
    %4200 = vmatprep.subr.bf16.mxu0 0
    %4201 = vmatpush1.bf16.msra.mxu0 %v4089
    %4202 = vmatprep.subr.bf16.mxu0 0
    %4203 = vmatpush1.bf16.msra.mxu0 %v4090
    %4204 = vmatprep.subr.bf16.mxu0 0
    %4205 = vmatpush1.bf16.msra.mxu0 %v4091
    %4206 = vmatprep.subr.bf16.mxu0 0
    %4207 = vmatpush1.bf16.msra.mxu0 %v4092
    %4208 = vmatprep.subr.bf16.mxu0 0
    %4209 = vmatpush1.bf16.msra.mxu0 %v4093
    %4210 = vmatprep.subr.bf16.mxu0 0
    %4211 = vmatpush1.bf16.msra.mxu0 %v4094
    %4212 = vmatprep.subr.bf16.mxu0 0
    %4213 = vmatpush1.bf16.msra.mxu0 %v4095
    %4214 = vmatprep.subr.bf16.mxu0 0
    %4215 = vmatpush1.bf16.msra.mxu0 %v4096
    %4216 = vmatprep.subr.bf16.mxu0 0
    %4217 = vmatpush1.bf16.msra.mxu0 %v4097
    %4218 = vmatprep.subr.bf16.mxu0 0
    %4219 = vmatpush1.bf16.msra.mxu0 %v4098
    %4220 = vmatprep.subr.bf16.mxu0 0
    %4221 = vmatpush1.bf16.msra.mxu0 %v4099
    %4222 = vmatprep.subr.bf16.mxu0 0
    %4223 = vmatpush1.bf16.msra.mxu0 %v4100
    %4224 = vmatprep.mubr.bf16.mxu0 %v4048
    %4225 = vmatmul.mubr.bf16.gmra.mrb[0].mxu0 %v4047
    %v4226 = vpop.f32.mrb[0].mxu0
    %v4227 = vadd.f32 %v4187, %v4226
    %v4228 = vpop.f32.mrb[0].mxu0
    %v4229 = vpop.f32.mrb[0].mxu0
    %v4230 = vpop.f32.mrb[0].mxu0
    %4231 = vdwg.mxu0
    %4232 = vmatprep.subr.bf16.mxu0 0
    %4233 = vmatpush1.bf16.msra.mxu0 %v4101
    %4234 = vmatprep.subr.bf16.mxu0 0
    %4235 = vmatpush1.bf16.msra.mxu0 0
    %4236 = vmatprep.subr.bf16.mxu0 0
    %4237 = vmatpush1.bf16.msra.mxu0 0
    %4238 = vmatprep.subr.bf16.mxu0 0
    %4239 = vmatpush1.bf16.msra.mxu0 0
    %4240 = vmatprep.subr.bf16.mxu0 0
    %4241 = vmatpush1.bf16.msra.mxu0 0
    %4242 = vmatprep.subr.bf16.mxu0 0
    %4243 = vmatpush1.bf16.msra.mxu0 0
    %4244 = vmatprep.subr.bf16.mxu0 0
    %4245 = vmatpush1.bf16.msra.mxu0 0
    %4246 = vmatprep.subr.bf16.mxu0 0
    %4247 = vmatpush1.bf16.msra.mxu0 0
    %4248 = vmatprep.subr.bf16.mxu0 0
    %4249 = vmatpush1.bf16.msra.mxu0 0
    %4250 = vmatprep.subr.bf16.mxu0 0
    %4251 = vmatpush1.bf16.msra.mxu0 0
    %4252 = vmatprep.subr.bf16.mxu0 0
    %4253 = vmatpush1.bf16.msra.mxu0 0
    %4254 = vmatprep.subr.bf16.mxu0 0
    %4255 = vmatpush1.bf16.msra.mxu0 0
    %4256 = vmatprep.subr.bf16.mxu0 0
    %4257 = vmatpush1.bf16.msra.mxu0 0
    %4258 = vmatprep.subr.bf16.mxu0 0
    %4259 = vmatpush1.bf16.msra.mxu0 0
    %4260 = vmatprep.subr.bf16.mxu0 0
    %4261 = vmatpush1.bf16.msra.mxu0 0
    %4262 = vmatprep.subr.bf16.mxu0 0
    %4263 = vmatpush1.bf16.msra.mxu0 0
    %4264 = vmatprep.mubr.bf16.mxu0 0
    %4265 = vmatmul.mubr.bf16.gmra.mrb[0].mxu0 %v4110
    %v4266 = vpop.f32.mrb[0].mxu0
    %v4267 = vadd.f32 %v4227, %v4266
    %v4268 = vpop.f32.mrb[0].mxu0
    %v4269 = vpop.f32.mrb[0].mxu0
    %v4270 = vpop.f32.mrb[0].mxu0
    %4271 = vdwg.mxu0
    %4272 = vmax.xlane.f32.xlu0 %v4267
    %v4273 = vpop.xlane.xlu0 %4272
    %v4274 = vsub.f32 %v4267, %v4273
    %v4275 = vmul.f32 %v4274, 1.442695
    %v4276 = vpow.pop %v4275
    %4277 = vadd.xlane.f32.xlu0 %v4276
    %v4278 = vpop.xlane.xlu0 %4277
    %v4279 = vlog2.pop %v4278
    %v4280 = vmul.f32 %v4279, 0.6931472
    %v4281 = vsub.f32 %v4274, %v4280
    %4282 = vst [vmem:[#allocation13] sm:$0xff] %v4281
    // Predicated region
    $region42: #{net_forward.1} parent=1 // pred_check
      _
    $region43: #{net_forward.1} parent=1 // pred_check_branch
      %4284 = sbr.rel (0) target = $region45
    $region44: #{net_forward.1} parent=1 // pred_region
      %s4286 = ssub.s32 128, 128
      %4287 = vsyncadd [#allocation7], %s4286
      %s4289 = sshll.u32 [#allocation13], 4
      %s4290 = int_to_ptr.vmem [resolvable:$true] %s4289
      %4292 = dma.vmem_to_hbm [thread:$0]  %s4290, 128, %s7, [#allocation7]
    $region45: #{net_forward.1} parent=1 // pred_fallthru
      _
    // Predicated region
    $region46: #{net_forward.1} parent=1 // pred_check
      _
    $region47: #{net_forward.1} parent=1 // pred_check_branch
      %4294 = sbr.rel (0) target = $region49
    $region48: #{net_forward.1} parent=1 // pred_region
      %4295 = dma.done [#allocation7], 128
    $region49: #{net_forward.1} parent=1 // pred_fallthru
      _
    %4296 = vsyncpa [#allocation6], 1
    %4297 = vsyncpa [#allocation9], 1
    %4298 = vsyncpa [#allocation12], 1
    %4299 = vsyncpa [#allocation7], 1
  %4300 = vsyncmov [#allocation4]
  %s4301 = vpop.sfrf %4300
  %p4302 = scmp.eq.s32.totalorder %s4301, 0
  %p4303 = pneg %p4302
  %4305 = shalt.err (%p4303)
  %s4306 = scalar_lea.sflag [#allocation4], 1
  %4307 = vsyncmov %s4306
  %s4308 = vpop.sfrf %4307
  %p4309 = scmp.eq.s32.totalorder %s4308, 0
  %p4310 = pneg %p4309
  %4312 = shalt.err (%p4310)

</llo_original>
